<compile_context>
chip_gen: v7x
topology: tpu7x:2x2x1
jax: 0.10.0
libtpu: 0.0.40
codegen_flags: <defaults>
</compile_context>

<pallas_src>
import jax
import jax.numpy as jnp
from jax.experimental import pallas as pl
from jax.experimental.pallas import tpu as pltpu


# ----------------------------------------------------------------------------
# Pallas kernel: masked complex contraction over input channels, per N-tile.
#   out[b, o, n] = sum_c x[b, c, n] * kmasked[c, o, n]        (complex)
# on (real, imag) float32 planes; n is the flattened, padded frequency bin.
#
# Block shapes seen by the kernel:
#   xr/xi : (B,   Cin,  TN)
#   kr/ki : (Cin, Cout, TN)   (pre-transposed so kr_ref[c] is a dense slab)
#   or/oi : (B,   Cout, TN)
# ----------------------------------------------------------------------------
def _freq_contract_kernel(xr_ref, xi_ref, kr_ref, ki_ref, or_ref, oi_ref):
    B, Cin, TN = xr_ref.shape
    Cout = kr_ref.shape[1]

    # B and Cin are tiny here (2 / 4), so static Python unrolling is fine and
    # keeps vreg live ranges short. Switch to lax.fori_loop(..., unroll=True)
    # if channel counts / batch grow.
    for b in range(B):
        xr_b = xr_ref[b]                                    # (Cin, TN)
        xi_b = xi_ref[b]

        def bcast(row):                                     # (1, TN)->(Cout, TN)
            return jnp.broadcast_to(row, (Cout, TN))        # sublane broadcast

        # c = 0 initializes the (Cout, TN) accumulators; remaining Cin steps
        # FMA into them. All operands are full (Cout, TN) slabs (8 sublanes).
        kr_c = kr_ref[0]                                    # (Cout, TN) slab
        ki_c = ki_ref[0]
        xr_c = bcast(xr_b[0:1, :])
        xi_c = bcast(xi_b[0:1, :])
        acc_r = xr_c * kr_c - xi_c * ki_c
        acc_i = xr_c * ki_c + xi_c * kr_c
        for c in range(1, Cin):
            kr_c = kr_ref[c]
            ki_c = ki_ref[c]
            xr_c = bcast(xr_b[c:c + 1, :])
            xi_c = bcast(xi_b[c:c + 1, :])
            acc_r = acc_r + xr_c * kr_c - xi_c * ki_c
            acc_i = acc_i + xr_c * ki_c + xi_c * kr_c

        or_ref[b] = acc_r                                   # one dense slab store
        oi_ref[b] = acc_i


def freq_contract(xr, xi, kr, ki, tile_n):
    """xr/xi: (B, Cin, N_pad) f32; kr/ki: (Cin, Cout, N_pad) f32 (mask folded in).

    N_pad must be a multiple of tile_n (tile_n a multiple of 128).
    Returns (out_r, out_i), each (B, Cout, N_pad) f32.
    """
    B, Cin, N_pad = xr.shape
    Cout = kr.shape[1]
    assert N_pad % tile_n == 0 and tile_n % 128 == 0
    n_tiles = N_pad // tile_n

    x_spec = pl.BlockSpec((B, Cin, tile_n), lambda t: (0, 0, t))
    k_spec = pl.BlockSpec((Cin, Cout, tile_n), lambda t: (0, 0, t))
    o_spec = pl.BlockSpec((B, Cout, tile_n), lambda t: (0, 0, t))
    out_shape = jax.ShapeDtypeStruct((B, Cout, N_pad), jnp.float32)

    return pl.pallas_call(
        _freq_contract_kernel,
        grid=(n_tiles,),
        in_specs=[x_spec, x_spec, k_spec, k_spec],
        out_specs=[o_spec, o_spec],
        out_shape=[out_shape, out_shape],
        compiler_params=pltpu.CompilerParams(
            dimension_semantics=("parallel",)),
    )(xr, xi, kr, ki)


# ----------------------------------------------------------------------------
# FFTConvNet forward (fft_filter='low')
# ----------------------------------------------------------------------------
def make_lowpass_mask(H, W):
    cht, cwt = H // 2, W // 2
    mask_radius = 30.0
    fy = jnp.arange(H, dtype=jnp.float32)[:, None]            # (H, 1)
    fx = jnp.arange(W // 2 + 1, dtype=jnp.float32)[None, :]   # (1, Wf)
    mask_area = jnp.sqrt((fx - cwt) ** 2 + (fy - cht) ** 2)
    return (mask_area <= mask_radius).astype(jnp.float32)     # (H, Wf)


def _round_up(x, m):
    return ((x + m - 1) // m) * m


def fft_conv_forward(x, weight, bias):
    """x: (B, Cin, H, W) f32; weight: (Cout, Cin, kh, kw); bias: (Cout,)."""
    B, Cin, H, W = x.shape
    Cout = weight.shape[0]
    Wf = W // 2 + 1
    N = H * Wf
    x = x.astype(jnp.float32)

    # rfft2 + fftshift over (-2, -1), matching torch.fft semantics exactly.
    fft_x = jnp.fft.fftshift(jnp.fft.rfft2(x), axes=(-2, -1))    # (B,Cin,H,Wf) c64

    # Kernel spectrum (weight zero-padded to (H, W)); NOT fftshifted, as in the
    # PyTorch reference. Fold the 0/1 low-pass mask into it once (exact:
    # (x*m)*k == x*(m*k) when m ∈ {0,1}).
    kernel_fft = jnp.fft.rfft2(weight.astype(jnp.float32), s=(H, W))
    kernel_fft = kernel_fft * make_lowpass_mask(H, W)            # (Cout,Cin,H,Wf)

    # Lane tile: 128-aligned, a few tiles so the grid pipelines / splits cores.
    tile_n = min(512, _round_up(N, 128))
    N_pad = _round_up(N, tile_n)
    pad = N_pad - N

    # Flatten (H, Wf) -> N (lane-dense) and split real/imag planes.
    xr = jnp.real(fft_x).reshape(B, Cin, N)
    xi = jnp.imag(fft_x).reshape(B, Cin, N)
    k_t = jnp.transpose(kernel_fft, (1, 0, 2, 3)).reshape(Cin, Cout, N)
    kr = jnp.real(k_t)
    ki = jnp.imag(k_t)

    if pad:
        padw = ((0, 0), (0, 0), (0, pad))
        xr = jnp.pad(xr, padw)   # zero-filled tail: padded bins contribute 0
        xi = jnp.pad(xi, padw)
        kr = jnp.pad(kr, padw)
        ki = jnp.pad(ki, padw)

    # Hot path: complex multiply + reduce over Cin, in Pallas.
    out_r, out_i = freq_contract(xr, xi, kr, ki, tile_n)

    fft_output = jax.lax.complex(out_r[..., :N],
                                 out_i[..., :N]).reshape(B, Cout, H, Wf)
    spatial_output = jnp.fft.irfft2(fft_output, s=(H, W)).astype(jnp.float32)

    # Bias add left to plain JAX so XLA fuses it into the irfft2 epilogue.
    return spatial_output + bias.reshape(1, -1, 1, 1).astype(jnp.float32)


def fft_conv_reference(x, weight, bias):
    """Pure-JAX reference mirroring the PyTorch forward, for verification."""
    B, Cin, H, W = x.shape
    fft_x = jnp.fft.fftshift(jnp.fft.rfft2(x.astype(jnp.float32)),
                             axes=(-2, -1))
    kernel_fft = jnp.fft.rfft2(weight.astype(jnp.float32), s=(H, W))
    fft_x = fft_x * make_lowpass_mask(H, W)
    fft_output = jnp.sum(fft_x[:, None] * kernel_fft[None], axis=2)
    spatial = jnp.fft.irfft2(fft_output, s=(H, W))
    return spatial + bias.reshape(1, -1, 1, 1)


if __name__ == "__main__":
    # Small-but-representative shapes: H=W=64 so the radius-30 low-pass mask is
    # actually non-trivial; kernel_size=5 (>3, i.e. a layer FFTModel replaces).
    B, Cin, Cout, H, W, KH, KW = 2, 4, 8, 64, 64, 5, 5

    key = jax.random.PRNGKey(0)
    kx, kw, kb = jax.random.split(key, 3)
    x = jax.random.normal(kx, (B, Cin, H, W), dtype=jnp.float32)
    weight = jax.random.normal(kw, (Cout, Cin, KH, KW), dtype=jnp.float32) * 0.1
    bias = jax.random.normal(kb, (Cout,), dtype=jnp.float32) * 0.1

    fwd = jax.jit(fft_conv_forward)
    out = jax.block_until_ready(fwd(x, weight, bias))

    ref = fft_conv_reference(x, weight, bias)
    assert out.shape == (B, Cout, H, W)
    assert jnp.allclose(out, ref, atol=1e-3, rtol=1e-3), (
        float(jnp.max(jnp.abs(out - ref))))

    print("KERNEL_OK")
</pallas_src>

<mosaic_0001>
module attributes {stable_mosaic.version = 11 : i64} {
  func.func @_freq_contract_kernel(%arg0: i32, %arg1: memref<2x4x512xf32, #tpu.memory_space<vmem>>, %arg2: memref<2x4x512xf32, #tpu.memory_space<vmem>>, %arg3: memref<4x8x512xf32, #tpu.memory_space<vmem>>, %arg4: memref<4x8x512xf32, #tpu.memory_space<vmem>>, %arg5: memref<2x8x512xf32, #tpu.memory_space<vmem>>, %arg6: memref<2x8x512xf32, #tpu.memory_space<vmem>>) attributes {dimension_semantics = [#tpu.dimension_semantics<parallel>], iteration_bounds = array<i64: 5>, scalar_prefetch = 0 : i64, scratch_operands = 0 : i64, tpu.core_type = #tpu.core_type<tc>, window_params = [{transform_indices = @transform_0, window_bounds = array<i64: 2, 4, 512>}, {transform_indices = @transform_1, window_bounds = array<i64: 2, 4, 512>}, {transform_indices = @transform_2, window_bounds = array<i64: 4, 8, 512>}, {transform_indices = @transform_3, window_bounds = array<i64: 4, 8, 512>}, {transform_indices = @transform_4, window_bounds = array<i64: 2, 8, 512>}, {transform_indices = @transform_5, window_bounds = array<i64: 2, 8, 512>}]} {
    %c0 = arith.constant 0 : index
    %c0_0 = arith.constant 0 : index
    %c0_1 = arith.constant 0 : index
    %0 = vector.load %arg1[%c0, %c0_0, %c0_1] : memref<2x4x512xf32, #tpu.memory_space<vmem>>, vector<1x4x512xf32>
    %1 = vector.shape_cast %0 : vector<1x4x512xf32> to vector<4x512xf32>
    %c0_2 = arith.constant 0 : index
    %c0_3 = arith.constant 0 : index
    %c0_4 = arith.constant 0 : index
    %2 = vector.load %arg2[%c0_2, %c0_3, %c0_4] : memref<2x4x512xf32, #tpu.memory_space<vmem>>, vector<1x4x512xf32>
    %3 = vector.shape_cast %2 : vector<1x4x512xf32> to vector<4x512xf32>
    %c0_5 = arith.constant 0 : index
    %c0_6 = arith.constant 0 : index
    %c0_7 = arith.constant 0 : index
    %4 = vector.load %arg3[%c0_5, %c0_6, %c0_7] : memref<4x8x512xf32, #tpu.memory_space<vmem>>, vector<1x8x512xf32>
    %5 = vector.shape_cast %4 : vector<1x8x512xf32> to vector<8x512xf32>
    %c0_8 = arith.constant 0 : index
    %c0_9 = arith.constant 0 : index
    %c0_10 = arith.constant 0 : index
    %6 = vector.load %arg4[%c0_8, %c0_9, %c0_10] : memref<4x8x512xf32, #tpu.memory_space<vmem>>, vector<1x8x512xf32>
    %7 = vector.shape_cast %6 : vector<1x8x512xf32> to vector<8x512xf32>
    %8 = vector.extract_strided_slice %1 {offsets = [0, 0], sizes = [1, 512], strides = [1, 1]} : vector<4x512xf32> to vector<1x512xf32>
    %9 = vector.shape_cast %8 : vector<1x512xf32> to vector<1x512xf32>
    %10 = vector.broadcast %9 : vector<1x512xf32> to vector<8x512xf32>
    %11 = vector.extract_strided_slice %3 {offsets = [0, 0], sizes = [1, 512], strides = [1, 1]} : vector<4x512xf32> to vector<1x512xf32>
    %12 = vector.shape_cast %11 : vector<1x512xf32> to vector<1x512xf32>
    %13 = vector.broadcast %12 : vector<1x512xf32> to vector<8x512xf32>
    %14 = arith.mulf %10, %5 : vector<8x512xf32>
    %15 = arith.mulf %13, %7 : vector<8x512xf32>
    %16 = arith.subf %14, %15 : vector<8x512xf32>
    %17 = arith.mulf %10, %7 : vector<8x512xf32>
    %18 = arith.mulf %13, %5 : vector<8x512xf32>
    %19 = arith.addf %17, %18 : vector<8x512xf32>
    %c1 = arith.constant 1 : index
    %c0_11 = arith.constant 0 : index
    %c0_12 = arith.constant 0 : index
    %20 = vector.load %arg3[%c1, %c0_11, %c0_12] : memref<4x8x512xf32, #tpu.memory_space<vmem>>, vector<1x8x512xf32>
    %21 = vector.shape_cast %20 : vector<1x8x512xf32> to vector<8x512xf32>
    %c1_13 = arith.constant 1 : index
    %c0_14 = arith.constant 0 : index
    %c0_15 = arith.constant 0 : index
    %22 = vector.load %arg4[%c1_13, %c0_14, %c0_15] : memref<4x8x512xf32, #tpu.memory_space<vmem>>, vector<1x8x512xf32>
    %23 = vector.shape_cast %22 : vector<1x8x512xf32> to vector<8x512xf32>
    %24 = vector.extract_strided_slice %1 {offsets = [1, 0], sizes = [1, 512], strides = [1, 1]} : vector<4x512xf32> to vector<1x512xf32>
    %25 = vector.shape_cast %24 : vector<1x512xf32> to vector<1x512xf32>
    %26 = vector.broadcast %25 : vector<1x512xf32> to vector<8x512xf32>
    %27 = vector.extract_strided_slice %3 {offsets = [1, 0], sizes = [1, 512], strides = [1, 1]} : vector<4x512xf32> to vector<1x512xf32>
    %28 = vector.shape_cast %27 : vector<1x512xf32> to vector<1x512xf32>
    %29 = vector.broadcast %28 : vector<1x512xf32> to vector<8x512xf32>
    %30 = arith.mulf %26, %21 : vector<8x512xf32>
    %31 = arith.addf %16, %30 : vector<8x512xf32>
    %32 = arith.mulf %29, %23 : vector<8x512xf32>
    %33 = arith.subf %31, %32 : vector<8x512xf32>
    %34 = arith.mulf %26, %23 : vector<8x512xf32>
    %35 = arith.addf %19, %34 : vector<8x512xf32>
    %36 = arith.mulf %29, %21 : vector<8x512xf32>
    %37 = arith.addf %35, %36 : vector<8x512xf32>
    %c2 = arith.constant 2 : index
    %c0_16 = arith.constant 0 : index
    %c0_17 = arith.constant 0 : index
    %38 = vector.load %arg3[%c2, %c0_16, %c0_17] : memref<4x8x512xf32, #tpu.memory_space<vmem>>, vector<1x8x512xf32>
    %39 = vector.shape_cast %38 : vector<1x8x512xf32> to vector<8x512xf32>
    %c2_18 = arith.constant 2 : index
    %c0_19 = arith.constant 0 : index
    %c0_20 = arith.constant 0 : index
    %40 = vector.load %arg4[%c2_18, %c0_19, %c0_20] : memref<4x8x512xf32, #tpu.memory_space<vmem>>, vector<1x8x512xf32>
    %41 = vector.shape_cast %40 : vector<1x8x512xf32> to vector<8x512xf32>
    %42 = vector.extract_strided_slice %1 {offsets = [2, 0], sizes = [1, 512], strides = [1, 1]} : vector<4x512xf32> to vector<1x512xf32>
    %43 = vector.shape_cast %42 : vector<1x512xf32> to vector<1x512xf32>
    %44 = vector.broadcast %43 : vector<1x512xf32> to vector<8x512xf32>
    %45 = vector.extract_strided_slice %3 {offsets = [2, 0], sizes = [1, 512], strides = [1, 1]} : vector<4x512xf32> to vector<1x512xf32>
    %46 = vector.shape_cast %45 : vector<1x512xf32> to vector<1x512xf32>
    %47 = vector.broadcast %46 : vector<1x512xf32> to vector<8x512xf32>
    %48 = arith.mulf %44, %39 : vector<8x512xf32>
    %49 = arith.addf %33, %48 : vector<8x512xf32>
    %50 = arith.mulf %47, %41 : vector<8x512xf32>
    %51 = arith.subf %49, %50 : vector<8x512xf32>
    %52 = arith.mulf %44, %41 : vector<8x512xf32>
    %53 = arith.addf %37, %52 : vector<8x512xf32>
    %54 = arith.mulf %47, %39 : vector<8x512xf32>
    %55 = arith.addf %53, %54 : vector<8x512xf32>
    %c3 = arith.constant 3 : index
    %c0_21 = arith.constant 0 : index
    %c0_22 = arith.constant 0 : index
    %56 = vector.load %arg3[%c3, %c0_21, %c0_22] : memref<4x8x512xf32, #tpu.memory_space<vmem>>, vector<1x8x512xf32>
    %57 = vector.shape_cast %56 : vector<1x8x512xf32> to vector<8x512xf32>
    %c3_23 = arith.constant 3 : index
    %c0_24 = arith.constant 0 : index
    %c0_25 = arith.constant 0 : index
    %58 = vector.load %arg4[%c3_23, %c0_24, %c0_25] : memref<4x8x512xf32, #tpu.memory_space<vmem>>, vector<1x8x512xf32>
    %59 = vector.shape_cast %58 : vector<1x8x512xf32> to vector<8x512xf32>
    %60 = vector.extract_strided_slice %1 {offsets = [3, 0], sizes = [1, 512], strides = [1, 1]} : vector<4x512xf32> to vector<1x512xf32>
    %61 = vector.shape_cast %60 : vector<1x512xf32> to vector<1x512xf32>
    %62 = vector.broadcast %61 : vector<1x512xf32> to vector<8x512xf32>
    %63 = vector.extract_strided_slice %3 {offsets = [3, 0], sizes = [1, 512], strides = [1, 1]} : vector<4x512xf32> to vector<1x512xf32>
    %64 = vector.shape_cast %63 : vector<1x512xf32> to vector<1x512xf32>
    %65 = vector.broadcast %64 : vector<1x512xf32> to vector<8x512xf32>
    %66 = arith.mulf %62, %57 : vector<8x512xf32>
    %67 = arith.addf %51, %66 : vector<8x512xf32>
    %68 = arith.mulf %65, %59 : vector<8x512xf32>
    %69 = arith.subf %67, %68 : vector<8x512xf32>
    %70 = arith.mulf %62, %59 : vector<8x512xf32>
    %71 = arith.addf %55, %70 : vector<8x512xf32>
    %72 = arith.mulf %65, %57 : vector<8x512xf32>
    %73 = arith.addf %71, %72 : vector<8x512xf32>
    %c0_26 = arith.constant 0 : index
    %c0_27 = arith.constant 0 : index
    %c0_28 = arith.constant 0 : index
    %74 = vector.load %arg5[%c0_26, %c0_27, %c0_28] : memref<2x8x512xf32, #tpu.memory_space<vmem>>, vector<1x8x512xf32>
    %75 = vector.shape_cast %74 : vector<1x8x512xf32> to vector<8x512xf32>
    %76 = vector.shape_cast %69 : vector<8x512xf32> to vector<1x8x512xf32>
    tpu.vector_store %arg5[%c0_26, %c0_27, %c0_28], %76 {strides = array<i32>} : memref<2x8x512xf32, #tpu.memory_space<vmem>>, vector<1x8x512xf32>,
    %c0_29 = arith.constant 0 : index
    %c0_30 = arith.constant 0 : index
    %c0_31 = arith.constant 0 : index
    %77 = vector.load %arg6[%c0_29, %c0_30, %c0_31] : memref<2x8x512xf32, #tpu.memory_space<vmem>>, vector<1x8x512xf32>
    %78 = vector.shape_cast %77 : vector<1x8x512xf32> to vector<8x512xf32>
    %79 = vector.shape_cast %73 : vector<8x512xf32> to vector<1x8x512xf32>
    tpu.vector_store %arg6[%c0_29, %c0_30, %c0_31], %79 {strides = array<i32>} : memref<2x8x512xf32, #tpu.memory_space<vmem>>, vector<1x8x512xf32>,
    %c1_32 = arith.constant 1 : index
    %c0_33 = arith.constant 0 : index
    %c0_34 = arith.constant 0 : index
    %80 = vector.load %arg1[%c1_32, %c0_33, %c0_34] : memref<2x4x512xf32, #tpu.memory_space<vmem>>, vector<1x4x512xf32>
    %81 = vector.shape_cast %80 : vector<1x4x512xf32> to vector<4x512xf32>
    %c1_35 = arith.constant 1 : index
    %c0_36 = arith.constant 0 : index
    %c0_37 = arith.constant 0 : index
    %82 = vector.load %arg2[%c1_35, %c0_36, %c0_37] : memref<2x4x512xf32, #tpu.memory_space<vmem>>, vector<1x4x512xf32>
    %83 = vector.shape_cast %82 : vector<1x4x512xf32> to vector<4x512xf32>
    %c0_38 = arith.constant 0 : index
    %c0_39 = arith.constant 0 : index
    %c0_40 = arith.constant 0 : index
    %84 = vector.load %arg3[%c0_38, %c0_39, %c0_40] : memref<4x8x512xf32, #tpu.memory_space<vmem>>, vector<1x8x512xf32>
    %85 = vector.shape_cast %84 : vector<1x8x512xf32> to vector<8x512xf32>
    %c0_41 = arith.constant 0 : index
    %c0_42 = arith.constant 0 : index
    %c0_43 = arith.constant 0 : index
    %86 = vector.load %arg4[%c0_41, %c0_42, %c0_43] : memref<4x8x512xf32, #tpu.memory_space<vmem>>, vector<1x8x512xf32>
    %87 = vector.shape_cast %86 : vector<1x8x512xf32> to vector<8x512xf32>
    %88 = vector.extract_strided_slice %81 {offsets = [0, 0], sizes = [1, 512], strides = [1, 1]} : vector<4x512xf32> to vector<1x512xf32>
    %89 = vector.shape_cast %88 : vector<1x512xf32> to vector<1x512xf32>
    %90 = vector.broadcast %89 : vector<1x512xf32> to vector<8x512xf32>
    %91 = vector.extract_strided_slice %83 {offsets = [0, 0], sizes = [1, 512], strides = [1, 1]} : vector<4x512xf32> to vector<1x512xf32>
    %92 = vector.shape_cast %91 : vector<1x512xf32> to vector<1x512xf32>
    %93 = vector.broadcast %92 : vector<1x512xf32> to vector<8x512xf32>
    %94 = arith.mulf %90, %85 : vector<8x512xf32>
    %95 = arith.mulf %93, %87 : vector<8x512xf32>
    %96 = arith.subf %94, %95 : vector<8x512xf32>
    %97 = arith.mulf %90, %87 : vector<8x512xf32>
    %98 = arith.mulf %93, %85 : vector<8x512xf32>
    %99 = arith.addf %97, %98 : vector<8x512xf32>
    %c1_44 = arith.constant 1 : index
    %c0_45 = arith.constant 0 : index
    %c0_46 = arith.constant 0 : index
    %100 = vector.load %arg3[%c1_44, %c0_45, %c0_46] : memref<4x8x512xf32, #tpu.memory_space<vmem>>, vector<1x8x512xf32>
    %101 = vector.shape_cast %100 : vector<1x8x512xf32> to vector<8x512xf32>
    %c1_47 = arith.constant 1 : index
    %c0_48 = arith.constant 0 : index
    %c0_49 = arith.constant 0 : index
    %102 = vector.load %arg4[%c1_47, %c0_48, %c0_49] : memref<4x8x512xf32, #tpu.memory_space<vmem>>, vector<1x8x512xf32>
    %103 = vector.shape_cast %102 : vector<1x8x512xf32> to vector<8x512xf32>
    %104 = vector.extract_strided_slice %81 {offsets = [1, 0], sizes = [1, 512], strides = [1, 1]} : vector<4x512xf32> to vector<1x512xf32>
    %105 = vector.shape_cast %104 : vector<1x512xf32> to vector<1x512xf32>
    %106 = vector.broadcast %105 : vector<1x512xf32> to vector<8x512xf32>
    %107 = vector.extract_strided_slice %83 {offsets = [1, 0], sizes = [1, 512], strides = [1, 1]} : vector<4x512xf32> to vector<1x512xf32>
    %108 = vector.shape_cast %107 : vector<1x512xf32> to vector<1x512xf32>
    %109 = vector.broadcast %108 : vector<1x512xf32> to vector<8x512xf32>
    %110 = arith.mulf %106, %101 : vector<8x512xf32>
    %111 = arith.addf %96, %110 : vector<8x512xf32>
    %112 = arith.mulf %109, %103 : vector<8x512xf32>
    %113 = arith.subf %111, %112 : vector<8x512xf32>
    %114 = arith.mulf %106, %103 : vector<8x512xf32>
    %115 = arith.addf %99, %114 : vector<8x512xf32>
    %116 = arith.mulf %109, %101 : vector<8x512xf32>
    %117 = arith.addf %115, %116 : vector<8x512xf32>
    %c2_50 = arith.constant 2 : index
    %c0_51 = arith.constant 0 : index
    %c0_52 = arith.constant 0 : index
    %118 = vector.load %arg3[%c2_50, %c0_51, %c0_52] : memref<4x8x512xf32, #tpu.memory_space<vmem>>, vector<1x8x512xf32>
    %119 = vector.shape_cast %118 : vector<1x8x512xf32> to vector<8x512xf32>
    %c2_53 = arith.constant 2 : index
    %c0_54 = arith.constant 0 : index
    %c0_55 = arith.constant 0 : index
    %120 = vector.load %arg4[%c2_53, %c0_54, %c0_55] : memref<4x8x512xf32, #tpu.memory_space<vmem>>, vector<1x8x512xf32>
    %121 = vector.shape_cast %120 : vector<1x8x512xf32> to vector<8x512xf32>
    %122 = vector.extract_strided_slice %81 {offsets = [2, 0], sizes = [1, 512], strides = [1, 1]} : vector<4x512xf32> to vector<1x512xf32>
    %123 = vector.shape_cast %122 : vector<1x512xf32> to vector<1x512xf32>
    %124 = vector.broadcast %123 : vector<1x512xf32> to vector<8x512xf32>
    %125 = vector.extract_strided_slice %83 {offsets = [2, 0], sizes = [1, 512], strides = [1, 1]} : vector<4x512xf32> to vector<1x512xf32>
    %126 = vector.shape_cast %125 : vector<1x512xf32> to vector<1x512xf32>
    %127 = vector.broadcast %126 : vector<1x512xf32> to vector<8x512xf32>
    %128 = arith.mulf %124, %119 : vector<8x512xf32>
    %129 = arith.addf %113, %128 : vector<8x512xf32>
    %130 = arith.mulf %127, %121 : vector<8x512xf32>
    %131 = arith.subf %129, %130 : vector<8x512xf32>
    %132 = arith.mulf %124, %121 : vector<8x512xf32>
    %133 = arith.addf %117, %132 : vector<8x512xf32>
    %134 = arith.mulf %127, %119 : vector<8x512xf32>
    %135 = arith.addf %133, %134 : vector<8x512xf32>
    %c3_56 = arith.constant 3 : index
    %c0_57 = arith.constant 0 : index
    %c0_58 = arith.constant 0 : index
    %136 = vector.load %arg3[%c3_56, %c0_57, %c0_58] : memref<4x8x512xf32, #tpu.memory_space<vmem>>, vector<1x8x512xf32>
    %137 = vector.shape_cast %136 : vector<1x8x512xf32> to vector<8x512xf32>
    %c3_59 = arith.constant 3 : index
    %c0_60 = arith.constant 0 : index
    %c0_61 = arith.constant 0 : index
    %138 = vector.load %arg4[%c3_59, %c0_60, %c0_61] : memref<4x8x512xf32, #tpu.memory_space<vmem>>, vector<1x8x512xf32>
    %139 = vector.shape_cast %138 : vector<1x8x512xf32> to vector<8x512xf32>
    %140 = vector.extract_strided_slice %81 {offsets = [3, 0], sizes = [1, 512], strides = [1, 1]} : vector<4x512xf32> to vector<1x512xf32>
    %141 = vector.shape_cast %140 : vector<1x512xf32> to vector<1x512xf32>
    %142 = vector.broadcast %141 : vector<1x512xf32> to vector<8x512xf32>
    %143 = vector.extract_strided_slice %83 {offsets = [3, 0], sizes = [1, 512], strides = [1, 1]} : vector<4x512xf32> to vector<1x512xf32>
    %144 = vector.shape_cast %143 : vector<1x512xf32> to vector<1x512xf32>
    %145 = vector.broadcast %144 : vector<1x512xf32> to vector<8x512xf32>
    %146 = arith.mulf %142, %137 : vector<8x512xf32>
    %147 = arith.addf %131, %146 : vector<8x512xf32>
    %148 = arith.mulf %145, %139 : vector<8x512xf32>
    %149 = arith.subf %147, %148 : vector<8x512xf32>
    %150 = arith.mulf %142, %139 : vector<8x512xf32>
    %151 = arith.addf %135, %150 : vector<8x512xf32>
    %152 = arith.mulf %145, %137 : vector<8x512xf32>
    %153 = arith.addf %151, %152 : vector<8x512xf32>
    %c1_62 = arith.constant 1 : index
    %c0_63 = arith.constant 0 : index
    %c0_64 = arith.constant 0 : index
    %154 = vector.load %arg5[%c1_62, %c0_63, %c0_64] : memref<2x8x512xf32, #tpu.memory_space<vmem>>, vector<1x8x512xf32>
    %155 = vector.shape_cast %154 : vector<1x8x512xf32> to vector<8x512xf32>
    %156 = vector.shape_cast %149 : vector<8x512xf32> to vector<1x8x512xf32>
    tpu.vector_store %arg5[%c1_62, %c0_63, %c0_64], %156 {strides = array<i32>} : memref<2x8x512xf32, #tpu.memory_space<vmem>>, vector<1x8x512xf32>,
    %c1_65 = arith.constant 1 : index
    %c0_66 = arith.constant 0 : index
    %c0_67 = arith.constant 0 : index
    %157 = vector.load %arg6[%c1_65, %c0_66, %c0_67] : memref<2x8x512xf32, #tpu.memory_space<vmem>>, vector<1x8x512xf32>
    %158 = vector.shape_cast %157 : vector<1x8x512xf32> to vector<8x512xf32>
    %159 = vector.shape_cast %153 : vector<8x512xf32> to vector<1x8x512xf32>
    tpu.vector_store %arg6[%c1_65, %c0_66, %c0_67], %159 {strides = array<i32>} : memref<2x8x512xf32, #tpu.memory_space<vmem>>, vector<1x8x512xf32>,
    return
  }
  func.func @transform_0(%arg0: i32) -> (i32, i32, i32) {
    %c0_i32 = arith.constant 0 : i32
    %c0_i32_0 = arith.constant 0 : i32
    %c0_i32_1 = arith.constant 0 : i32
    return %c0_i32, %c0_i32_0, %arg0 : i32, i32, i32
  }
  func.func @transform_1(%arg0: i32) -> (i32, i32, i32) {
    %c0_i32 = arith.constant 0 : i32
    %c0_i32_0 = arith.constant 0 : i32
    %c0_i32_1 = arith.constant 0 : i32
    return %c0_i32, %c0_i32_0, %arg0 : i32, i32, i32
  }
  func.func @transform_2(%arg0: i32) -> (i32, i32, i32) {
    %c0_i32 = arith.constant 0 : i32
    %c0_i32_0 = arith.constant 0 : i32
    %c0_i32_1 = arith.constant 0 : i32
    return %c0_i32, %c0_i32_0, %arg0 : i32, i32, i32
  }
  func.func @transform_3(%arg0: i32) -> (i32, i32, i32) {
    %c0_i32 = arith.constant 0 : i32
    %c0_i32_0 = arith.constant 0 : i32
    %c0_i32_1 = arith.constant 0 : i32
    return %c0_i32, %c0_i32_0, %arg0 : i32, i32, i32
  }
  func.func @transform_4(%arg0: i32) -> (i32, i32, i32) {
    %c0_i32 = arith.constant 0 : i32
    %c0_i32_0 = arith.constant 0 : i32
    %c0_i32_1 = arith.constant 0 : i32
    return %c0_i32, %c0_i32_0, %arg0 : i32, i32, i32
  }
  func.func @transform_5(%arg0: i32) -> (i32, i32, i32) {
    %c0_i32 = arith.constant 0 : i32
    %c0_i32_0 = arith.constant 0 : i32
    %c0_i32_1 = arith.constant 0 : i32
    return %c0_i32, %c0_i32_0, %arg0 : i32, i32, i32
  }
}

</mosaic_0001>

<llo_original>
// kernel: fft_conv_forward.1
$region0: #{fft_conv_forward.1}
  #allocation0 [shape = 'u32[]', space=smem, size = 0x4, offset = 0x4, fixed_abs, tag = 'smem constant byte address 0x4 - core index']
  #allocation1 [shape = 'u32[144,128]{1,0:T(1,128)}', space=vmem, size = 0x12000, scoped, tag = 'internal scratch']
  %s0 = inlined_call_operand.vmem [shape: f32[2,4,2560], index: 0, kind: input, shape index: {}]
  %s1 = inlined_call_operand.vmem [shape: f32[2,4,2560], index: 1, kind: input, shape index: {}]
  %s2 = inlined_call_operand.vmem [shape: f32[4,8,2560], index: 2, kind: input, shape index: {}]
  %s3 = inlined_call_operand.vmem [shape: f32[4,8,2560], index: 3, kind: input, shape index: {}]
  %s4 = inlined_call_operand.vmem [shape: f32[2,8,2560], index: 4, kind: output, shape index: {0}]
  %s5 = inlined_call_operand.vmem [shape: f32[2,8,2560], index: 5, kind: output, shape index: {1}]
  %6 = xla_tuple %s4, %s5
  %s7 = sld [smem:[#allocation0]]
  $region187: #{fft_conv_forward.1} parent=0
    _
  %s9 = ssub.s32 1, %s7
  %s10 = scalar_select 0, %s9, %s7
  $region1: #{fft_conv_forward.1} parent=0
    #allocation2 [shape = 'u8[32768]{0}', space=vmem, size = 0x8000, scoped, tag = 'input window, operand 0']
    #allocation3 [shape = 'u8[32768]{0}', space=vmem, size = 0x8000, scoped, tag = 'input window, operand 1']
    #allocation4 [shape = 'u8[131072]{0}', space=vmem, size = 0x20000, scoped, tag = 'input window, operand 2']
    #allocation5 [shape = 'u8[131072]{0}', space=vmem, size = 0x20000, scoped, tag = 'input window, operand 3']
    #allocation6 [shape = 'u8[65536]{0}', space=vmem, size = 0x10000, scoped, tag = 'output window, operand 0']
    #allocation7 [shape = 'u8[65536]{0}', space=vmem, size = 0x10000, scoped, tag = 'output window, operand 1']
    loop: start=0, step=1, limit=7
    $region2: #{fft_conv_forward.1} parent=1 // loop_pre_header
      _
    $region3: #{fft_conv_forward.1} parent=1 // loop_header
      %s12 = sphi 0, %s16
      %p13 = scmp.ge.s32.totalorder %s12, 7
      %s22 = sphi 0, %s24
      %s25 = sphi 0, %s22
      %s26 = sphi 0, %s25
      %s42 = sphi 0, %s26
      %s48 = sphi 0, %s50
      %s51 = sphi 0, %s48
      %s52 = sphi 0, %s51
      %s68 = sphi 0, %s52
      %s74 = sphi 0, %s76
      %s77 = sphi 0, %s74
      %s78 = sphi 0, %s77
      %s94 = sphi 0, %s78
      %s100 = sphi 0, %s102
      %s103 = sphi 0, %s100
      %s104 = sphi 0, %s103
      %s120 = sphi 0, %s104
      %s126 = sphi 0, %s128
      %s129 = sphi 0, %s126
      %s130 = sphi 0, %s129
      %s146 = sphi 0, %s130
      %s152 = sphi 0, %s154
      %s155 = sphi 0, %s152
      %s156 = sphi 0, %s155
      %s172 = sphi 0, %s156
    $region4: #{fft_conv_forward.1} parent=1 // loop_header_branch
      %15 = sbr.rel (%p13) target = $region8
    $region5: #{fft_conv_forward.1} parent=1 // loop_body
      %s17 = ssub.s32 %s12, 1
      %s18 = ssub.s32 %s12, 2
      %s19 = sadd.s32 %s12, 1
      %s20 = ssub.s32 %s12, %s19
      %p21 = scmp.eq.s32.totalorder %s20, 0
      %s23 = sadd.s32 %s22, 1
      %s24 = scalar_select %p21, %s22, %s23
      %p27 = pneg %p21
      %p28 = scmp.eq.s32.totalorder %s12, 4
      %p29 = por %p27, %p28
      %p30 = scmp.ne.s32.totalorder %s22, %s25
      %p31 = scmp.eq.s32.totalorder %s12, 0
      %p32 = por %p30, %p31
      %p33 = scmp.ne.s32.totalorder %s22, %s25
      %p34 = scmp.eq.s32.totalorder %s17, 4
      %p35 = por %p33, %p34
      %p36 = scmp.ne.s32.totalorder %s25, %s26
      %p37 = scmp.eq.s32.totalorder %s17, 0
      %p38 = por %p36, %p37
      %p39 = scmp.ne.s32.totalorder %s25, %s26
      %p40 = scmp.eq.s32.totalorder %s18, 4
      %p41 = por %p39, %p40
      %p43 = scmp.ne.s32.totalorder %s26, %s42
      %p44 = scmp.eq.s32.totalorder %s18, 0
      %p45 = por %p43, %p44
      %s46 = ssub.s32 %s12, %s19
      %p47 = scmp.eq.s32.totalorder %s46, 0
      %s49 = sadd.s32 %s48, 1
      %s50 = scalar_select %p47, %s48, %s49
      %p53 = pneg %p47
      %p54 = scmp.eq.s32.totalorder %s12, 4
      %p55 = por %p53, %p54
      %p56 = scmp.ne.s32.totalorder %s48, %s51
      %p57 = scmp.eq.s32.totalorder %s12, 0
      %p58 = por %p56, %p57
      %p59 = scmp.ne.s32.totalorder %s48, %s51
      %p60 = scmp.eq.s32.totalorder %s17, 4
      %p61 = por %p59, %p60
      %p62 = scmp.ne.s32.totalorder %s51, %s52
      %p63 = scmp.eq.s32.totalorder %s17, 0
      %p64 = por %p62, %p63
      %p65 = scmp.ne.s32.totalorder %s51, %s52
      %p66 = scmp.eq.s32.totalorder %s18, 4
      %p67 = por %p65, %p66
      %p69 = scmp.ne.s32.totalorder %s52, %s68
      %p70 = scmp.eq.s32.totalorder %s18, 0
      %p71 = por %p69, %p70
      %s72 = ssub.s32 %s12, %s19
      %p73 = scmp.eq.s32.totalorder %s72, 0
      %s75 = sadd.s32 %s74, 1
      %s76 = scalar_select %p73, %s74, %s75
      %p79 = pneg %p73
      %p80 = scmp.eq.s32.totalorder %s12, 4
      %p81 = por %p79, %p80
      %p82 = scmp.ne.s32.totalorder %s74, %s77
      %p83 = scmp.eq.s32.totalorder %s12, 0
      %p84 = por %p82, %p83
      %p85 = scmp.ne.s32.totalorder %s74, %s77
      %p86 = scmp.eq.s32.totalorder %s17, 4
      %p87 = por %p85, %p86
      %p88 = scmp.ne.s32.totalorder %s77, %s78
      %p89 = scmp.eq.s32.totalorder %s17, 0
      %p90 = por %p88, %p89
      %p91 = scmp.ne.s32.totalorder %s77, %s78
      %p92 = scmp.eq.s32.totalorder %s18, 4
      %p93 = por %p91, %p92
      %p95 = scmp.ne.s32.totalorder %s78, %s94
      %p96 = scmp.eq.s32.totalorder %s18, 0
      %p97 = por %p95, %p96
      %s98 = ssub.s32 %s12, %s19
      %p99 = scmp.eq.s32.totalorder %s98, 0
      %s101 = sadd.s32 %s100, 1
      %s102 = scalar_select %p99, %s100, %s101
      %p105 = pneg %p99
      %p106 = scmp.eq.s32.totalorder %s12, 4
      %p107 = por %p105, %p106
      %p108 = scmp.ne.s32.totalorder %s100, %s103
      %p109 = scmp.eq.s32.totalorder %s12, 0
      %p110 = por %p108, %p109
      %p111 = scmp.ne.s32.totalorder %s100, %s103
      %p112 = scmp.eq.s32.totalorder %s17, 4
      %p113 = por %p111, %p112
      %p114 = scmp.ne.s32.totalorder %s103, %s104
      %p115 = scmp.eq.s32.totalorder %s17, 0
      %p116 = por %p114, %p115
      %p117 = scmp.ne.s32.totalorder %s103, %s104
      %p118 = scmp.eq.s32.totalorder %s18, 4
      %p119 = por %p117, %p118
      %p121 = scmp.ne.s32.totalorder %s104, %s120
      %p122 = scmp.eq.s32.totalorder %s18, 0
      %p123 = por %p121, %p122
      %s124 = ssub.s32 %s12, %s19
      %p125 = scmp.eq.s32.totalorder %s124, 0
      %s127 = sadd.s32 %s126, 1
      %s128 = scalar_select %p125, %s126, %s127
      %p131 = pneg %p125
      %p132 = scmp.eq.s32.totalorder %s12, 4
      %p133 = por %p131, %p132
      %p134 = scmp.ne.s32.totalorder %s126, %s129
      %p135 = scmp.eq.s32.totalorder %s12, 0
      %p136 = por %p134, %p135
      %p137 = scmp.ne.s32.totalorder %s126, %s129
      %p138 = scmp.eq.s32.totalorder %s17, 4
      %p139 = por %p137, %p138
      %p140 = scmp.ne.s32.totalorder %s129, %s130
      %p141 = scmp.eq.s32.totalorder %s17, 0
      %p142 = por %p140, %p141
      %p143 = scmp.ne.s32.totalorder %s129, %s130
      %p144 = scmp.eq.s32.totalorder %s18, 4
      %p145 = por %p143, %p144
      %p147 = scmp.ne.s32.totalorder %s130, %s146
      %p148 = scmp.eq.s32.totalorder %s18, 0
      %p149 = por %p147, %p148
      %s150 = ssub.s32 %s12, %s19
      %p151 = scmp.eq.s32.totalorder %s150, 0
      %s153 = sadd.s32 %s152, 1
      %s154 = scalar_select %p151, %s152, %s153
      %p157 = pneg %p151
      %p158 = scmp.eq.s32.totalorder %s12, 4
      %p159 = por %p157, %p158
      %p160 = scmp.ne.s32.totalorder %s152, %s155
      %p161 = scmp.eq.s32.totalorder %s12, 0
      %p162 = por %p160, %p161
      %p163 = scmp.ne.s32.totalorder %s152, %s155
      %p164 = scmp.eq.s32.totalorder %s17, 4
      %p165 = por %p163, %p164
      %p166 = scmp.ne.s32.totalorder %s155, %s156
      %p167 = scmp.eq.s32.totalorder %s17, 0
      %p168 = por %p166, %p167
      %p169 = scmp.ne.s32.totalorder %s155, %s156
      %p170 = scmp.eq.s32.totalorder %s18, 4
      %p171 = por %p169, %p170
      %p173 = scmp.ne.s32.totalorder %s156, %s172
      %p174 = scmp.eq.s32.totalorder %s18, 0
      %p175 = por %p173, %p174
      %p176 = scmp.le.s32.totalorder 1, %s12
      %p177 = scmp.lt.s32.totalorder %s12, 6
      %p178 = pnand %p176, %p177
      %p179 = pneg %p178
      // Predicated region
      $region9: #{fft_conv_forward.1} parent=5 // pred_check
        _
      $region10: #{fft_conv_forward.1} parent=5 // pred_check_branch
        %181 = sbr.rel (%p178) target = $region12
      $region11: #{fft_conv_forward.1} parent=5 // pred_region
        %s182 = ssub.s32 %s12, 1
      $region12: #{fft_conv_forward.1} parent=5 // pred_fallthru
        _
      %p183 = scmp.lt.s32.totalorder %s12, 5
      // Predicated region
      $region13: #{fft_conv_forward.1} parent=5 // pred_check
        %p184 = pneg %p183
      $region14: #{fft_conv_forward.1} parent=5 // pred_check_branch
        %186 = sbr.rel (%p184) target = $region16
      $region15: #{fft_conv_forward.1} parent=5 // pred_region
        // Predicated region
        $region17: #{fft_conv_forward.1} parent=15 // pred_check
          %p187 = pneg %p32
        $region18: #{fft_conv_forward.1} parent=15 // pred_check_branch
          %189 = sbr.rel (%p187) target = $region20
        $region19: #{fft_conv_forward.1} parent=15 // pred_region
          %s190 = sand.u32 %s22, 1
          %s191 = sand.u32 %s22, 1
          %s192 = smul.addr %s191, 32
          %s193 = scalar_lea.vmem [#allocation2], %s192
          %s194 = smul.u32 4, %s12
          %s195 = smul.addr %s194, 4
          %s196 = scalar_lea.vmem %s0, %s195
          // Predicated region
          $region21: #{fft_conv_forward.1} parent=19 // pred_check
            _
          $region22: #{fft_conv_forward.1} parent=19 // pred_check_branch
            %198 = sbr.rel (0) target = $region24
          $region23: #{fft_conv_forward.1} parent=19 // pred_region
            // Predicated region
            $region25: #{fft_conv_forward.1} parent=23 // pred_check
              _
            $region26: #{fft_conv_forward.1} parent=23 // pred_check_branch
              %200 = sbr.rel (0) target = $region28
            $region27: #{fft_conv_forward.1} parent=23 // pred_region
              loop: start=0, step=1, limit=1
              $region29: #{fft_conv_forward.1} parent=27 // loop_pre_header
                _
              $region30: #{fft_conv_forward.1} parent=27 // loop_header
                %s202 = sphi 0, %s206
                %p203 = scmp.ge.s32.totalorder %s202, 1
                %s207 = sphi %s196, %s196
                %s208 = sphi %s193, %s193
              $region31: #{fft_conv_forward.1} parent=27 // loop_header_branch
                %205 = sbr.rel (%p203) target = $region35
              $region32: #{fft_conv_forward.1} parent=27 // loop_body
                %v209 = vld [vmem:[%s207] sm:$0xff]
                %210 = vst [vmem:[%s208] sm:$0xff] %v209
                %v211 = vld [vmem:[%s207 + $0x8] sm:$0xff]
                %212 = vst [vmem:[%s208 + $0x8] sm:$0xff] %v211
                %v213 = vld [vmem:[%s207 + $0x50] sm:$0xff]
                %214 = vst [vmem:[%s208 + $0x10] sm:$0xff] %v213
                %v215 = vld [vmem:[%s207 + $0x58] sm:$0xff]
                %216 = vst [vmem:[%s208 + $0x18] sm:$0xff] %v215
              $region33: #{fft_conv_forward.1} parent=27 // loop_footer
                %s206 = sadd.s32 1, %s202
              $region34: #{fft_conv_forward.1} parent=27 // loop_footer_branch
                %201 = sbr.rel target = $region30
              $region35: #{fft_conv_forward.1} parent=27 // loop_exit
                _
            $region28: #{fft_conv_forward.1} parent=23 // pred_fallthru
              _
            // Predicated region
            $region36: #{fft_conv_forward.1} parent=23 // pred_check
              _
            $region37: #{fft_conv_forward.1} parent=23 // pred_check_branch
              %218 = sbr.rel target = $region39
            $region38: #{fft_conv_forward.1} parent=23 // pred_region
              _
            $region39: #{fft_conv_forward.1} parent=23 // pred_fallthru
              _
          $region24: #{fft_conv_forward.1} parent=19 // pred_fallthru
            _
          %219 = vnop
        $region20: #{fft_conv_forward.1} parent=15 // pred_fallthru
          _
        // Predicated region
        $region40: #{fft_conv_forward.1} parent=15 // pred_check
          %p220 = pneg %p58
        $region41: #{fft_conv_forward.1} parent=15 // pred_check_branch
          %222 = sbr.rel (%p220) target = $region43
        $region42: #{fft_conv_forward.1} parent=15 // pred_region
          %s223 = sand.u32 %s48, 1
          %s224 = sand.u32 %s48, 1
          %s225 = smul.addr %s224, 32
          %s226 = scalar_lea.vmem [#allocation3], %s225
          %s227 = smul.u32 4, %s12
          %s228 = smul.addr %s227, 4
          %s229 = scalar_lea.vmem %s1, %s228
          // Predicated region
          $region44: #{fft_conv_forward.1} parent=42 // pred_check
            _
          $region45: #{fft_conv_forward.1} parent=42 // pred_check_branch
            %231 = sbr.rel (0) target = $region47
          $region46: #{fft_conv_forward.1} parent=42 // pred_region
            // Predicated region
            $region48: #{fft_conv_forward.1} parent=46 // pred_check
              _
            $region49: #{fft_conv_forward.1} parent=46 // pred_check_branch
              %233 = sbr.rel (0) target = $region51
            $region50: #{fft_conv_forward.1} parent=46 // pred_region
              loop: start=0, step=1, limit=1
              $region52: #{fft_conv_forward.1} parent=50 // loop_pre_header
                _
              $region53: #{fft_conv_forward.1} parent=50 // loop_header
                %s235 = sphi 0, %s239
                %p236 = scmp.ge.s32.totalorder %s235, 1
                %s240 = sphi %s229, %s229
                %s241 = sphi %s226, %s226
              $region54: #{fft_conv_forward.1} parent=50 // loop_header_branch
                %238 = sbr.rel (%p236) target = $region58
              $region55: #{fft_conv_forward.1} parent=50 // loop_body
                %v242 = vld [vmem:[%s240] sm:$0xff]
                %243 = vst [vmem:[%s241] sm:$0xff] %v242
                %v244 = vld [vmem:[%s240 + $0x8] sm:$0xff]
                %245 = vst [vmem:[%s241 + $0x8] sm:$0xff] %v244
                %v246 = vld [vmem:[%s240 + $0x50] sm:$0xff]
                %247 = vst [vmem:[%s241 + $0x10] sm:$0xff] %v246
                %v248 = vld [vmem:[%s240 + $0x58] sm:$0xff]
                %249 = vst [vmem:[%s241 + $0x18] sm:$0xff] %v248
              $region56: #{fft_conv_forward.1} parent=50 // loop_footer
                %s239 = sadd.s32 1, %s235
              $region57: #{fft_conv_forward.1} parent=50 // loop_footer_branch
                %234 = sbr.rel target = $region53
              $region58: #{fft_conv_forward.1} parent=50 // loop_exit
                _
            $region51: #{fft_conv_forward.1} parent=46 // pred_fallthru
              _
            // Predicated region
            $region59: #{fft_conv_forward.1} parent=46 // pred_check
              _
            $region60: #{fft_conv_forward.1} parent=46 // pred_check_branch
              %251 = sbr.rel target = $region62
            $region61: #{fft_conv_forward.1} parent=46 // pred_region
              _
            $region62: #{fft_conv_forward.1} parent=46 // pred_fallthru
              _
          $region47: #{fft_conv_forward.1} parent=42 // pred_fallthru
            _
          %252 = vnop
        $region43: #{fft_conv_forward.1} parent=15 // pred_fallthru
          _
        // Predicated region
        $region63: #{fft_conv_forward.1} parent=15 // pred_check
          %p253 = pneg %p84
        $region64: #{fft_conv_forward.1} parent=15 // pred_check_branch
          %255 = sbr.rel (%p253) target = $region66
        $region65: #{fft_conv_forward.1} parent=15 // pred_region
          %s256 = sand.u32 %s74, 1
          %s257 = sand.u32 %s74, 1
          %s258 = smul.addr %s257, 128
          %s259 = scalar_lea.vmem [#allocation4], %s258
          %s260 = smul.u32 4, %s12
          %s261 = smul.addr %s260, 8
          %s262 = scalar_lea.vmem %s2, %s261
          // Predicated region
          $region67: #{fft_conv_forward.1} parent=65 // pred_check
            _
          $region68: #{fft_conv_forward.1} parent=65 // pred_check_branch
            %264 = sbr.rel (0) target = $region70
          $region69: #{fft_conv_forward.1} parent=65 // pred_region
            // Predicated region
            $region71: #{fft_conv_forward.1} parent=69 // pred_check
              _
            $region72: #{fft_conv_forward.1} parent=69 // pred_check_branch
              %266 = sbr.rel (0) target = $region74
            $region73: #{fft_conv_forward.1} parent=69 // pred_region
              loop: start=0, step=1, limit=1
              $region75: #{fft_conv_forward.1} parent=73 // loop_pre_header
                _
              $region76: #{fft_conv_forward.1} parent=73 // loop_header
                %s268 = sphi 0, %s272
                %p269 = scmp.ge.s32.totalorder %s268, 1
                %s273 = sphi %s262, %s262
                %s274 = sphi %s259, %s259
              $region77: #{fft_conv_forward.1} parent=73 // loop_header_branch
                %271 = sbr.rel (%p269) target = $region81
              $region78: #{fft_conv_forward.1} parent=73 // loop_body
                %v275 = vld [vmem:[%s273] sm:$0xff]
                %276 = vst [vmem:[%s274] sm:$0xff] %v275
                %v277 = vld [vmem:[%s273 + $0x8] sm:$0xff]
                %278 = vst [vmem:[%s274 + $0x8] sm:$0xff] %v277
                %v279 = vld [vmem:[%s273 + $0x10] sm:$0xff]
                %280 = vst [vmem:[%s274 + $0x10] sm:$0xff] %v279
                %v281 = vld [vmem:[%s273 + $0x18] sm:$0xff]
                %282 = vst [vmem:[%s274 + $0x18] sm:$0xff] %v281
                %v283 = vld [vmem:[%s273 + $0xa0] sm:$0xff]
                %284 = vst [vmem:[%s274 + $0x20] sm:$0xff] %v283
                %v285 = vld [vmem:[%s273 + $0xa8] sm:$0xff]
                %286 = vst [vmem:[%s274 + $0x28] sm:$0xff] %v285
                %v287 = vld [vmem:[%s273 + $0xb0] sm:$0xff]
                %288 = vst [vmem:[%s274 + $0x30] sm:$0xff] %v287
                %v289 = vld [vmem:[%s273 + $0xb8] sm:$0xff]
                %290 = vst [vmem:[%s274 + $0x38] sm:$0xff] %v289
                %v291 = vld [vmem:[%s273 + $0x140] sm:$0xff]
                %292 = vst [vmem:[%s274 + $0x40] sm:$0xff] %v291
                %v293 = vld [vmem:[%s273 + $0x148] sm:$0xff]
                %294 = vst [vmem:[%s274 + $0x48] sm:$0xff] %v293
                %v295 = vld [vmem:[%s273 + $0x150] sm:$0xff]
                %296 = vst [vmem:[%s274 + $0x50] sm:$0xff] %v295
                %v297 = vld [vmem:[%s273 + $0x158] sm:$0xff]
                %298 = vst [vmem:[%s274 + $0x58] sm:$0xff] %v297
                %v299 = vld [vmem:[%s273 + $0x1e0] sm:$0xff]
                %300 = vst [vmem:[%s274 + $0x60] sm:$0xff] %v299
                %v301 = vld [vmem:[%s273 + $0x1e8] sm:$0xff]
                %302 = vst [vmem:[%s274 + $0x68] sm:$0xff] %v301
                %v303 = vld [vmem:[%s273 + $0x1f0] sm:$0xff]
                %304 = vst [vmem:[%s274 + $0x70] sm:$0xff] %v303
                %v305 = vld [vmem:[%s273 + $0x1f8] sm:$0xff]
                %306 = vst [vmem:[%s274 + $0x78] sm:$0xff] %v305
              $region79: #{fft_conv_forward.1} parent=73 // loop_footer
                %s272 = sadd.s32 1, %s268
              $region80: #{fft_conv_forward.1} parent=73 // loop_footer_branch
                %267 = sbr.rel target = $region76
              $region81: #{fft_conv_forward.1} parent=73 // loop_exit
                _
            $region74: #{fft_conv_forward.1} parent=69 // pred_fallthru
              _
            // Predicated region
            $region82: #{fft_conv_forward.1} parent=69 // pred_check
              _
            $region83: #{fft_conv_forward.1} parent=69 // pred_check_branch
              %308 = sbr.rel target = $region85
            $region84: #{fft_conv_forward.1} parent=69 // pred_region
              _
            $region85: #{fft_conv_forward.1} parent=69 // pred_fallthru
              _
          $region70: #{fft_conv_forward.1} parent=65 // pred_fallthru
            _
          %309 = vnop
        $region66: #{fft_conv_forward.1} parent=15 // pred_fallthru
          _
        // Predicated region
        $region86: #{fft_conv_forward.1} parent=15 // pred_check
          %p310 = pneg %p110
        $region87: #{fft_conv_forward.1} parent=15 // pred_check_branch
          %312 = sbr.rel (%p310) target = $region89
        $region88: #{fft_conv_forward.1} parent=15 // pred_region
          %s313 = sand.u32 %s100, 1
          %s314 = sand.u32 %s100, 1
          %s315 = smul.addr %s314, 128
          %s316 = scalar_lea.vmem [#allocation5], %s315
          %s317 = smul.u32 4, %s12
          %s318 = smul.addr %s317, 8
          %s319 = scalar_lea.vmem %s3, %s318
          // Predicated region
          $region90: #{fft_conv_forward.1} parent=88 // pred_check
            _
          $region91: #{fft_conv_forward.1} parent=88 // pred_check_branch
            %321 = sbr.rel (0) target = $region93
          $region92: #{fft_conv_forward.1} parent=88 // pred_region
            // Predicated region
            $region94: #{fft_conv_forward.1} parent=92 // pred_check
              _
            $region95: #{fft_conv_forward.1} parent=92 // pred_check_branch
              %323 = sbr.rel (0) target = $region97
            $region96: #{fft_conv_forward.1} parent=92 // pred_region
              loop: start=0, step=1, limit=1
              $region98: #{fft_conv_forward.1} parent=96 // loop_pre_header
                _
              $region99: #{fft_conv_forward.1} parent=96 // loop_header
                %s325 = sphi 0, %s329
                %p326 = scmp.ge.s32.totalorder %s325, 1
                %s330 = sphi %s319, %s319
                %s331 = sphi %s316, %s316
              $region100: #{fft_conv_forward.1} parent=96 // loop_header_branch
                %328 = sbr.rel (%p326) target = $region104
              $region101: #{fft_conv_forward.1} parent=96 // loop_body
                %v332 = vld [vmem:[%s330] sm:$0xff]
                %333 = vst [vmem:[%s331] sm:$0xff] %v332
                %v334 = vld [vmem:[%s330 + $0x8] sm:$0xff]
                %335 = vst [vmem:[%s331 + $0x8] sm:$0xff] %v334
                %v336 = vld [vmem:[%s330 + $0x10] sm:$0xff]
                %337 = vst [vmem:[%s331 + $0x10] sm:$0xff] %v336
                %v338 = vld [vmem:[%s330 + $0x18] sm:$0xff]
                %339 = vst [vmem:[%s331 + $0x18] sm:$0xff] %v338
                %v340 = vld [vmem:[%s330 + $0xa0] sm:$0xff]
                %341 = vst [vmem:[%s331 + $0x20] sm:$0xff] %v340
                %v342 = vld [vmem:[%s330 + $0xa8] sm:$0xff]
                %343 = vst [vmem:[%s331 + $0x28] sm:$0xff] %v342
                %v344 = vld [vmem:[%s330 + $0xb0] sm:$0xff]
                %345 = vst [vmem:[%s331 + $0x30] sm:$0xff] %v344
                %v346 = vld [vmem:[%s330 + $0xb8] sm:$0xff]
                %347 = vst [vmem:[%s331 + $0x38] sm:$0xff] %v346
                %v348 = vld [vmem:[%s330 + $0x140] sm:$0xff]
                %349 = vst [vmem:[%s331 + $0x40] sm:$0xff] %v348
                %v350 = vld [vmem:[%s330 + $0x148] sm:$0xff]
                %351 = vst [vmem:[%s331 + $0x48] sm:$0xff] %v350
                %v352 = vld [vmem:[%s330 + $0x150] sm:$0xff]
                %353 = vst [vmem:[%s331 + $0x50] sm:$0xff] %v352
                %v354 = vld [vmem:[%s330 + $0x158] sm:$0xff]
                %355 = vst [vmem:[%s331 + $0x58] sm:$0xff] %v354
                %v356 = vld [vmem:[%s330 + $0x1e0] sm:$0xff]
                %357 = vst [vmem:[%s331 + $0x60] sm:$0xff] %v356
                %v358 = vld [vmem:[%s330 + $0x1e8] sm:$0xff]
                %359 = vst [vmem:[%s331 + $0x68] sm:$0xff] %v358
                %v360 = vld [vmem:[%s330 + $0x1f0] sm:$0xff]
                %361 = vst [vmem:[%s331 + $0x70] sm:$0xff] %v360
                %v362 = vld [vmem:[%s330 + $0x1f8] sm:$0xff]
                %363 = vst [vmem:[%s331 + $0x78] sm:$0xff] %v362
              $region102: #{fft_conv_forward.1} parent=96 // loop_footer
                %s329 = sadd.s32 1, %s325
              $region103: #{fft_conv_forward.1} parent=96 // loop_footer_branch
                %324 = sbr.rel target = $region99
              $region104: #{fft_conv_forward.1} parent=96 // loop_exit
                _
            $region97: #{fft_conv_forward.1} parent=92 // pred_fallthru
              _
            // Predicated region
            $region105: #{fft_conv_forward.1} parent=92 // pred_check
              _
            $region106: #{fft_conv_forward.1} parent=92 // pred_check_branch
              %365 = sbr.rel target = $region108
            $region107: #{fft_conv_forward.1} parent=92 // pred_region
              _
            $region108: #{fft_conv_forward.1} parent=92 // pred_fallthru
              _
          $region93: #{fft_conv_forward.1} parent=88 // pred_fallthru
            _
          %366 = vnop
        $region89: #{fft_conv_forward.1} parent=15 // pred_fallthru
          _
      $region16: #{fft_conv_forward.1} parent=5 // pred_fallthru
        _
      %p367 = scmp.le.s32.totalorder 1, %s12
      %p368 = scmp.lt.s32.totalorder %s12, 6
      %p369 = pnand %p367, %p368
      %p370 = pneg %p369
      // Predicated region
      $region109: #{fft_conv_forward.1} parent=5 // pred_check
        _
      $region110: #{fft_conv_forward.1} parent=5 // pred_check_branch
        %372 = sbr.rel (%p369) target = $region112
      $region111: #{fft_conv_forward.1} parent=5 // pred_region
        %s373 = ssub.s32 %s12, 1
        %s374 = sand.u32 %s25, 1
        %s375 = sand.u32 %s25, 1
        %s376 = smul.addr %s375, 32
        %s377 = scalar_lea.vmem [#allocation2], %s376
        // Predicated region
        $region113: #{fft_conv_forward.1} parent=111 // pred_check
          %p378 = pneg %p38
        $region114: #{fft_conv_forward.1} parent=111 // pred_check_branch
          %380 = sbr.rel (%p378) target = $region116
        $region115: #{fft_conv_forward.1} parent=111 // pred_region
          _
        $region116: #{fft_conv_forward.1} parent=111 // pred_fallthru
          _
        %s381 = sand.u32 %s51, 1
        %s382 = sand.u32 %s51, 1
        %s383 = smul.addr %s382, 32
        %s384 = scalar_lea.vmem [#allocation3], %s383
        // Predicated region
        $region117: #{fft_conv_forward.1} parent=111 // pred_check
          %p385 = pneg %p64
        $region118: #{fft_conv_forward.1} parent=111 // pred_check_branch
          %387 = sbr.rel (%p385) target = $region120
        $region119: #{fft_conv_forward.1} parent=111 // pred_region
          _
        $region120: #{fft_conv_forward.1} parent=111 // pred_fallthru
          _
        %s388 = sand.u32 %s77, 1
        %s389 = sand.u32 %s77, 1
        %s390 = smul.addr %s389, 128
        %s391 = scalar_lea.vmem [#allocation4], %s390
        // Predicated region
        $region121: #{fft_conv_forward.1} parent=111 // pred_check
          %p392 = pneg %p90
        $region122: #{fft_conv_forward.1} parent=111 // pred_check_branch
          %394 = sbr.rel (%p392) target = $region124
        $region123: #{fft_conv_forward.1} parent=111 // pred_region
          _
        $region124: #{fft_conv_forward.1} parent=111 // pred_fallthru
          _
        %s395 = sand.u32 %s103, 1
        %s396 = sand.u32 %s103, 1
        %s397 = smul.addr %s396, 128
        %s398 = scalar_lea.vmem [#allocation5], %s397
        // Predicated region
        $region125: #{fft_conv_forward.1} parent=111 // pred_check
          %p399 = pneg %p116
        $region126: #{fft_conv_forward.1} parent=111 // pred_check_branch
          %401 = sbr.rel (%p399) target = $region128
        $region127: #{fft_conv_forward.1} parent=111 // pred_region
          _
        $region128: #{fft_conv_forward.1} parent=111 // pred_fallthru
          _
        %s402 = sand.u32 %s25, 1
        %s403 = sand.u32 %s25, 1
        %s404 = smul.addr %s403, 32
        %s405 = scalar_lea.vmem [#allocation2], %s404
        %p406 = pneg %p38
        %p407 = pneg %p35
        %s408 = sand.u32 %s51, 1
        %s409 = sand.u32 %s51, 1
        %s410 = smul.addr %s409, 32
        %s411 = scalar_lea.vmem [#allocation3], %s410
        %p412 = pneg %p64
        %p413 = pneg %p61
        %s414 = sand.u32 %s77, 1
        %s415 = sand.u32 %s77, 1
        %s416 = smul.addr %s415, 128
        %s417 = scalar_lea.vmem [#allocation4], %s416
        %p418 = pneg %p90
        %p419 = pneg %p87
        %s420 = sand.u32 %s103, 1
        %s421 = sand.u32 %s103, 1
        %s422 = smul.addr %s421, 128
        %s423 = scalar_lea.vmem [#allocation5], %s422
        %p424 = pneg %p116
        %p425 = pneg %p113
        %p426 = pneg %p142
        %p427 = pneg %p139
        %s428 = sand.u32 %s129, 1
        %s429 = sand.u32 %s129, 1
        %s430 = smul.addr %s429, 64
        %s431 = scalar_lea.vmem [#allocation6], %s430
        %p432 = pneg %p168
        %p433 = pneg %p165
        %s434 = sand.u32 %s155, 1
        %s435 = sand.u32 %s155, 1
        %s436 = smul.addr %s435, 64
        %s437 = scalar_lea.vmem [#allocation7], %s436
        %s438 = smul.u32 4, %s17
        %s439 = smul.u32 4, %s17
        %s440 = smul.u32 4, %s17
        %s441 = smul.u32 4, %s17
        %s442 = smul.u32 4, %s17
        %s443 = smul.u32 4, %s17
        %v444 = vld [vmem:[%s377] sm:$0xff]
        %v445 = vld [vmem:[%s377 + $0x8] sm:$0xff]
        %v446 = vld [vmem:[%s384] sm:$0xff]
        %v447 = vld [vmem:[%s384 + $0x8] sm:$0xff]
        %v448 = vld [vmem:[%s391] sm:$0xff]
        %v449 = vld [vmem:[%s391 + $0x8] sm:$0xff]
        %v450 = vld [vmem:[%s391 + $0x10] sm:$0xff]
        %v451 = vld [vmem:[%s391 + $0x18] sm:$0xff]
        %v452 = vld [vmem:[%s398] sm:$0xff]
        %v453 = vld [vmem:[%s398 + $0x8] sm:$0xff]
        %v454 = vld [vmem:[%s398 + $0x10] sm:$0xff]
        %v455 = vld [vmem:[%s398 + $0x18] sm:$0xff]
        %v458 = vlaneseq
        %v459 = vshrl.u32 %v458, 7
        %v460 = vsub.s32 0, %v459
        %v461 = vrot.slane %v444, %v460
        %v462 = vlaneseq
        %v463 = vshrl.u32 %v462, 7
        %v464 = vsub.s32 4, %v463
        %v465 = vrot.slane %v444, %v464
        %v466 = vlaneseq
        %v467 = vshrl.u32 %v466, 7
        %v468 = vsub.s32 0, %v467
        %v469 = vrot.slane %v445, %v468
        %v470 = vlaneseq
        %v471 = vshrl.u32 %v470, 7
        %v472 = vsub.s32 4, %v471
        %v473 = vrot.slane %v445, %v472
        %v478 = vlaneseq
        %v479 = vshrl.u32 %v478, 7
        %v480 = vsub.s32 0, %v479
        %v481 = vrot.slane %v461, %v480
        %v482 = vlaneseq
        %v483 = vshrl.u32 %v482, 7
        %v484 = vsub.s32 0, %v483
        %v485 = vrot.slane %v465, %v484
        %v486 = vlaneseq
        %v487 = vshrl.u32 %v486, 7
        %v488 = vsub.s32 0, %v487
        %v489 = vrot.slane %v469, %v488
        %v490 = vlaneseq
        %v491 = vshrl.u32 %v490, 7
        %v492 = vsub.s32 0, %v491
        %v493 = vrot.slane %v473, %v492
        %v496 = vlaneseq
        %v497 = vshrl.u32 %v496, 7
        %v498 = vsub.s32 0, %v497
        %v499 = vrot.slane %v446, %v498
        %v500 = vlaneseq
        %v501 = vshrl.u32 %v500, 7
        %v502 = vsub.s32 4, %v501
        %v503 = vrot.slane %v446, %v502
        %v504 = vlaneseq
        %v505 = vshrl.u32 %v504, 7
        %v506 = vsub.s32 0, %v505
        %v507 = vrot.slane %v447, %v506
        %v508 = vlaneseq
        %v509 = vshrl.u32 %v508, 7
        %v510 = vsub.s32 4, %v509
        %v511 = vrot.slane %v447, %v510
        %v516 = vlaneseq
        %v517 = vshrl.u32 %v516, 7
        %v518 = vsub.s32 0, %v517
        %v519 = vrot.slane %v499, %v518
        %v520 = vlaneseq
        %v521 = vshrl.u32 %v520, 7
        %v522 = vsub.s32 0, %v521
        %v523 = vrot.slane %v503, %v522
        %v524 = vlaneseq
        %v525 = vshrl.u32 %v524, 7
        %v526 = vsub.s32 0, %v525
        %v527 = vrot.slane %v507, %v526
        %v528 = vlaneseq
        %v529 = vshrl.u32 %v528, 7
        %v530 = vsub.s32 0, %v529
        %v531 = vrot.slane %v511, %v530
        %v532 = vmul.f32 %v481, %v448
        %v533 = vmul.f32 %v485, %v449
        %v534 = vmul.f32 %v489, %v450
        %v535 = vmul.f32 %v493, %v451
        %v536 = vmul.f32 %v519, %v452
        %v537 = vmul.f32 %v523, %v453
        %v538 = vmul.f32 %v527, %v454
        %v539 = vmul.f32 %v531, %v455
        %v540 = vsub.f32 %v532, %v536
        %v541 = vsub.f32 %v533, %v537
        %v542 = vsub.f32 %v534, %v538
        %v543 = vsub.f32 %v535, %v539
        %v544 = vmul.f32 %v481, %v452
        %v545 = vmul.f32 %v485, %v453
        %v546 = vmul.f32 %v489, %v454
        %v547 = vmul.f32 %v493, %v455
        %v548 = vmul.f32 %v519, %v448
        %v549 = vmul.f32 %v523, %v449
        %v550 = vmul.f32 %v527, %v450
        %v551 = vmul.f32 %v531, %v451
        %v552 = vadd.f32 %v544, %v548
        %v553 = vadd.f32 %v545, %v549
        %v554 = vadd.f32 %v546, %v550
        %v555 = vadd.f32 %v547, %v551
        %s556 = scalar_lea.vmem %s391, 32 [#allocation4]
        %v557 = vld [vmem:[%s556] sm:$0xff]
        %v558 = vld [vmem:[%s556 + $0x8] sm:$0xff]
        %v559 = vld [vmem:[%s556 + $0x10] sm:$0xff]
        %v560 = vld [vmem:[%s556 + $0x18] sm:$0xff]
        %s561 = scalar_lea.vmem %s398, 32 [#allocation5]
        %v562 = vld [vmem:[%s561] sm:$0xff]
        %v563 = vld [vmem:[%s561 + $0x8] sm:$0xff]
        %v564 = vld [vmem:[%s561 + $0x10] sm:$0xff]
        %v565 = vld [vmem:[%s561 + $0x18] sm:$0xff]
        %v566 = vlaneseq
        %v567 = vshrl.u32 %v566, 7
        %v568 = vsub.s32 1, %v567
        %v569 = vrot.slane %v444, %v568
        %v570 = vlaneseq
        %v571 = vshrl.u32 %v570, 7
        %v572 = vsub.s32 5, %v571
        %v573 = vrot.slane %v444, %v572
        %v574 = vlaneseq
        %v575 = vshrl.u32 %v574, 7
        %v576 = vsub.s32 1, %v575
        %v577 = vrot.slane %v445, %v576
        %v578 = vlaneseq
        %v579 = vshrl.u32 %v578, 7
        %v580 = vsub.s32 5, %v579
        %v581 = vrot.slane %v445, %v580
        %v586 = vlaneseq
        %v587 = vshrl.u32 %v586, 7
        %v588 = vsub.s32 1, %v587
        %v589 = vrot.slane %v569, %v588
        %v590 = vlaneseq
        %v591 = vshrl.u32 %v590, 7
        %v592 = vsub.s32 1, %v591
        %v593 = vrot.slane %v573, %v592
        %v594 = vlaneseq
        %v595 = vshrl.u32 %v594, 7
        %v596 = vsub.s32 1, %v595
        %v597 = vrot.slane %v577, %v596
        %v598 = vlaneseq
        %v599 = vshrl.u32 %v598, 7
        %v600 = vsub.s32 1, %v599
        %v601 = vrot.slane %v581, %v600
        %v602 = vlaneseq
        %v603 = vshrl.u32 %v602, 7
        %v604 = vsub.s32 1, %v603
        %v605 = vrot.slane %v446, %v604
        %v606 = vlaneseq
        %v607 = vshrl.u32 %v606, 7
        %v608 = vsub.s32 5, %v607
        %v609 = vrot.slane %v446, %v608
        %v610 = vlaneseq
        %v611 = vshrl.u32 %v610, 7
        %v612 = vsub.s32 1, %v611
        %v613 = vrot.slane %v447, %v612
        %v614 = vlaneseq
        %v615 = vshrl.u32 %v614, 7
        %v616 = vsub.s32 5, %v615
        %v617 = vrot.slane %v447, %v616
        %v622 = vlaneseq
        %v623 = vshrl.u32 %v622, 7
        %v624 = vsub.s32 1, %v623
        %v625 = vrot.slane %v605, %v624
        %v626 = vlaneseq
        %v627 = vshrl.u32 %v626, 7
        %v628 = vsub.s32 1, %v627
        %v629 = vrot.slane %v609, %v628
        %v630 = vlaneseq
        %v631 = vshrl.u32 %v630, 7
        %v632 = vsub.s32 1, %v631
        %v633 = vrot.slane %v613, %v632
        %v634 = vlaneseq
        %v635 = vshrl.u32 %v634, 7
        %v636 = vsub.s32 1, %v635
        %v637 = vrot.slane %v617, %v636
        %v638 = vmul.f32 %v589, %v557
        %v639 = vmul.f32 %v593, %v558
        %v640 = vmul.f32 %v597, %v559
        %v641 = vmul.f32 %v601, %v560
        %v642 = vadd.f32 %v540, %v638
        %v643 = vadd.f32 %v541, %v639
        %v644 = vadd.f32 %v542, %v640
        %v645 = vadd.f32 %v543, %v641
        %v646 = vmul.f32 %v625, %v562
        %v647 = vmul.f32 %v629, %v563
        %v648 = vmul.f32 %v633, %v564
        %v649 = vmul.f32 %v637, %v565
        %v650 = vsub.f32 %v642, %v646
        %v651 = vsub.f32 %v643, %v647
        %v652 = vsub.f32 %v644, %v648
        %v653 = vsub.f32 %v645, %v649
        %v654 = vmul.f32 %v589, %v562
        %v655 = vmul.f32 %v593, %v563
        %v656 = vmul.f32 %v597, %v564
        %v657 = vmul.f32 %v601, %v565
        %v658 = vadd.f32 %v552, %v654
        %v659 = vadd.f32 %v553, %v655
        %v660 = vadd.f32 %v554, %v656
        %v661 = vadd.f32 %v555, %v657
        %v662 = vmul.f32 %v625, %v557
        %v663 = vmul.f32 %v629, %v558
        %v664 = vmul.f32 %v633, %v559
        %v665 = vmul.f32 %v637, %v560
        %v666 = vadd.f32 %v658, %v662
        %v667 = vadd.f32 %v659, %v663
        %v668 = vadd.f32 %v660, %v664
        %v669 = vadd.f32 %v661, %v665
        %s670 = scalar_lea.vmem %s391, 64 [#allocation4]
        %v671 = vld [vmem:[%s670] sm:$0xff]
        %v672 = vld [vmem:[%s670 + $0x8] sm:$0xff]
        %v673 = vld [vmem:[%s670 + $0x10] sm:$0xff]
        %v674 = vld [vmem:[%s670 + $0x18] sm:$0xff]
        %s675 = scalar_lea.vmem %s398, 64 [#allocation5]
        %v676 = vld [vmem:[%s675] sm:$0xff]
        %v677 = vld [vmem:[%s675 + $0x8] sm:$0xff]
        %v678 = vld [vmem:[%s675 + $0x10] sm:$0xff]
        %v679 = vld [vmem:[%s675 + $0x18] sm:$0xff]
        %v680 = vlaneseq
        %v681 = vshrl.u32 %v680, 7
        %v682 = vsub.s32 2, %v681
        %v683 = vrot.slane %v444, %v682
        %v684 = vlaneseq
        %v685 = vshrl.u32 %v684, 7
        %v686 = vsub.s32 6, %v685
        %v687 = vrot.slane %v444, %v686
        %v688 = vlaneseq
        %v689 = vshrl.u32 %v688, 7
        %v690 = vsub.s32 2, %v689
        %v691 = vrot.slane %v445, %v690
        %v692 = vlaneseq
        %v693 = vshrl.u32 %v692, 7
        %v694 = vsub.s32 6, %v693
        %v695 = vrot.slane %v445, %v694
        %v700 = vlaneseq
        %v701 = vshrl.u32 %v700, 7
        %v702 = vsub.s32 2, %v701
        %v703 = vrot.slane %v683, %v702
        %v704 = vlaneseq
        %v705 = vshrl.u32 %v704, 7
        %v706 = vsub.s32 2, %v705
        %v707 = vrot.slane %v687, %v706
        %v708 = vlaneseq
        %v709 = vshrl.u32 %v708, 7
        %v710 = vsub.s32 2, %v709
        %v711 = vrot.slane %v691, %v710
        %v712 = vlaneseq
        %v713 = vshrl.u32 %v712, 7
        %v714 = vsub.s32 2, %v713
        %v715 = vrot.slane %v695, %v714
        %v716 = vlaneseq
        %v717 = vshrl.u32 %v716, 7
        %v718 = vsub.s32 2, %v717
        %v719 = vrot.slane %v446, %v718
        %v720 = vlaneseq
        %v721 = vshrl.u32 %v720, 7
        %v722 = vsub.s32 6, %v721
        %v723 = vrot.slane %v446, %v722
        %v724 = vlaneseq
        %v725 = vshrl.u32 %v724, 7
        %v726 = vsub.s32 2, %v725
        %v727 = vrot.slane %v447, %v726
        %v728 = vlaneseq
        %v729 = vshrl.u32 %v728, 7
        %v730 = vsub.s32 6, %v729
        %v731 = vrot.slane %v447, %v730
        %v736 = vlaneseq
        %v737 = vshrl.u32 %v736, 7
        %v738 = vsub.s32 2, %v737
        %v739 = vrot.slane %v719, %v738
        %v740 = vlaneseq
        %v741 = vshrl.u32 %v740, 7
        %v742 = vsub.s32 2, %v741
        %v743 = vrot.slane %v723, %v742
        %v744 = vlaneseq
        %v745 = vshrl.u32 %v744, 7
        %v746 = vsub.s32 2, %v745
        %v747 = vrot.slane %v727, %v746
        %v748 = vlaneseq
        %v749 = vshrl.u32 %v748, 7
        %v750 = vsub.s32 2, %v749
        %v751 = vrot.slane %v731, %v750
        %v752 = vmul.f32 %v703, %v671
        %v753 = vmul.f32 %v707, %v672
        %v754 = vmul.f32 %v711, %v673
        %v755 = vmul.f32 %v715, %v674
        %v756 = vadd.f32 %v650, %v752
        %v757 = vadd.f32 %v651, %v753
        %v758 = vadd.f32 %v652, %v754
        %v759 = vadd.f32 %v653, %v755
        %v760 = vmul.f32 %v739, %v676
        %v761 = vmul.f32 %v743, %v677
        %v762 = vmul.f32 %v747, %v678
        %v763 = vmul.f32 %v751, %v679
        %v764 = vsub.f32 %v756, %v760
        %v765 = vsub.f32 %v757, %v761
        %v766 = vsub.f32 %v758, %v762
        %v767 = vsub.f32 %v759, %v763
        %v768 = vmul.f32 %v703, %v676
        %v769 = vmul.f32 %v707, %v677
        %v770 = vmul.f32 %v711, %v678
        %v771 = vmul.f32 %v715, %v679
        %v772 = vadd.f32 %v666, %v768
        %v773 = vadd.f32 %v667, %v769
        %v774 = vadd.f32 %v668, %v770
        %v775 = vadd.f32 %v669, %v771
        %v776 = vmul.f32 %v739, %v671
        %v777 = vmul.f32 %v743, %v672
        %v778 = vmul.f32 %v747, %v673
        %v779 = vmul.f32 %v751, %v674
        %v780 = vadd.f32 %v772, %v776
        %v781 = vadd.f32 %v773, %v777
        %v782 = vadd.f32 %v774, %v778
        %v783 = vadd.f32 %v775, %v779
        %s784 = scalar_lea.vmem %s391, 96 [#allocation4]
        %v785 = vld [vmem:[%s784] sm:$0xff]
        %v786 = vld [vmem:[%s784 + $0x8] sm:$0xff]
        %v787 = vld [vmem:[%s784 + $0x10] sm:$0xff]
        %v788 = vld [vmem:[%s784 + $0x18] sm:$0xff]
        %s789 = scalar_lea.vmem %s398, 96 [#allocation5]
        %v790 = vld [vmem:[%s789] sm:$0xff]
        %v791 = vld [vmem:[%s789 + $0x8] sm:$0xff]
        %v792 = vld [vmem:[%s789 + $0x10] sm:$0xff]
        %v793 = vld [vmem:[%s789 + $0x18] sm:$0xff]
        %v794 = vlaneseq
        %v795 = vshrl.u32 %v794, 7
        %v796 = vsub.s32 3, %v795
        %v797 = vrot.slane %v444, %v796
        %v798 = vlaneseq
        %v799 = vshrl.u32 %v798, 7
        %v800 = vsub.s32 7, %v799
        %v801 = vrot.slane %v444, %v800
        %v802 = vlaneseq
        %v803 = vshrl.u32 %v802, 7
        %v804 = vsub.s32 3, %v803
        %v805 = vrot.slane %v445, %v804
        %v806 = vlaneseq
        %v807 = vshrl.u32 %v806, 7
        %v808 = vsub.s32 7, %v807
        %v809 = vrot.slane %v445, %v808
        %v814 = vlaneseq
        %v815 = vshrl.u32 %v814, 7
        %v816 = vsub.s32 3, %v815
        %v817 = vrot.slane %v797, %v816
        %v818 = vlaneseq
        %v819 = vshrl.u32 %v818, 7
        %v820 = vsub.s32 3, %v819
        %v821 = vrot.slane %v801, %v820
        %v822 = vlaneseq
        %v823 = vshrl.u32 %v822, 7
        %v824 = vsub.s32 3, %v823
        %v825 = vrot.slane %v805, %v824
        %v826 = vlaneseq
        %v827 = vshrl.u32 %v826, 7
        %v828 = vsub.s32 3, %v827
        %v829 = vrot.slane %v809, %v828
        %v830 = vlaneseq
        %v831 = vshrl.u32 %v830, 7
        %v832 = vsub.s32 3, %v831
        %v833 = vrot.slane %v446, %v832
        %v834 = vlaneseq
        %v835 = vshrl.u32 %v834, 7
        %v836 = vsub.s32 7, %v835
        %v837 = vrot.slane %v446, %v836
        %v838 = vlaneseq
        %v839 = vshrl.u32 %v838, 7
        %v840 = vsub.s32 3, %v839
        %v841 = vrot.slane %v447, %v840
        %v842 = vlaneseq
        %v843 = vshrl.u32 %v842, 7
        %v844 = vsub.s32 7, %v843
        %v845 = vrot.slane %v447, %v844
        %v850 = vlaneseq
        %v851 = vshrl.u32 %v850, 7
        %v852 = vsub.s32 3, %v851
        %v853 = vrot.slane %v833, %v852
        %v854 = vlaneseq
        %v855 = vshrl.u32 %v854, 7
        %v856 = vsub.s32 3, %v855
        %v857 = vrot.slane %v837, %v856
        %v858 = vlaneseq
        %v859 = vshrl.u32 %v858, 7
        %v860 = vsub.s32 3, %v859
        %v861 = vrot.slane %v841, %v860
        %v862 = vlaneseq
        %v863 = vshrl.u32 %v862, 7
        %v864 = vsub.s32 3, %v863
        %v865 = vrot.slane %v845, %v864
        %v866 = vmul.f32 %v817, %v785
        %v867 = vmul.f32 %v821, %v786
        %v868 = vmul.f32 %v825, %v787
        %v869 = vmul.f32 %v829, %v788
        %v870 = vadd.f32 %v764, %v866
        %v871 = vadd.f32 %v765, %v867
        %v872 = vadd.f32 %v766, %v868
        %v873 = vadd.f32 %v767, %v869
        %v874 = vmul.f32 %v853, %v790
        %v875 = vmul.f32 %v857, %v791
        %v876 = vmul.f32 %v861, %v792
        %v877 = vmul.f32 %v865, %v793
        %v878 = vsub.f32 %v870, %v874
        %v879 = vsub.f32 %v871, %v875
        %v880 = vsub.f32 %v872, %v876
        %v881 = vsub.f32 %v873, %v877
        %v882 = vmul.f32 %v817, %v790
        %v883 = vmul.f32 %v821, %v791
        %v884 = vmul.f32 %v825, %v792
        %v885 = vmul.f32 %v829, %v793
        %v886 = vadd.f32 %v780, %v882
        %v887 = vadd.f32 %v781, %v883
        %v888 = vadd.f32 %v782, %v884
        %v889 = vadd.f32 %v783, %v885
        %v890 = vmul.f32 %v853, %v785
        %v891 = vmul.f32 %v857, %v786
        %v892 = vmul.f32 %v861, %v787
        %v893 = vmul.f32 %v865, %v788
        %v894 = vadd.f32 %v886, %v890
        %v895 = vadd.f32 %v887, %v891
        %v896 = vadd.f32 %v888, %v892
        %v897 = vadd.f32 %v889, %v893
        %898 = vst [vmem:[%s431] sm:$0xff] %v878
        %899 = vst [vmem:[%s431 + $0x8] sm:$0xff] %v879
        %900 = vst [vmem:[%s431 + $0x10] sm:$0xff] %v880
        %901 = vst [vmem:[%s431 + $0x18] sm:$0xff] %v881
        %902 = vst [vmem:[%s437] sm:$0xff] %v894
        %903 = vst [vmem:[%s437 + $0x8] sm:$0xff] %v895
        %904 = vst [vmem:[%s437 + $0x10] sm:$0xff] %v896
        %905 = vst [vmem:[%s437 + $0x18] sm:$0xff] %v897
        %s906 = scalar_lea.vmem %s377, 16 [#allocation2]
        %v907 = vld [vmem:[%s906] sm:$0xff]
        %v908 = vld [vmem:[%s906 + $0x8] sm:$0xff]
        %s909 = scalar_lea.vmem %s384, 16 [#allocation3]
        %v910 = vld [vmem:[%s909] sm:$0xff]
        %v911 = vld [vmem:[%s909 + $0x8] sm:$0xff]
        %v912 = vld [vmem:[%s391] sm:$0xff]
        %v913 = vld [vmem:[%s391 + $0x8] sm:$0xff]
        %v914 = vld [vmem:[%s391 + $0x10] sm:$0xff]
        %v915 = vld [vmem:[%s391 + $0x18] sm:$0xff]
        %v916 = vld [vmem:[%s398] sm:$0xff]
        %v917 = vld [vmem:[%s398 + $0x8] sm:$0xff]
        %v918 = vld [vmem:[%s398 + $0x10] sm:$0xff]
        %v919 = vld [vmem:[%s398 + $0x18] sm:$0xff]
        %v922 = vlaneseq
        %v923 = vshrl.u32 %v922, 7
        %v924 = vsub.s32 0, %v923
        %v925 = vrot.slane %v907, %v924
        %v926 = vlaneseq
        %v927 = vshrl.u32 %v926, 7
        %v928 = vsub.s32 4, %v927
        %v929 = vrot.slane %v907, %v928
        %v930 = vlaneseq
        %v931 = vshrl.u32 %v930, 7
        %v932 = vsub.s32 0, %v931
        %v933 = vrot.slane %v908, %v932
        %v934 = vlaneseq
        %v935 = vshrl.u32 %v934, 7
        %v936 = vsub.s32 4, %v935
        %v937 = vrot.slane %v908, %v936
        %v942 = vlaneseq
        %v943 = vshrl.u32 %v942, 7
        %v944 = vsub.s32 0, %v943
        %v945 = vrot.slane %v925, %v944
        %v946 = vlaneseq
        %v947 = vshrl.u32 %v946, 7
        %v948 = vsub.s32 0, %v947
        %v949 = vrot.slane %v929, %v948
        %v950 = vlaneseq
        %v951 = vshrl.u32 %v950, 7
        %v952 = vsub.s32 0, %v951
        %v953 = vrot.slane %v933, %v952
        %v954 = vlaneseq
        %v955 = vshrl.u32 %v954, 7
        %v956 = vsub.s32 0, %v955
        %v957 = vrot.slane %v937, %v956
        %v960 = vlaneseq
        %v961 = vshrl.u32 %v960, 7
        %v962 = vsub.s32 0, %v961
        %v963 = vrot.slane %v910, %v962
        %v964 = vlaneseq
        %v965 = vshrl.u32 %v964, 7
        %v966 = vsub.s32 4, %v965
        %v967 = vrot.slane %v910, %v966
        %v968 = vlaneseq
        %v969 = vshrl.u32 %v968, 7
        %v970 = vsub.s32 0, %v969
        %v971 = vrot.slane %v911, %v970
        %v972 = vlaneseq
        %v973 = vshrl.u32 %v972, 7
        %v974 = vsub.s32 4, %v973
        %v975 = vrot.slane %v911, %v974
        %v980 = vlaneseq
        %v981 = vshrl.u32 %v980, 7
        %v982 = vsub.s32 0, %v981
        %v983 = vrot.slane %v963, %v982
        %v984 = vlaneseq
        %v985 = vshrl.u32 %v984, 7
        %v986 = vsub.s32 0, %v985
        %v987 = vrot.slane %v967, %v986
        %v988 = vlaneseq
        %v989 = vshrl.u32 %v988, 7
        %v990 = vsub.s32 0, %v989
        %v991 = vrot.slane %v971, %v990
        %v992 = vlaneseq
        %v993 = vshrl.u32 %v992, 7
        %v994 = vsub.s32 0, %v993
        %v995 = vrot.slane %v975, %v994
        %v996 = vmul.f32 %v945, %v912
        %v997 = vmul.f32 %v949, %v913
        %v998 = vmul.f32 %v953, %v914
        %v999 = vmul.f32 %v957, %v915
        %v1000 = vmul.f32 %v983, %v916
        %v1001 = vmul.f32 %v987, %v917
        %v1002 = vmul.f32 %v991, %v918
        %v1003 = vmul.f32 %v995, %v919
        %v1004 = vsub.f32 %v996, %v1000
        %v1005 = vsub.f32 %v997, %v1001
        %v1006 = vsub.f32 %v998, %v1002
        %v1007 = vsub.f32 %v999, %v1003
        %v1008 = vmul.f32 %v945, %v916
        %v1009 = vmul.f32 %v949, %v917
        %v1010 = vmul.f32 %v953, %v918
        %v1011 = vmul.f32 %v957, %v919
        %v1012 = vmul.f32 %v983, %v912
        %v1013 = vmul.f32 %v987, %v913
        %v1014 = vmul.f32 %v991, %v914
        %v1015 = vmul.f32 %v995, %v915
        %v1016 = vadd.f32 %v1008, %v1012
        %v1017 = vadd.f32 %v1009, %v1013
        %v1018 = vadd.f32 %v1010, %v1014
        %v1019 = vadd.f32 %v1011, %v1015
        %v1020 = vld [vmem:[%s556] sm:$0xff]
        %v1021 = vld [vmem:[%s556 + $0x8] sm:$0xff]
        %v1022 = vld [vmem:[%s556 + $0x10] sm:$0xff]
        %v1023 = vld [vmem:[%s556 + $0x18] sm:$0xff]
        %v1024 = vld [vmem:[%s561] sm:$0xff]
        %v1025 = vld [vmem:[%s561 + $0x8] sm:$0xff]
        %v1026 = vld [vmem:[%s561 + $0x10] sm:$0xff]
        %v1027 = vld [vmem:[%s561 + $0x18] sm:$0xff]
        %v1028 = vlaneseq
        %v1029 = vshrl.u32 %v1028, 7
        %v1030 = vsub.s32 1, %v1029
        %v1031 = vrot.slane %v907, %v1030
        %v1032 = vlaneseq
        %v1033 = vshrl.u32 %v1032, 7
        %v1034 = vsub.s32 5, %v1033
        %v1035 = vrot.slane %v907, %v1034
        %v1036 = vlaneseq
        %v1037 = vshrl.u32 %v1036, 7
        %v1038 = vsub.s32 1, %v1037
        %v1039 = vrot.slane %v908, %v1038
        %v1040 = vlaneseq
        %v1041 = vshrl.u32 %v1040, 7
        %v1042 = vsub.s32 5, %v1041
        %v1043 = vrot.slane %v908, %v1042
        %v1048 = vlaneseq
        %v1049 = vshrl.u32 %v1048, 7
        %v1050 = vsub.s32 1, %v1049
        %v1051 = vrot.slane %v1031, %v1050
        %v1052 = vlaneseq
        %v1053 = vshrl.u32 %v1052, 7
        %v1054 = vsub.s32 1, %v1053
        %v1055 = vrot.slane %v1035, %v1054
        %v1056 = vlaneseq
        %v1057 = vshrl.u32 %v1056, 7
        %v1058 = vsub.s32 1, %v1057
        %v1059 = vrot.slane %v1039, %v1058
        %v1060 = vlaneseq
        %v1061 = vshrl.u32 %v1060, 7
        %v1062 = vsub.s32 1, %v1061
        %v1063 = vrot.slane %v1043, %v1062
        %v1064 = vlaneseq
        %v1065 = vshrl.u32 %v1064, 7
        %v1066 = vsub.s32 1, %v1065
        %v1067 = vrot.slane %v910, %v1066
        %v1068 = vlaneseq
        %v1069 = vshrl.u32 %v1068, 7
        %v1070 = vsub.s32 5, %v1069
        %v1071 = vrot.slane %v910, %v1070
        %v1072 = vlaneseq
        %v1073 = vshrl.u32 %v1072, 7
        %v1074 = vsub.s32 1, %v1073
        %v1075 = vrot.slane %v911, %v1074
        %v1076 = vlaneseq
        %v1077 = vshrl.u32 %v1076, 7
        %v1078 = vsub.s32 5, %v1077
        %v1079 = vrot.slane %v911, %v1078
        %v1084 = vlaneseq
        %v1085 = vshrl.u32 %v1084, 7
        %v1086 = vsub.s32 1, %v1085
        %v1087 = vrot.slane %v1067, %v1086
        %v1088 = vlaneseq
        %v1089 = vshrl.u32 %v1088, 7
        %v1090 = vsub.s32 1, %v1089
        %v1091 = vrot.slane %v1071, %v1090
        %v1092 = vlaneseq
        %v1093 = vshrl.u32 %v1092, 7
        %v1094 = vsub.s32 1, %v1093
        %v1095 = vrot.slane %v1075, %v1094
        %v1096 = vlaneseq
        %v1097 = vshrl.u32 %v1096, 7
        %v1098 = vsub.s32 1, %v1097
        %v1099 = vrot.slane %v1079, %v1098
        %v1100 = vmul.f32 %v1051, %v1020
        %v1101 = vmul.f32 %v1055, %v1021
        %v1102 = vmul.f32 %v1059, %v1022
        %v1103 = vmul.f32 %v1063, %v1023
        %v1104 = vadd.f32 %v1004, %v1100
        %v1105 = vadd.f32 %v1005, %v1101
        %v1106 = vadd.f32 %v1006, %v1102
        %v1107 = vadd.f32 %v1007, %v1103
        %v1108 = vmul.f32 %v1087, %v1024
        %v1109 = vmul.f32 %v1091, %v1025
        %v1110 = vmul.f32 %v1095, %v1026
        %v1111 = vmul.f32 %v1099, %v1027
        %v1112 = vsub.f32 %v1104, %v1108
        %v1113 = vsub.f32 %v1105, %v1109
        %v1114 = vsub.f32 %v1106, %v1110
        %v1115 = vsub.f32 %v1107, %v1111
        %v1116 = vmul.f32 %v1051, %v1024
        %v1117 = vmul.f32 %v1055, %v1025
        %v1118 = vmul.f32 %v1059, %v1026
        %v1119 = vmul.f32 %v1063, %v1027
        %v1120 = vadd.f32 %v1016, %v1116
        %v1121 = vadd.f32 %v1017, %v1117
        %v1122 = vadd.f32 %v1018, %v1118
        %v1123 = vadd.f32 %v1019, %v1119
        %v1124 = vmul.f32 %v1087, %v1020
        %v1125 = vmul.f32 %v1091, %v1021
        %v1126 = vmul.f32 %v1095, %v1022
        %v1127 = vmul.f32 %v1099, %v1023
        %v1128 = vadd.f32 %v1120, %v1124
        %v1129 = vadd.f32 %v1121, %v1125
        %v1130 = vadd.f32 %v1122, %v1126
        %v1131 = vadd.f32 %v1123, %v1127
        %v1132 = vld [vmem:[%s670] sm:$0xff]
        %v1133 = vld [vmem:[%s670 + $0x8] sm:$0xff]
        %v1134 = vld [vmem:[%s670 + $0x10] sm:$0xff]
        %v1135 = vld [vmem:[%s670 + $0x18] sm:$0xff]
        %v1136 = vld [vmem:[%s675] sm:$0xff]
        %v1137 = vld [vmem:[%s675 + $0x8] sm:$0xff]
        %v1138 = vld [vmem:[%s675 + $0x10] sm:$0xff]
        %v1139 = vld [vmem:[%s675 + $0x18] sm:$0xff]
        %v1140 = vlaneseq
        %v1141 = vshrl.u32 %v1140, 7
        %v1142 = vsub.s32 2, %v1141
        %v1143 = vrot.slane %v907, %v1142
        %v1144 = vlaneseq
        %v1145 = vshrl.u32 %v1144, 7
        %v1146 = vsub.s32 6, %v1145
        %v1147 = vrot.slane %v907, %v1146
        %v1148 = vlaneseq
        %v1149 = vshrl.u32 %v1148, 7
        %v1150 = vsub.s32 2, %v1149
        %v1151 = vrot.slane %v908, %v1150
        %v1152 = vlaneseq
        %v1153 = vshrl.u32 %v1152, 7
        %v1154 = vsub.s32 6, %v1153
        %v1155 = vrot.slane %v908, %v1154
        %v1160 = vlaneseq
        %v1161 = vshrl.u32 %v1160, 7
        %v1162 = vsub.s32 2, %v1161
        %v1163 = vrot.slane %v1143, %v1162
        %v1164 = vlaneseq
        %v1165 = vshrl.u32 %v1164, 7
        %v1166 = vsub.s32 2, %v1165
        %v1167 = vrot.slane %v1147, %v1166
        %v1168 = vlaneseq
        %v1169 = vshrl.u32 %v1168, 7
        %v1170 = vsub.s32 2, %v1169
        %v1171 = vrot.slane %v1151, %v1170
        %v1172 = vlaneseq
        %v1173 = vshrl.u32 %v1172, 7
        %v1174 = vsub.s32 2, %v1173
        %v1175 = vrot.slane %v1155, %v1174
        %v1176 = vlaneseq
        %v1177 = vshrl.u32 %v1176, 7
        %v1178 = vsub.s32 2, %v1177
        %v1179 = vrot.slane %v910, %v1178
        %v1180 = vlaneseq
        %v1181 = vshrl.u32 %v1180, 7
        %v1182 = vsub.s32 6, %v1181
        %v1183 = vrot.slane %v910, %v1182
        %v1184 = vlaneseq
        %v1185 = vshrl.u32 %v1184, 7
        %v1186 = vsub.s32 2, %v1185
        %v1187 = vrot.slane %v911, %v1186
        %v1188 = vlaneseq
        %v1189 = vshrl.u32 %v1188, 7
        %v1190 = vsub.s32 6, %v1189
        %v1191 = vrot.slane %v911, %v1190
        %v1196 = vlaneseq
        %v1197 = vshrl.u32 %v1196, 7
        %v1198 = vsub.s32 2, %v1197
        %v1199 = vrot.slane %v1179, %v1198
        %v1200 = vlaneseq
        %v1201 = vshrl.u32 %v1200, 7
        %v1202 = vsub.s32 2, %v1201
        %v1203 = vrot.slane %v1183, %v1202
        %v1204 = vlaneseq
        %v1205 = vshrl.u32 %v1204, 7
        %v1206 = vsub.s32 2, %v1205
        %v1207 = vrot.slane %v1187, %v1206
        %v1208 = vlaneseq
        %v1209 = vshrl.u32 %v1208, 7
        %v1210 = vsub.s32 2, %v1209
        %v1211 = vrot.slane %v1191, %v1210
        %v1212 = vmul.f32 %v1163, %v1132
        %v1213 = vmul.f32 %v1167, %v1133
        %v1214 = vmul.f32 %v1171, %v1134
        %v1215 = vmul.f32 %v1175, %v1135
        %v1216 = vadd.f32 %v1112, %v1212
        %v1217 = vadd.f32 %v1113, %v1213
        %v1218 = vadd.f32 %v1114, %v1214
        %v1219 = vadd.f32 %v1115, %v1215
        %v1220 = vmul.f32 %v1199, %v1136
        %v1221 = vmul.f32 %v1203, %v1137
        %v1222 = vmul.f32 %v1207, %v1138
        %v1223 = vmul.f32 %v1211, %v1139
        %v1224 = vsub.f32 %v1216, %v1220
        %v1225 = vsub.f32 %v1217, %v1221
        %v1226 = vsub.f32 %v1218, %v1222
        %v1227 = vsub.f32 %v1219, %v1223
        %v1228 = vmul.f32 %v1163, %v1136
        %v1229 = vmul.f32 %v1167, %v1137
        %v1230 = vmul.f32 %v1171, %v1138
        %v1231 = vmul.f32 %v1175, %v1139
        %v1232 = vadd.f32 %v1128, %v1228
        %v1233 = vadd.f32 %v1129, %v1229
        %v1234 = vadd.f32 %v1130, %v1230
        %v1235 = vadd.f32 %v1131, %v1231
        %v1236 = vmul.f32 %v1199, %v1132
        %v1237 = vmul.f32 %v1203, %v1133
        %v1238 = vmul.f32 %v1207, %v1134
        %v1239 = vmul.f32 %v1211, %v1135
        %v1240 = vadd.f32 %v1232, %v1236
        %v1241 = vadd.f32 %v1233, %v1237
        %v1242 = vadd.f32 %v1234, %v1238
        %v1243 = vadd.f32 %v1235, %v1239
        %v1244 = vld [vmem:[%s784] sm:$0xff]
        %v1245 = vld [vmem:[%s784 + $0x8] sm:$0xff]
        %v1246 = vld [vmem:[%s784 + $0x10] sm:$0xff]
        %v1247 = vld [vmem:[%s784 + $0x18] sm:$0xff]
        %v1248 = vld [vmem:[%s789] sm:$0xff]
        %v1249 = vld [vmem:[%s789 + $0x8] sm:$0xff]
        %v1250 = vld [vmem:[%s789 + $0x10] sm:$0xff]
        %v1251 = vld [vmem:[%s789 + $0x18] sm:$0xff]
        %v1252 = vlaneseq
        %v1253 = vshrl.u32 %v1252, 7
        %v1254 = vsub.s32 3, %v1253
        %v1255 = vrot.slane %v907, %v1254
        %v1256 = vlaneseq
        %v1257 = vshrl.u32 %v1256, 7
        %v1258 = vsub.s32 7, %v1257
        %v1259 = vrot.slane %v907, %v1258
        %v1260 = vlaneseq
        %v1261 = vshrl.u32 %v1260, 7
        %v1262 = vsub.s32 3, %v1261
        %v1263 = vrot.slane %v908, %v1262
        %v1264 = vlaneseq
        %v1265 = vshrl.u32 %v1264, 7
        %v1266 = vsub.s32 7, %v1265
        %v1267 = vrot.slane %v908, %v1266
        %v1272 = vlaneseq
        %v1273 = vshrl.u32 %v1272, 7
        %v1274 = vsub.s32 3, %v1273
        %v1275 = vrot.slane %v1255, %v1274
        %v1276 = vlaneseq
        %v1277 = vshrl.u32 %v1276, 7
        %v1278 = vsub.s32 3, %v1277
        %v1279 = vrot.slane %v1259, %v1278
        %v1280 = vlaneseq
        %v1281 = vshrl.u32 %v1280, 7
        %v1282 = vsub.s32 3, %v1281
        %v1283 = vrot.slane %v1263, %v1282
        %v1284 = vlaneseq
        %v1285 = vshrl.u32 %v1284, 7
        %v1286 = vsub.s32 3, %v1285
        %v1287 = vrot.slane %v1267, %v1286
        %v1288 = vlaneseq
        %v1289 = vshrl.u32 %v1288, 7
        %v1290 = vsub.s32 3, %v1289
        %v1291 = vrot.slane %v910, %v1290
        %v1292 = vlaneseq
        %v1293 = vshrl.u32 %v1292, 7
        %v1294 = vsub.s32 7, %v1293
        %v1295 = vrot.slane %v910, %v1294
        %v1296 = vlaneseq
        %v1297 = vshrl.u32 %v1296, 7
        %v1298 = vsub.s32 3, %v1297
        %v1299 = vrot.slane %v911, %v1298
        %v1300 = vlaneseq
        %v1301 = vshrl.u32 %v1300, 7
        %v1302 = vsub.s32 7, %v1301
        %v1303 = vrot.slane %v911, %v1302
        %v1308 = vlaneseq
        %v1309 = vshrl.u32 %v1308, 7
        %v1310 = vsub.s32 3, %v1309
        %v1311 = vrot.slane %v1291, %v1310
        %v1312 = vlaneseq
        %v1313 = vshrl.u32 %v1312, 7
        %v1314 = vsub.s32 3, %v1313
        %v1315 = vrot.slane %v1295, %v1314
        %v1316 = vlaneseq
        %v1317 = vshrl.u32 %v1316, 7
        %v1318 = vsub.s32 3, %v1317
        %v1319 = vrot.slane %v1299, %v1318
        %v1320 = vlaneseq
        %v1321 = vshrl.u32 %v1320, 7
        %v1322 = vsub.s32 3, %v1321
        %v1323 = vrot.slane %v1303, %v1322
        %v1324 = vmul.f32 %v1275, %v1244
        %v1325 = vmul.f32 %v1279, %v1245
        %v1326 = vmul.f32 %v1283, %v1246
        %v1327 = vmul.f32 %v1287, %v1247
        %v1328 = vadd.f32 %v1224, %v1324
        %v1329 = vadd.f32 %v1225, %v1325
        %v1330 = vadd.f32 %v1226, %v1326
        %v1331 = vadd.f32 %v1227, %v1327
        %v1332 = vmul.f32 %v1311, %v1248
        %v1333 = vmul.f32 %v1315, %v1249
        %v1334 = vmul.f32 %v1319, %v1250
        %v1335 = vmul.f32 %v1323, %v1251
        %v1336 = vsub.f32 %v1328, %v1332
        %v1337 = vsub.f32 %v1329, %v1333
        %v1338 = vsub.f32 %v1330, %v1334
        %v1339 = vsub.f32 %v1331, %v1335
        %v1340 = vmul.f32 %v1275, %v1248
        %v1341 = vmul.f32 %v1279, %v1249
        %v1342 = vmul.f32 %v1283, %v1250
        %v1343 = vmul.f32 %v1287, %v1251
        %v1344 = vadd.f32 %v1240, %v1340
        %v1345 = vadd.f32 %v1241, %v1341
        %v1346 = vadd.f32 %v1242, %v1342
        %v1347 = vadd.f32 %v1243, %v1343
        %v1348 = vmul.f32 %v1311, %v1244
        %v1349 = vmul.f32 %v1315, %v1245
        %v1350 = vmul.f32 %v1319, %v1246
        %v1351 = vmul.f32 %v1323, %v1247
        %v1352 = vadd.f32 %v1344, %v1348
        %v1353 = vadd.f32 %v1345, %v1349
        %v1354 = vadd.f32 %v1346, %v1350
        %v1355 = vadd.f32 %v1347, %v1351
        %s1356 = scalar_lea.vmem %s431, 32 [#allocation6]
        %1357 = vst [vmem:[%s1356] sm:$0xff] %v1336
        %1358 = vst [vmem:[%s1356 + $0x8] sm:$0xff] %v1337
        %1359 = vst [vmem:[%s1356 + $0x10] sm:$0xff] %v1338
        %1360 = vst [vmem:[%s1356 + $0x18] sm:$0xff] %v1339
        %s1361 = scalar_lea.vmem %s437, 32 [#allocation7]
        %1362 = vst [vmem:[%s1361] sm:$0xff] %v1352
        %1363 = vst [vmem:[%s1361 + $0x8] sm:$0xff] %v1353
        %1364 = vst [vmem:[%s1361 + $0x10] sm:$0xff] %v1354
        %1365 = vst [vmem:[%s1361 + $0x18] sm:$0xff] %v1355
        %s1366 = sand.u32 %s129, 1
        %s1367 = sand.u32 %s129, 1
        %s1368 = smul.addr %s1367, 64
        %s1369 = scalar_lea.vmem [#allocation6], %s1368
        %s1370 = sand.u32 %s155, 1
        %s1371 = sand.u32 %s155, 1
        %s1372 = smul.addr %s1371, 64
        %s1373 = scalar_lea.vmem [#allocation7], %s1372
        // Predicated region
        $region129: #{fft_conv_forward.1} parent=111 // pred_check
          %p1374 = pneg %p139
        $region130: #{fft_conv_forward.1} parent=111 // pred_check_branch
          %1376 = sbr.rel (%p1374) target = $region132
        $region131: #{fft_conv_forward.1} parent=111 // pred_region
          %s1377 = smul.u32 4, %s17
          %s1378 = smul.addr %s1377, 8
          %s1379 = scalar_lea.vmem %s4, %s1378
          // Predicated region
          $region133: #{fft_conv_forward.1} parent=131 // pred_check
            _
          $region134: #{fft_conv_forward.1} parent=131 // pred_check_branch
            %1381 = sbr.rel (0) target = $region136
          $region135: #{fft_conv_forward.1} parent=131 // pred_region
            // Predicated region
            $region137: #{fft_conv_forward.1} parent=135 // pred_check
              _
            $region138: #{fft_conv_forward.1} parent=135 // pred_check_branch
              %1383 = sbr.rel (0) target = $region140
            $region139: #{fft_conv_forward.1} parent=135 // pred_region
              loop: start=0, step=1, limit=1
              $region141: #{fft_conv_forward.1} parent=139 // loop_pre_header
                _
              $region142: #{fft_conv_forward.1} parent=139 // loop_header
                %s1385 = sphi 0, %s1389
                %p1386 = scmp.ge.s32.totalorder %s1385, 1
                %s1390 = sphi %s1369, %s1369
                %s1391 = sphi %s1379, %s1379
              $region143: #{fft_conv_forward.1} parent=139 // loop_header_branch
                %1388 = sbr.rel (%p1386) target = $region147
              $region144: #{fft_conv_forward.1} parent=139 // loop_body
                %v1392 = vld [vmem:[%s1390] sm:$0xff]
                %1393 = vst [vmem:[%s1391] sm:$0xff] %v1392
                %v1394 = vld [vmem:[%s1390 + $0x8] sm:$0xff]
                %1395 = vst [vmem:[%s1391 + $0x8] sm:$0xff] %v1394
                %v1396 = vld [vmem:[%s1390 + $0x10] sm:$0xff]
                %1397 = vst [vmem:[%s1391 + $0x10] sm:$0xff] %v1396
                %v1398 = vld [vmem:[%s1390 + $0x18] sm:$0xff]
                %1399 = vst [vmem:[%s1391 + $0x18] sm:$0xff] %v1398
                %v1400 = vld [vmem:[%s1390 + $0x20] sm:$0xff]
                %1401 = vst [vmem:[%s1391 + $0xa0] sm:$0xff] %v1400
                %v1402 = vld [vmem:[%s1390 + $0x28] sm:$0xff]
                %1403 = vst [vmem:[%s1391 + $0xa8] sm:$0xff] %v1402
                %v1404 = vld [vmem:[%s1390 + $0x30] sm:$0xff]
                %1405 = vst [vmem:[%s1391 + $0xb0] sm:$0xff] %v1404
                %v1406 = vld [vmem:[%s1390 + $0x38] sm:$0xff]
                %1407 = vst [vmem:[%s1391 + $0xb8] sm:$0xff] %v1406
              $region145: #{fft_conv_forward.1} parent=139 // loop_footer
                %s1389 = sadd.s32 1, %s1385
              $region146: #{fft_conv_forward.1} parent=139 // loop_footer_branch
                %1384 = sbr.rel target = $region142
              $region147: #{fft_conv_forward.1} parent=139 // loop_exit
                _
            $region140: #{fft_conv_forward.1} parent=135 // pred_fallthru
              _
            // Predicated region
            $region148: #{fft_conv_forward.1} parent=135 // pred_check
              _
            $region149: #{fft_conv_forward.1} parent=135 // pred_check_branch
              %1409 = sbr.rel target = $region151
            $region150: #{fft_conv_forward.1} parent=135 // pred_region
              _
            $region151: #{fft_conv_forward.1} parent=135 // pred_fallthru
              _
          $region136: #{fft_conv_forward.1} parent=131 // pred_fallthru
            _
          %1410 = vnop
        $region132: #{fft_conv_forward.1} parent=111 // pred_fallthru
          _
        // Predicated region
        $region152: #{fft_conv_forward.1} parent=111 // pred_check
          %p1411 = pneg %p165
        $region153: #{fft_conv_forward.1} parent=111 // pred_check_branch
          %1413 = sbr.rel (%p1411) target = $region155
        $region154: #{fft_conv_forward.1} parent=111 // pred_region
          %s1414 = smul.u32 4, %s17
          %s1415 = smul.addr %s1414, 8
          %s1416 = scalar_lea.vmem %s5, %s1415
          // Predicated region
          $region156: #{fft_conv_forward.1} parent=154 // pred_check
            _
          $region157: #{fft_conv_forward.1} parent=154 // pred_check_branch
            %1418 = sbr.rel (0) target = $region159
          $region158: #{fft_conv_forward.1} parent=154 // pred_region
            // Predicated region
            $region160: #{fft_conv_forward.1} parent=158 // pred_check
              _
            $region161: #{fft_conv_forward.1} parent=158 // pred_check_branch
              %1420 = sbr.rel (0) target = $region163
            $region162: #{fft_conv_forward.1} parent=158 // pred_region
              loop: start=0, step=1, limit=1
              $region164: #{fft_conv_forward.1} parent=162 // loop_pre_header
                _
              $region165: #{fft_conv_forward.1} parent=162 // loop_header
                %s1422 = sphi 0, %s1426
                %p1423 = scmp.ge.s32.totalorder %s1422, 1
                %s1427 = sphi %s1373, %s1373
                %s1428 = sphi %s1416, %s1416
              $region166: #{fft_conv_forward.1} parent=162 // loop_header_branch
                %1425 = sbr.rel (%p1423) target = $region170
              $region167: #{fft_conv_forward.1} parent=162 // loop_body
                %v1429 = vld [vmem:[%s1427] sm:$0xff]
                %1430 = vst [vmem:[%s1428] sm:$0xff] %v1429
                %v1431 = vld [vmem:[%s1427 + $0x8] sm:$0xff]
                %1432 = vst [vmem:[%s1428 + $0x8] sm:$0xff] %v1431
                %v1433 = vld [vmem:[%s1427 + $0x10] sm:$0xff]
                %1434 = vst [vmem:[%s1428 + $0x10] sm:$0xff] %v1433
                %v1435 = vld [vmem:[%s1427 + $0x18] sm:$0xff]
                %1436 = vst [vmem:[%s1428 + $0x18] sm:$0xff] %v1435
                %v1437 = vld [vmem:[%s1427 + $0x20] sm:$0xff]
                %1438 = vst [vmem:[%s1428 + $0xa0] sm:$0xff] %v1437
                %v1439 = vld [vmem:[%s1427 + $0x28] sm:$0xff]
                %1440 = vst [vmem:[%s1428 + $0xa8] sm:$0xff] %v1439
                %v1441 = vld [vmem:[%s1427 + $0x30] sm:$0xff]
                %1442 = vst [vmem:[%s1428 + $0xb0] sm:$0xff] %v1441
                %v1443 = vld [vmem:[%s1427 + $0x38] sm:$0xff]
                %1444 = vst [vmem:[%s1428 + $0xb8] sm:$0xff] %v1443
              $region168: #{fft_conv_forward.1} parent=162 // loop_footer
                %s1426 = sadd.s32 1, %s1422
              $region169: #{fft_conv_forward.1} parent=162 // loop_footer_branch
                %1421 = sbr.rel target = $region165
              $region170: #{fft_conv_forward.1} parent=162 // loop_exit
                _
            $region163: #{fft_conv_forward.1} parent=158 // pred_fallthru
              _
            // Predicated region
            $region171: #{fft_conv_forward.1} parent=158 // pred_check
              _
            $region172: #{fft_conv_forward.1} parent=158 // pred_check_branch
              %1446 = sbr.rel target = $region174
            $region173: #{fft_conv_forward.1} parent=158 // pred_region
              _
            $region174: #{fft_conv_forward.1} parent=158 // pred_fallthru
              _
          $region159: #{fft_conv_forward.1} parent=154 // pred_fallthru
            _
          %1447 = vnop
        $region155: #{fft_conv_forward.1} parent=111 // pred_fallthru
          _
      $region112: #{fft_conv_forward.1} parent=5 // pred_fallthru
        _
      %p1448 = scmp.le.s32.totalorder 2, %s12
      // Predicated region
      $region175: #{fft_conv_forward.1} parent=5 // pred_check
        %p1449 = pneg %p1448
      $region176: #{fft_conv_forward.1} parent=5 // pred_check_branch
        %1451 = sbr.rel (%p1449) target = $region178
      $region177: #{fft_conv_forward.1} parent=5 // pred_region
        %s1452 = ssub.s32 %s12, 2
        // Predicated region
        $region179: #{fft_conv_forward.1} parent=177 // pred_check
          %p1453 = pneg %p145
        $region180: #{fft_conv_forward.1} parent=177 // pred_check_branch
          %1455 = sbr.rel (%p1453) target = $region182
        $region181: #{fft_conv_forward.1} parent=177 // pred_region
          %s1456 = sand.u32 %s130, 1
          %s1457 = sand.u32 %s130, 1
          %s1458 = smul.addr %s1457, 64
          %s1459 = scalar_lea.vmem [#allocation6], %s1458
        $region182: #{fft_conv_forward.1} parent=177 // pred_fallthru
          _
        // Predicated region
        $region183: #{fft_conv_forward.1} parent=177 // pred_check
          %p1460 = pneg %p171
        $region184: #{fft_conv_forward.1} parent=177 // pred_check_branch
          %1462 = sbr.rel (%p1460) target = $region186
        $region185: #{fft_conv_forward.1} parent=177 // pred_region
          %s1463 = sand.u32 %s156, 1
          %s1464 = sand.u32 %s156, 1
          %s1465 = smul.addr %s1464, 64
          %s1466 = scalar_lea.vmem [#allocation7], %s1465
        $region186: #{fft_conv_forward.1} parent=177 // pred_fallthru
          _
      $region178: #{fft_conv_forward.1} parent=5 // pred_fallthru
        _
    $region6: #{fft_conv_forward.1} parent=1 // loop_footer
      %s16 = sadd.s32 1, %s12
    $region7: #{fft_conv_forward.1} parent=1 // loop_footer_branch
      %11 = sbr.rel target = $region3
    $region8: #{fft_conv_forward.1} parent=1 // loop_exit
      _

// kernel: reverse.0
$region0: #{reverse.0}
  %s0 = inlined_call_operand.vmem [shape: f32[2,8,64,31], index: 0, kind: input, shape index: {}]
  %s1 = inlined_call_operand.vmem [shape: f32[2,8,64,31], index: 1, kind: output, shape index: {}]
  $region1: #{reverse.0} parent=0
    #allocation0 [shape = 'u8[327680]{0}', space=vmem, size = 0x50000, scoped, tag = 'operand span for operand 0']
    #allocation1 [shape = 'u8[262144]{0}', space=vmem, size = 0x40000, scoped, tag = 'operand span for operand 1']
    %s2 = scalar_lea.vmem [#allocation0], 8
    // Predicated region
    $region2: #{reverse.0} parent=1 // pred_check
      _
    $region3: #{reverse.0} parent=1 // pred_check_branch
      %4 = sbr.rel (0) target = $region5
    $region4: #{reverse.0} parent=1 // pred_region
      // Predicated region
      $region6: #{reverse.0} parent=4 // pred_check
        _
      $region7: #{reverse.0} parent=4 // pred_check_branch
        %6 = sbr.rel (0) target = $region9
      $region8: #{reverse.0} parent=4 // pred_region
        // Predicated region
        $region21: #{reverse.0} parent=8 // pred_check
          _
        $region22: #{reverse.0} parent=8 // pred_check_branch
          %147 = sbr.rel (0) target = $region24
        $region23: #{reverse.0} parent=8 // pred_region
          loop: start=0, step=1, limit=1
          $region25: #{reverse.0} parent=23 // loop_pre_header
            _
          $region26: #{reverse.0} parent=23 // loop_header
            %s149 = sphi 0, %s153
            %p150 = scmp.ge.s32.totalorder %s149, 1
            %s154 = sphi %s0, %s0
            %s155 = sphi %s2, %s2
          $region27: #{reverse.0} parent=23 // loop_header_branch
            %152 = sbr.rel (%p150) target = $region31
          $region28: #{reverse.0} parent=23 // loop_body
            %v156 = vld [vmem:[%s154] sm:$0xff]
            %157 = vst [vmem:[%s155] sm:$0xff] %v156
            %v158 = vld [vmem:[%s154 + $0x8] sm:$0xff]
            %159 = vst [vmem:[%s155 + $0x8] sm:$0xff] %v158
            %v160 = vld [vmem:[%s154 + $0x10] sm:$0xff]
            %161 = vst [vmem:[%s155 + $0x10] sm:$0xff] %v160
            %v162 = vld [vmem:[%s154 + $0x18] sm:$0xff]
            %163 = vst [vmem:[%s155 + $0x18] sm:$0xff] %v162
            %v164 = vld [vmem:[%s154 + $0x20] sm:$0xff]
            %165 = vst [vmem:[%s155 + $0x28] sm:$0xff] %v164
            %v166 = vld [vmem:[%s154 + $0x28] sm:$0xff]
            %167 = vst [vmem:[%s155 + $0x30] sm:$0xff] %v166
            %v168 = vld [vmem:[%s154 + $0x30] sm:$0xff]
            %169 = vst [vmem:[%s155 + $0x38] sm:$0xff] %v168
            %v170 = vld [vmem:[%s154 + $0x38] sm:$0xff]
            %171 = vst [vmem:[%s155 + $0x40] sm:$0xff] %v170
            %v172 = vld [vmem:[%s154 + $0x40] sm:$0xff]
            %173 = vst [vmem:[%s155 + $0x50] sm:$0xff] %v172
            %v174 = vld [vmem:[%s154 + $0x48] sm:$0xff]
            %175 = vst [vmem:[%s155 + $0x58] sm:$0xff] %v174
            %v176 = vld [vmem:[%s154 + $0x50] sm:$0xff]
            %177 = vst [vmem:[%s155 + $0x60] sm:$0xff] %v176
            %v178 = vld [vmem:[%s154 + $0x58] sm:$0xff]
            %179 = vst [vmem:[%s155 + $0x68] sm:$0xff] %v178
            %v180 = vld [vmem:[%s154 + $0x60] sm:$0xff]
            %181 = vst [vmem:[%s155 + $0x78] sm:$0xff] %v180
            %v182 = vld [vmem:[%s154 + $0x68] sm:$0xff]
            %183 = vst [vmem:[%s155 + $0x80] sm:$0xff] %v182
            %v184 = vld [vmem:[%s154 + $0x70] sm:$0xff]
            %185 = vst [vmem:[%s155 + $0x88] sm:$0xff] %v184
            %v186 = vld [vmem:[%s154 + $0x78] sm:$0xff]
            %187 = vst [vmem:[%s155 + $0x90] sm:$0xff] %v186
            %v188 = vld [vmem:[%s154 + $0x80] sm:$0xff]
            %189 = vst [vmem:[%s155 + $0xa0] sm:$0xff] %v188
            %v190 = vld [vmem:[%s154 + $0x88] sm:$0xff]
            %191 = vst [vmem:[%s155 + $0xa8] sm:$0xff] %v190
            %v192 = vld [vmem:[%s154 + $0x90] sm:$0xff]
            %193 = vst [vmem:[%s155 + $0xb0] sm:$0xff] %v192
            %v194 = vld [vmem:[%s154 + $0x98] sm:$0xff]
            %195 = vst [vmem:[%s155 + $0xb8] sm:$0xff] %v194
            %v196 = vld [vmem:[%s154 + $0xa0] sm:$0xff]
            %197 = vst [vmem:[%s155 + $0xc8] sm:$0xff] %v196
            %v198 = vld [vmem:[%s154 + $0xa8] sm:$0xff]
            %199 = vst [vmem:[%s155 + $0xd0] sm:$0xff] %v198
            %v200 = vld [vmem:[%s154 + $0xb0] sm:$0xff]
            %201 = vst [vmem:[%s155 + $0xd8] sm:$0xff] %v200
            %v202 = vld [vmem:[%s154 + $0xb8] sm:$0xff]
            %203 = vst [vmem:[%s155 + $0xe0] sm:$0xff] %v202
            %v204 = vld [vmem:[%s154 + $0xc0] sm:$0xff]
            %205 = vst [vmem:[%s155 + $0xf0] sm:$0xff] %v204
            %v206 = vld [vmem:[%s154 + $0xc8] sm:$0xff]
            %207 = vst [vmem:[%s155 + $0xf8] sm:$0xff] %v206
            %v208 = vld [vmem:[%s154 + $0xd0] sm:$0xff]
            %209 = vst [vmem:[%s155 + $0x100] sm:$0xff] %v208
            %v210 = vld [vmem:[%s154 + $0xd8] sm:$0xff]
            %211 = vst [vmem:[%s155 + $0x108] sm:$0xff] %v210
            %v212 = vld [vmem:[%s154 + $0xe0] sm:$0xff]
            %213 = vst [vmem:[%s155 + $0x118] sm:$0xff] %v212
            %v214 = vld [vmem:[%s154 + $0xe8] sm:$0xff]
            %215 = vst [vmem:[%s155 + $0x120] sm:$0xff] %v214
            %v216 = vld [vmem:[%s154 + $0xf0] sm:$0xff]
            %217 = vst [vmem:[%s155 + $0x128] sm:$0xff] %v216
            %v218 = vld [vmem:[%s154 + $0xf8] sm:$0xff]
            %219 = vst [vmem:[%s155 + $0x130] sm:$0xff] %v218
            %v220 = vld [vmem:[%s154 + $0x100] sm:$0xff]
            %221 = vst [vmem:[%s155 + $0x140] sm:$0xff] %v220
            %v222 = vld [vmem:[%s154 + $0x108] sm:$0xff]
            %223 = vst [vmem:[%s155 + $0x148] sm:$0xff] %v222
            %v224 = vld [vmem:[%s154 + $0x110] sm:$0xff]
            %225 = vst [vmem:[%s155 + $0x150] sm:$0xff] %v224
            %v226 = vld [vmem:[%s154 + $0x118] sm:$0xff]
            %227 = vst [vmem:[%s155 + $0x158] sm:$0xff] %v226
            %v228 = vld [vmem:[%s154 + $0x120] sm:$0xff]
            %229 = vst [vmem:[%s155 + $0x168] sm:$0xff] %v228
            %v230 = vld [vmem:[%s154 + $0x128] sm:$0xff]
            %231 = vst [vmem:[%s155 + $0x170] sm:$0xff] %v230
            %v232 = vld [vmem:[%s154 + $0x130] sm:$0xff]
            %233 = vst [vmem:[%s155 + $0x178] sm:$0xff] %v232
            %v234 = vld [vmem:[%s154 + $0x138] sm:$0xff]
            %235 = vst [vmem:[%s155 + $0x180] sm:$0xff] %v234
            %v236 = vld [vmem:[%s154 + $0x140] sm:$0xff]
            %237 = vst [vmem:[%s155 + $0x190] sm:$0xff] %v236
            %v238 = vld [vmem:[%s154 + $0x148] sm:$0xff]
            %239 = vst [vmem:[%s155 + $0x198] sm:$0xff] %v238
            %v240 = vld [vmem:[%s154 + $0x150] sm:$0xff]
            %241 = vst [vmem:[%s155 + $0x1a0] sm:$0xff] %v240
            %v242 = vld [vmem:[%s154 + $0x158] sm:$0xff]
            %243 = vst [vmem:[%s155 + $0x1a8] sm:$0xff] %v242
            %v244 = vld [vmem:[%s154 + $0x160] sm:$0xff]
            %245 = vst [vmem:[%s155 + $0x1b8] sm:$0xff] %v244
            %v246 = vld [vmem:[%s154 + $0x168] sm:$0xff]
            %247 = vst [vmem:[%s155 + $0x1c0] sm:$0xff] %v246
            %v248 = vld [vmem:[%s154 + $0x170] sm:$0xff]
            %249 = vst [vmem:[%s155 + $0x1c8] sm:$0xff] %v248
            %v250 = vld [vmem:[%s154 + $0x178] sm:$0xff]
            %251 = vst [vmem:[%s155 + $0x1d0] sm:$0xff] %v250
            %v252 = vld [vmem:[%s154 + $0x180] sm:$0xff]
            %253 = vst [vmem:[%s155 + $0x1e0] sm:$0xff] %v252
            %v254 = vld [vmem:[%s154 + $0x188] sm:$0xff]
            %255 = vst [vmem:[%s155 + $0x1e8] sm:$0xff] %v254
            %v256 = vld [vmem:[%s154 + $0x190] sm:$0xff]
            %257 = vst [vmem:[%s155 + $0x1f0] sm:$0xff] %v256
            %v258 = vld [vmem:[%s154 + $0x198] sm:$0xff]
            %259 = vst [vmem:[%s155 + $0x1f8] sm:$0xff] %v258
            %v260 = vld [vmem:[%s154 + $0x1a0] sm:$0xff]
            %261 = vst [vmem:[%s155 + $0x208] sm:$0xff] %v260
            %v262 = vld [vmem:[%s154 + $0x1a8] sm:$0xff]
            %263 = vst [vmem:[%s155 + $0x210] sm:$0xff] %v262
            %v264 = vld [vmem:[%s154 + $0x1b0] sm:$0xff]
            %265 = vst [vmem:[%s155 + $0x218] sm:$0xff] %v264
            %v266 = vld [vmem:[%s154 + $0x1b8] sm:$0xff]
            %267 = vst [vmem:[%s155 + $0x220] sm:$0xff] %v266
            %v268 = vld [vmem:[%s154 + $0x1c0] sm:$0xff]
            %269 = vst [vmem:[%s155 + $0x230] sm:$0xff] %v268
            %v270 = vld [vmem:[%s154 + $0x1c8] sm:$0xff]
            %271 = vst [vmem:[%s155 + $0x238] sm:$0xff] %v270
            %v272 = vld [vmem:[%s154 + $0x1d0] sm:$0xff]
            %273 = vst [vmem:[%s155 + $0x240] sm:$0xff] %v272
            %v274 = vld [vmem:[%s154 + $0x1d8] sm:$0xff]
            %275 = vst [vmem:[%s155 + $0x248] sm:$0xff] %v274
            %v276 = vld [vmem:[%s154 + $0x1e0] sm:$0xff]
            %277 = vst [vmem:[%s155 + $0x258] sm:$0xff] %v276
            %v278 = vld [vmem:[%s154 + $0x1e8] sm:$0xff]
            %279 = vst [vmem:[%s155 + $0x260] sm:$0xff] %v278
            %v280 = vld [vmem:[%s154 + $0x1f0] sm:$0xff]
            %281 = vst [vmem:[%s155 + $0x268] sm:$0xff] %v280
            %v282 = vld [vmem:[%s154 + $0x1f8] sm:$0xff]
            %283 = vst [vmem:[%s155 + $0x270] sm:$0xff] %v282
          $region29: #{reverse.0} parent=23 // loop_footer
            %s153 = sadd.s32 1, %s149
          $region30: #{reverse.0} parent=23 // loop_footer_branch
            %148 = sbr.rel target = $region26
          $region31: #{reverse.0} parent=23 // loop_exit
            _
        $region24: #{reverse.0} parent=8 // pred_fallthru
          _
        // Predicated region
        $region32: #{reverse.0} parent=8 // pred_check
          _
        $region33: #{reverse.0} parent=8 // pred_check_branch
          %285 = sbr.rel target = $region35
        $region34: #{reverse.0} parent=8 // pred_region
          _
        $region35: #{reverse.0} parent=8 // pred_fallthru
          _
      $region9: #{reverse.0} parent=4 // pred_fallthru
        _
      // Predicated region
      $region10: #{reverse.0} parent=4 // pred_check
        _
      $region11: #{reverse.0} parent=4 // pred_check_branch
        %8 = sbr.rel target = $region13
      $region12: #{reverse.0} parent=4 // pred_region
        loop: start=0, step=1, limit=1
        $region14: #{reverse.0} parent=12 // loop_pre_header
          _
        $region15: #{reverse.0} parent=12 // loop_header
          %s11 = sphi 0, %s15
          %p12 = scmp.ge.s32.totalorder %s11, 1
          %s16 = sphi %s0, %s0
          %s17 = sphi %s2, %s2
        $region16: #{reverse.0} parent=12 // loop_header_branch
          %14 = sbr.rel (%p12) target = $region20
        $region17: #{reverse.0} parent=12 // loop_body
          %v18 = vld [vmem:[%s16] sm:$0xff]
          %19 = vst [vmem:[%s17] sm:$0xff] %v18
          %v20 = vld [vmem:[%s16 + $0x8] sm:$0xff]
          %21 = vst [vmem:[%s17 + $0x8] sm:$0xff] %v20
          %v22 = vld [vmem:[%s16 + $0x10] sm:$0xff]
          %23 = vst [vmem:[%s17 + $0x10] sm:$0xff] %v22
          %v24 = vld [vmem:[%s16 + $0x18] sm:$0xff]
          %25 = vst [vmem:[%s17 + $0x18] sm:$0xff] %v24
          %v26 = vld [vmem:[%s16 + $0x20] sm:$0xff]
          %27 = vst [vmem:[%s17 + $0x28] sm:$0xff] %v26
          %v28 = vld [vmem:[%s16 + $0x28] sm:$0xff]
          %29 = vst [vmem:[%s17 + $0x30] sm:$0xff] %v28
          %v30 = vld [vmem:[%s16 + $0x30] sm:$0xff]
          %31 = vst [vmem:[%s17 + $0x38] sm:$0xff] %v30
          %v32 = vld [vmem:[%s16 + $0x38] sm:$0xff]
          %33 = vst [vmem:[%s17 + $0x40] sm:$0xff] %v32
          %v34 = vld [vmem:[%s16 + $0x40] sm:$0xff]
          %35 = vst [vmem:[%s17 + $0x50] sm:$0xff] %v34
          %v36 = vld [vmem:[%s16 + $0x48] sm:$0xff]
          %37 = vst [vmem:[%s17 + $0x58] sm:$0xff] %v36
          %v38 = vld [vmem:[%s16 + $0x50] sm:$0xff]
          %39 = vst [vmem:[%s17 + $0x60] sm:$0xff] %v38
          %v40 = vld [vmem:[%s16 + $0x58] sm:$0xff]
          %41 = vst [vmem:[%s17 + $0x68] sm:$0xff] %v40
          %v42 = vld [vmem:[%s16 + $0x60] sm:$0xff]
          %43 = vst [vmem:[%s17 + $0x78] sm:$0xff] %v42
          %v44 = vld [vmem:[%s16 + $0x68] sm:$0xff]
          %45 = vst [vmem:[%s17 + $0x80] sm:$0xff] %v44
          %v46 = vld [vmem:[%s16 + $0x70] sm:$0xff]
          %47 = vst [vmem:[%s17 + $0x88] sm:$0xff] %v46
          %v48 = vld [vmem:[%s16 + $0x78] sm:$0xff]
          %49 = vst [vmem:[%s17 + $0x90] sm:$0xff] %v48
          %v50 = vld [vmem:[%s16 + $0x80] sm:$0xff]
          %51 = vst [vmem:[%s17 + $0xa0] sm:$0xff] %v50
          %v52 = vld [vmem:[%s16 + $0x88] sm:$0xff]
          %53 = vst [vmem:[%s17 + $0xa8] sm:$0xff] %v52
          %v54 = vld [vmem:[%s16 + $0x90] sm:$0xff]
          %55 = vst [vmem:[%s17 + $0xb0] sm:$0xff] %v54
          %v56 = vld [vmem:[%s16 + $0x98] sm:$0xff]
          %57 = vst [vmem:[%s17 + $0xb8] sm:$0xff] %v56
          %v58 = vld [vmem:[%s16 + $0xa0] sm:$0xff]
          %59 = vst [vmem:[%s17 + $0xc8] sm:$0xff] %v58
          %v60 = vld [vmem:[%s16 + $0xa8] sm:$0xff]
          %61 = vst [vmem:[%s17 + $0xd0] sm:$0xff] %v60
          %v62 = vld [vmem:[%s16 + $0xb0] sm:$0xff]
          %63 = vst [vmem:[%s17 + $0xd8] sm:$0xff] %v62
          %v64 = vld [vmem:[%s16 + $0xb8] sm:$0xff]
          %65 = vst [vmem:[%s17 + $0xe0] sm:$0xff] %v64
          %v66 = vld [vmem:[%s16 + $0xc0] sm:$0xff]
          %67 = vst [vmem:[%s17 + $0xf0] sm:$0xff] %v66
          %v68 = vld [vmem:[%s16 + $0xc8] sm:$0xff]
          %69 = vst [vmem:[%s17 + $0xf8] sm:$0xff] %v68
          %v70 = vld [vmem:[%s16 + $0xd0] sm:$0xff]
          %71 = vst [vmem:[%s17 + $0x100] sm:$0xff] %v70
          %v72 = vld [vmem:[%s16 + $0xd8] sm:$0xff]
          %73 = vst [vmem:[%s17 + $0x108] sm:$0xff] %v72
          %v74 = vld [vmem:[%s16 + $0xe0] sm:$0xff]
          %75 = vst [vmem:[%s17 + $0x118] sm:$0xff] %v74
          %v76 = vld [vmem:[%s16 + $0xe8] sm:$0xff]
          %77 = vst [vmem:[%s17 + $0x120] sm:$0xff] %v76
          %v78 = vld [vmem:[%s16 + $0xf0] sm:$0xff]
          %79 = vst [vmem:[%s17 + $0x128] sm:$0xff] %v78
          %v80 = vld [vmem:[%s16 + $0xf8] sm:$0xff]
          %81 = vst [vmem:[%s17 + $0x130] sm:$0xff] %v80
          %v82 = vld [vmem:[%s16 + $0x100] sm:$0xff]
          %83 = vst [vmem:[%s17 + $0x140] sm:$0xff] %v82
          %v84 = vld [vmem:[%s16 + $0x108] sm:$0xff]
          %85 = vst [vmem:[%s17 + $0x148] sm:$0xff] %v84
          %v86 = vld [vmem:[%s16 + $0x110] sm:$0xff]
          %87 = vst [vmem:[%s17 + $0x150] sm:$0xff] %v86
          %v88 = vld [vmem:[%s16 + $0x118] sm:$0xff]
          %89 = vst [vmem:[%s17 + $0x158] sm:$0xff] %v88
          %v90 = vld [vmem:[%s16 + $0x120] sm:$0xff]
          %91 = vst [vmem:[%s17 + $0x168] sm:$0xff] %v90
          %v92 = vld [vmem:[%s16 + $0x128] sm:$0xff]
          %93 = vst [vmem:[%s17 + $0x170] sm:$0xff] %v92
          %v94 = vld [vmem:[%s16 + $0x130] sm:$0xff]
          %95 = vst [vmem:[%s17 + $0x178] sm:$0xff] %v94
          %v96 = vld [vmem:[%s16 + $0x138] sm:$0xff]
          %97 = vst [vmem:[%s17 + $0x180] sm:$0xff] %v96
          %v98 = vld [vmem:[%s16 + $0x140] sm:$0xff]
          %99 = vst [vmem:[%s17 + $0x190] sm:$0xff] %v98
          %v100 = vld [vmem:[%s16 + $0x148] sm:$0xff]
          %101 = vst [vmem:[%s17 + $0x198] sm:$0xff] %v100
          %v102 = vld [vmem:[%s16 + $0x150] sm:$0xff]
          %103 = vst [vmem:[%s17 + $0x1a0] sm:$0xff] %v102
          %v104 = vld [vmem:[%s16 + $0x158] sm:$0xff]
          %105 = vst [vmem:[%s17 + $0x1a8] sm:$0xff] %v104
          %v106 = vld [vmem:[%s16 + $0x160] sm:$0xff]
          %107 = vst [vmem:[%s17 + $0x1b8] sm:$0xff] %v106
          %v108 = vld [vmem:[%s16 + $0x168] sm:$0xff]
          %109 = vst [vmem:[%s17 + $0x1c0] sm:$0xff] %v108
          %v110 = vld [vmem:[%s16 + $0x170] sm:$0xff]
          %111 = vst [vmem:[%s17 + $0x1c8] sm:$0xff] %v110
          %v112 = vld [vmem:[%s16 + $0x178] sm:$0xff]
          %113 = vst [vmem:[%s17 + $0x1d0] sm:$0xff] %v112
          %v114 = vld [vmem:[%s16 + $0x180] sm:$0xff]
          %115 = vst [vmem:[%s17 + $0x1e0] sm:$0xff] %v114
          %v116 = vld [vmem:[%s16 + $0x188] sm:$0xff]
          %117 = vst [vmem:[%s17 + $0x1e8] sm:$0xff] %v116
          %v118 = vld [vmem:[%s16 + $0x190] sm:$0xff]
          %119 = vst [vmem:[%s17 + $0x1f0] sm:$0xff] %v118
          %v120 = vld [vmem:[%s16 + $0x198] sm:$0xff]
          %121 = vst [vmem:[%s17 + $0x1f8] sm:$0xff] %v120
          %v122 = vld [vmem:[%s16 + $0x1a0] sm:$0xff]
          %123 = vst [vmem:[%s17 + $0x208] sm:$0xff] %v122
          %v124 = vld [vmem:[%s16 + $0x1a8] sm:$0xff]
          %125 = vst [vmem:[%s17 + $0x210] sm:$0xff] %v124
          %v126 = vld [vmem:[%s16 + $0x1b0] sm:$0xff]
          %127 = vst [vmem:[%s17 + $0x218] sm:$0xff] %v126
          %v128 = vld [vmem:[%s16 + $0x1b8] sm:$0xff]
          %129 = vst [vmem:[%s17 + $0x220] sm:$0xff] %v128
          %v130 = vld [vmem:[%s16 + $0x1c0] sm:$0xff]
          %131 = vst [vmem:[%s17 + $0x230] sm:$0xff] %v130
          %v132 = vld [vmem:[%s16 + $0x1c8] sm:$0xff]
          %133 = vst [vmem:[%s17 + $0x238] sm:$0xff] %v132
          %v134 = vld [vmem:[%s16 + $0x1d0] sm:$0xff]
          %135 = vst [vmem:[%s17 + $0x240] sm:$0xff] %v134
          %v136 = vld [vmem:[%s16 + $0x1d8] sm:$0xff]
          %137 = vst [vmem:[%s17 + $0x248] sm:$0xff] %v136
          %v138 = vld [vmem:[%s16 + $0x1e0] sm:$0xff]
          %139 = vst [vmem:[%s17 + $0x258] sm:$0xff] %v138
          %v140 = vld [vmem:[%s16 + $0x1e8] sm:$0xff]
          %141 = vst [vmem:[%s17 + $0x260] sm:$0xff] %v140
          %v142 = vld [vmem:[%s16 + $0x1f0] sm:$0xff]
          %143 = vst [vmem:[%s17 + $0x268] sm:$0xff] %v142
          %v144 = vld [vmem:[%s16 + $0x1f8] sm:$0xff]
          %145 = vst [vmem:[%s17 + $0x270] sm:$0xff] %v144
        $region18: #{reverse.0} parent=12 // loop_footer
          %s15 = sadd.s32 1, %s11
        $region19: #{reverse.0} parent=12 // loop_footer_branch
          %10 = sbr.rel target = $region15
        $region20: #{reverse.0} parent=12 // loop_exit
          _
      $region13: #{reverse.0} parent=4 // pred_fallthru
        _
    $region5: #{reverse.0} parent=1 // pred_fallthru
      _
    %286 = vnop
    %s287 = scalar_lea.vmem [#allocation0], 24
    %s288 = scalar_lea.vmem %s287, 7 [#allocation0]
    %v289 = vld [vmem:[%s288] ss:$-1 sm:$0xff]
    %v290 = vrot.slane %v289, 1
    %291 = vst [vmem:[#allocation1] sm:$0xff] %v290
    %s292 = scalar_lea.vmem [#allocation0], 32
    %s293 = scalar_lea.vmem %s292, 7 [#allocation0]
    %v294 = vld [vmem:[%s293] ss:$-1 sm:$0xff]
    %v295 = vrot.slane %v294, 1
    %v296 = vlaneseq
    %v297 = vshrl.u32 %v296, 7
    %vm298 = vcmp.lt.s32.totalorder %v297, 7
    %299 = vst.msk [vmem:[#allocation1] sm:$0xff] %vm298, %v295
    %s300 = scalar_lea.vmem [#allocation1], 8
    %s301 = scalar_lea.vmem [#allocation0], 16
    %s302 = scalar_lea.vmem %s301, 7 [#allocation0]
    %v303 = vld [vmem:[%s302] ss:$-1 sm:$0xff]
    %v304 = vrot.slane %v303, 1
    %305 = vst [vmem:[%s300] sm:$0xff] %v304
    %s306 = scalar_lea.vmem [#allocation0], 24
    %s307 = scalar_lea.vmem %s306, 7 [#allocation0]
    %v308 = vld [vmem:[%s307] ss:$-1 sm:$0xff]
    %v309 = vrot.slane %v308, 1
    %v310 = vlaneseq
    %v311 = vshrl.u32 %v310, 7
    %vm312 = vcmp.lt.s32.totalorder %v311, 7
    %313 = vst.msk [vmem:[%s300] sm:$0xff] %vm312, %v309
    %s314 = scalar_lea.vmem [#allocation1], 16
    %s315 = scalar_lea.vmem [#allocation0], 8
    %s316 = scalar_lea.vmem %s315, 7 [#allocation0]
    %v317 = vld [vmem:[%s316] ss:$-1 sm:$0xff]
    %v318 = vrot.slane %v317, 1
    %319 = vst [vmem:[%s314] sm:$0xff] %v318
    %s320 = scalar_lea.vmem [#allocation0], 16
    %s321 = scalar_lea.vmem %s320, 7 [#allocation0]
    %v322 = vld [vmem:[%s321] ss:$-1 sm:$0xff]
    %v323 = vrot.slane %v322, 1
    %v324 = vlaneseq
    %v325 = vshrl.u32 %v324, 7
    %vm326 = vcmp.lt.s32.totalorder %v325, 7
    %327 = vst.msk [vmem:[%s314] sm:$0xff] %vm326, %v323
    %s328 = scalar_lea.vmem [#allocation1], 24
    %s329 = scalar_lea.vmem [#allocation0], 7
    %v330 = vld [vmem:[%s329] ss:$-1 sm:$0xff]
    %v331 = vrot.slane %v330, 1
    %332 = vst [vmem:[%s328] sm:$0xff] %v331
    %s333 = scalar_lea.vmem [#allocation0], 8
    %s334 = scalar_lea.vmem %s333, 7 [#allocation0]
    %v335 = vld [vmem:[%s334] ss:$-1 sm:$0xff]
    %v336 = vrot.slane %v335, 1
    %v337 = vlaneseq
    %v338 = vshrl.u32 %v337, 7
    %vm339 = vcmp.lt.s32.totalorder %v338, 7
    %340 = vst.msk [vmem:[%s328] sm:$0xff] %vm339, %v336
    %s341 = scalar_lea.vmem [#allocation1], 32
    %s342 = scalar_lea.vmem [#allocation0], 40
    %s343 = scalar_lea.vmem %s342, 24 [#allocation0]
    %s344 = scalar_lea.vmem %s343, 7 [#allocation0]
    %v345 = vld [vmem:[%s344] ss:$-1 sm:$0xff]
    %v346 = vrot.slane %v345, 1
    %347 = vst [vmem:[%s341] sm:$0xff] %v346
    %s348 = scalar_lea.vmem %s342, 32 [#allocation0]
    %s349 = scalar_lea.vmem %s348, 7 [#allocation0]
    %v350 = vld [vmem:[%s349] ss:$-1 sm:$0xff]
    %v351 = vrot.slane %v350, 1
    %v352 = vlaneseq
    %v353 = vshrl.u32 %v352, 7
    %vm354 = vcmp.lt.s32.totalorder %v353, 7
    %355 = vst.msk [vmem:[%s341] sm:$0xff] %vm354, %v351
    %s356 = scalar_lea.vmem %s341, 8 [#allocation1]
    %s357 = scalar_lea.vmem %s342, 16 [#allocation0]
    %s358 = scalar_lea.vmem %s357, 7 [#allocation0]
    %v359 = vld [vmem:[%s358] ss:$-1 sm:$0xff]
    %v360 = vrot.slane %v359, 1
    %361 = vst [vmem:[%s356] sm:$0xff] %v360
    %s362 = scalar_lea.vmem %s342, 24 [#allocation0]
    %s363 = scalar_lea.vmem %s362, 7 [#allocation0]
    %v364 = vld [vmem:[%s363] ss:$-1 sm:$0xff]
    %v365 = vrot.slane %v364, 1
    %v366 = vlaneseq
    %v367 = vshrl.u32 %v366, 7
    %vm368 = vcmp.lt.s32.totalorder %v367, 7
    %369 = vst.msk [vmem:[%s356] sm:$0xff] %vm368, %v365
    %s370 = scalar_lea.vmem %s341, 16 [#allocation1]
    %s371 = scalar_lea.vmem %s342, 8 [#allocation0]
    %s372 = scalar_lea.vmem %s371, 7 [#allocation0]
    %v373 = vld [vmem:[%s372] ss:$-1 sm:$0xff]
    %v374 = vrot.slane %v373, 1
    %375 = vst [vmem:[%s370] sm:$0xff] %v374
    %s376 = scalar_lea.vmem %s342, 16 [#allocation0]
    %s377 = scalar_lea.vmem %s376, 7 [#allocation0]
    %v378 = vld [vmem:[%s377] ss:$-1 sm:$0xff]
    %v379 = vrot.slane %v378, 1
    %v380 = vlaneseq
    %v381 = vshrl.u32 %v380, 7
    %vm382 = vcmp.lt.s32.totalorder %v381, 7
    %383 = vst.msk [vmem:[%s370] sm:$0xff] %vm382, %v379
    %s384 = scalar_lea.vmem %s341, 24 [#allocation1]
    %s385 = scalar_lea.vmem %s342, 7 [#allocation0]
    %v386 = vld [vmem:[%s385] ss:$-1 sm:$0xff]
    %v387 = vrot.slane %v386, 1
    %388 = vst [vmem:[%s384] sm:$0xff] %v387
    %s389 = scalar_lea.vmem %s342, 8 [#allocation0]
    %s390 = scalar_lea.vmem %s389, 7 [#allocation0]
    %v391 = vld [vmem:[%s390] ss:$-1 sm:$0xff]
    %v392 = vrot.slane %v391, 1
    %v393 = vlaneseq
    %v394 = vshrl.u32 %v393, 7
    %vm395 = vcmp.lt.s32.totalorder %v394, 7
    %396 = vst.msk [vmem:[%s384] sm:$0xff] %vm395, %v392
    %s397 = scalar_lea.vmem [#allocation1], 64
    %s398 = scalar_lea.vmem [#allocation0], 80
    %s399 = scalar_lea.vmem %s398, 24 [#allocation0]
    %s400 = scalar_lea.vmem %s399, 7 [#allocation0]
    %v401 = vld [vmem:[%s400] ss:$-1 sm:$0xff]
    %v402 = vrot.slane %v401, 1
    %403 = vst [vmem:[%s397] sm:$0xff] %v402
    %s404 = scalar_lea.vmem %s398, 32 [#allocation0]
    %s405 = scalar_lea.vmem %s404, 7 [#allocation0]
    %v406 = vld [vmem:[%s405] ss:$-1 sm:$0xff]
    %v407 = vrot.slane %v406, 1
    %v408 = vlaneseq
    %v409 = vshrl.u32 %v408, 7
    %vm410 = vcmp.lt.s32.totalorder %v409, 7
    %411 = vst.msk [vmem:[%s397] sm:$0xff] %vm410, %v407
    %s412 = scalar_lea.vmem %s397, 8 [#allocation1]
    %s413 = scalar_lea.vmem %s398, 16 [#allocation0]
    %s414 = scalar_lea.vmem %s413, 7 [#allocation0]
    %v415 = vld [vmem:[%s414] ss:$-1 sm:$0xff]
    %v416 = vrot.slane %v415, 1
    %417 = vst [vmem:[%s412] sm:$0xff] %v416
    %s418 = scalar_lea.vmem %s398, 24 [#allocation0]
    %s419 = scalar_lea.vmem %s418, 7 [#allocation0]
    %v420 = vld [vmem:[%s419] ss:$-1 sm:$0xff]
    %v421 = vrot.slane %v420, 1
    %v422 = vlaneseq
    %v423 = vshrl.u32 %v422, 7
    %vm424 = vcmp.lt.s32.totalorder %v423, 7
    %425 = vst.msk [vmem:[%s412] sm:$0xff] %vm424, %v421
    %s426 = scalar_lea.vmem %s397, 16 [#allocation1]
    %s427 = scalar_lea.vmem %s398, 8 [#allocation0]
    %s428 = scalar_lea.vmem %s427, 7 [#allocation0]
    %v429 = vld [vmem:[%s428] ss:$-1 sm:$0xff]
    %v430 = vrot.slane %v429, 1
    %431 = vst [vmem:[%s426] sm:$0xff] %v430
    %s432 = scalar_lea.vmem %s398, 16 [#allocation0]
    %s433 = scalar_lea.vmem %s432, 7 [#allocation0]
    %v434 = vld [vmem:[%s433] ss:$-1 sm:$0xff]
    %v435 = vrot.slane %v434, 1
    %v436 = vlaneseq
    %v437 = vshrl.u32 %v436, 7
    %vm438 = vcmp.lt.s32.totalorder %v437, 7
    %439 = vst.msk [vmem:[%s426] sm:$0xff] %vm438, %v435
    %s440 = scalar_lea.vmem %s397, 24 [#allocation1]
    %s441 = scalar_lea.vmem %s398, 7 [#allocation0]
    %v442 = vld [vmem:[%s441] ss:$-1 sm:$0xff]
    %v443 = vrot.slane %v442, 1
    %444 = vst [vmem:[%s440] sm:$0xff] %v443
    %s445 = scalar_lea.vmem %s398, 8 [#allocation0]
    %s446 = scalar_lea.vmem %s445, 7 [#allocation0]
    %v447 = vld [vmem:[%s446] ss:$-1 sm:$0xff]
    %v448 = vrot.slane %v447, 1
    %v449 = vlaneseq
    %v450 = vshrl.u32 %v449, 7
    %vm451 = vcmp.lt.s32.totalorder %v450, 7
    %452 = vst.msk [vmem:[%s440] sm:$0xff] %vm451, %v448
    %s453 = scalar_lea.vmem [#allocation1], 96
    %s454 = scalar_lea.vmem [#allocation0], 120
    %s455 = scalar_lea.vmem %s454, 24 [#allocation0]
    %s456 = scalar_lea.vmem %s455, 7 [#allocation0]
    %v457 = vld [vmem:[%s456] ss:$-1 sm:$0xff]
    %v458 = vrot.slane %v457, 1
    %459 = vst [vmem:[%s453] sm:$0xff] %v458
    %s460 = scalar_lea.vmem %s454, 32 [#allocation0]
    %s461 = scalar_lea.vmem %s460, 7 [#allocation0]
    %v462 = vld [vmem:[%s461] ss:$-1 sm:$0xff]
    %v463 = vrot.slane %v462, 1
    %v464 = vlaneseq
    %v465 = vshrl.u32 %v464, 7
    %vm466 = vcmp.lt.s32.totalorder %v465, 7
    %467 = vst.msk [vmem:[%s453] sm:$0xff] %vm466, %v463
    %s468 = scalar_lea.vmem %s453, 8 [#allocation1]
    %s469 = scalar_lea.vmem %s454, 16 [#allocation0]
    %s470 = scalar_lea.vmem %s469, 7 [#allocation0]
    %v471 = vld [vmem:[%s470] ss:$-1 sm:$0xff]
    %v472 = vrot.slane %v471, 1
    %473 = vst [vmem:[%s468] sm:$0xff] %v472
    %s474 = scalar_lea.vmem %s454, 24 [#allocation0]
    %s475 = scalar_lea.vmem %s474, 7 [#allocation0]
    %v476 = vld [vmem:[%s475] ss:$-1 sm:$0xff]
    %v477 = vrot.slane %v476, 1
    %v478 = vlaneseq
    %v479 = vshrl.u32 %v478, 7
    %vm480 = vcmp.lt.s32.totalorder %v479, 7
    %481 = vst.msk [vmem:[%s468] sm:$0xff] %vm480, %v477
    %s482 = scalar_lea.vmem %s453, 16 [#allocation1]
    %s483 = scalar_lea.vmem %s454, 8 [#allocation0]
    %s484 = scalar_lea.vmem %s483, 7 [#allocation0]
    %v485 = vld [vmem:[%s484] ss:$-1 sm:$0xff]
    %v486 = vrot.slane %v485, 1
    %487 = vst [vmem:[%s482] sm:$0xff] %v486
    %s488 = scalar_lea.vmem %s454, 16 [#allocation0]
    %s489 = scalar_lea.vmem %s488, 7 [#allocation0]
    %v490 = vld [vmem:[%s489] ss:$-1 sm:$0xff]
    %v491 = vrot.slane %v490, 1
    %v492 = vlaneseq
    %v493 = vshrl.u32 %v492, 7
    %vm494 = vcmp.lt.s32.totalorder %v493, 7
    %495 = vst.msk [vmem:[%s482] sm:$0xff] %vm494, %v491
    %s496 = scalar_lea.vmem %s453, 24 [#allocation1]
    %s497 = scalar_lea.vmem %s454, 7 [#allocation0]
    %v498 = vld [vmem:[%s497] ss:$-1 sm:$0xff]
    %v499 = vrot.slane %v498, 1
    %500 = vst [vmem:[%s496] sm:$0xff] %v499
    %s501 = scalar_lea.vmem %s454, 8 [#allocation0]
    %s502 = scalar_lea.vmem %s501, 7 [#allocation0]
    %v503 = vld [vmem:[%s502] ss:$-1 sm:$0xff]
    %v504 = vrot.slane %v503, 1
    %v505 = vlaneseq
    %v506 = vshrl.u32 %v505, 7
    %vm507 = vcmp.lt.s32.totalorder %v506, 7
    %508 = vst.msk [vmem:[%s496] sm:$0xff] %vm507, %v504
    %s509 = scalar_lea.vmem [#allocation1], 128
    %s510 = scalar_lea.vmem [#allocation0], 160
    %s511 = scalar_lea.vmem %s510, 24 [#allocation0]
    %s512 = scalar_lea.vmem %s511, 7 [#allocation0]
    %v513 = vld [vmem:[%s512] ss:$-1 sm:$0xff]
    %v514 = vrot.slane %v513, 1
    %515 = vst [vmem:[%s509] sm:$0xff] %v514
    %s516 = scalar_lea.vmem %s510, 32 [#allocation0]
    %s517 = scalar_lea.vmem %s516, 7 [#allocation0]
    %v518 = vld [vmem:[%s517] ss:$-1 sm:$0xff]
    %v519 = vrot.slane %v518, 1
    %v520 = vlaneseq
    %v521 = vshrl.u32 %v520, 7
    %vm522 = vcmp.lt.s32.totalorder %v521, 7
    %523 = vst.msk [vmem:[%s509] sm:$0xff] %vm522, %v519
    %s524 = scalar_lea.vmem %s509, 8 [#allocation1]
    %s525 = scalar_lea.vmem %s510, 16 [#allocation0]
    %s526 = scalar_lea.vmem %s525, 7 [#allocation0]
    %v527 = vld [vmem:[%s526] ss:$-1 sm:$0xff]
    %v528 = vrot.slane %v527, 1
    %529 = vst [vmem:[%s524] sm:$0xff] %v528
    %s530 = scalar_lea.vmem %s510, 24 [#allocation0]
    %s531 = scalar_lea.vmem %s530, 7 [#allocation0]
    %v532 = vld [vmem:[%s531] ss:$-1 sm:$0xff]
    %v533 = vrot.slane %v532, 1
    %v534 = vlaneseq
    %v535 = vshrl.u32 %v534, 7
    %vm536 = vcmp.lt.s32.totalorder %v535, 7
    %537 = vst.msk [vmem:[%s524] sm:$0xff] %vm536, %v533
    %s538 = scalar_lea.vmem %s509, 16 [#allocation1]
    %s539 = scalar_lea.vmem %s510, 8 [#allocation0]
    %s540 = scalar_lea.vmem %s539, 7 [#allocation0]
    %v541 = vld [vmem:[%s540] ss:$-1 sm:$0xff]
    %v542 = vrot.slane %v541, 1
    %543 = vst [vmem:[%s538] sm:$0xff] %v542
    %s544 = scalar_lea.vmem %s510, 16 [#allocation0]
    %s545 = scalar_lea.vmem %s544, 7 [#allocation0]
    %v546 = vld [vmem:[%s545] ss:$-1 sm:$0xff]
    %v547 = vrot.slane %v546, 1
    %v548 = vlaneseq
    %v549 = vshrl.u32 %v548, 7
    %vm550 = vcmp.lt.s32.totalorder %v549, 7
    %551 = vst.msk [vmem:[%s538] sm:$0xff] %vm550, %v547
    %s552 = scalar_lea.vmem %s509, 24 [#allocation1]
    %s553 = scalar_lea.vmem %s510, 7 [#allocation0]
    %v554 = vld [vmem:[%s553] ss:$-1 sm:$0xff]
    %v555 = vrot.slane %v554, 1
    %556 = vst [vmem:[%s552] sm:$0xff] %v555
    %s557 = scalar_lea.vmem %s510, 8 [#allocation0]
    %s558 = scalar_lea.vmem %s557, 7 [#allocation0]
    %v559 = vld [vmem:[%s558] ss:$-1 sm:$0xff]
    %v560 = vrot.slane %v559, 1
    %v561 = vlaneseq
    %v562 = vshrl.u32 %v561, 7
    %vm563 = vcmp.lt.s32.totalorder %v562, 7
    %564 = vst.msk [vmem:[%s552] sm:$0xff] %vm563, %v560
    %s565 = scalar_lea.vmem [#allocation1], 160
    %s566 = scalar_lea.vmem [#allocation0], 200
    %s567 = scalar_lea.vmem %s566, 24 [#allocation0]
    %s568 = scalar_lea.vmem %s567, 7 [#allocation0]
    %v569 = vld [vmem:[%s568] ss:$-1 sm:$0xff]
    %v570 = vrot.slane %v569, 1
    %571 = vst [vmem:[%s565] sm:$0xff] %v570
    %s572 = scalar_lea.vmem %s566, 32 [#allocation0]
    %s573 = scalar_lea.vmem %s572, 7 [#allocation0]
    %v574 = vld [vmem:[%s573] ss:$-1 sm:$0xff]
    %v575 = vrot.slane %v574, 1
    %v576 = vlaneseq
    %v577 = vshrl.u32 %v576, 7
    %vm578 = vcmp.lt.s32.totalorder %v577, 7
    %579 = vst.msk [vmem:[%s565] sm:$0xff] %vm578, %v575
    %s580 = scalar_lea.vmem %s565, 8 [#allocation1]
    %s581 = scalar_lea.vmem %s566, 16 [#allocation0]
    %s582 = scalar_lea.vmem %s581, 7 [#allocation0]
    %v583 = vld [vmem:[%s582] ss:$-1 sm:$0xff]
    %v584 = vrot.slane %v583, 1
    %585 = vst [vmem:[%s580] sm:$0xff] %v584
    %s586 = scalar_lea.vmem %s566, 24 [#allocation0]
    %s587 = scalar_lea.vmem %s586, 7 [#allocation0]
    %v588 = vld [vmem:[%s587] ss:$-1 sm:$0xff]
    %v589 = vrot.slane %v588, 1
    %v590 = vlaneseq
    %v591 = vshrl.u32 %v590, 7
    %vm592 = vcmp.lt.s32.totalorder %v591, 7
    %593 = vst.msk [vmem:[%s580] sm:$0xff] %vm592, %v589
    %s594 = scalar_lea.vmem %s565, 16 [#allocation1]
    %s595 = scalar_lea.vmem %s566, 8 [#allocation0]
    %s596 = scalar_lea.vmem %s595, 7 [#allocation0]
    %v597 = vld [vmem:[%s596] ss:$-1 sm:$0xff]
    %v598 = vrot.slane %v597, 1
    %599 = vst [vmem:[%s594] sm:$0xff] %v598
    %s600 = scalar_lea.vmem %s566, 16 [#allocation0]
    %s601 = scalar_lea.vmem %s600, 7 [#allocation0]
    %v602 = vld [vmem:[%s601] ss:$-1 sm:$0xff]
    %v603 = vrot.slane %v602, 1
    %v604 = vlaneseq
    %v605 = vshrl.u32 %v604, 7
    %vm606 = vcmp.lt.s32.totalorder %v605, 7
    %607 = vst.msk [vmem:[%s594] sm:$0xff] %vm606, %v603
    %s608 = scalar_lea.vmem %s565, 24 [#allocation1]
    %s609 = scalar_lea.vmem %s566, 7 [#allocation0]
    %v610 = vld [vmem:[%s609] ss:$-1 sm:$0xff]
    %v611 = vrot.slane %v610, 1
    %612 = vst [vmem:[%s608] sm:$0xff] %v611
    %s613 = scalar_lea.vmem %s566, 8 [#allocation0]
    %s614 = scalar_lea.vmem %s613, 7 [#allocation0]
    %v615 = vld [vmem:[%s614] ss:$-1 sm:$0xff]
    %v616 = vrot.slane %v615, 1
    %v617 = vlaneseq
    %v618 = vshrl.u32 %v617, 7
    %vm619 = vcmp.lt.s32.totalorder %v618, 7
    %620 = vst.msk [vmem:[%s608] sm:$0xff] %vm619, %v616
    %s621 = scalar_lea.vmem [#allocation1], 192
    %s622 = scalar_lea.vmem [#allocation0], 240
    %s623 = scalar_lea.vmem %s622, 24 [#allocation0]
    %s624 = scalar_lea.vmem %s623, 7 [#allocation0]
    %v625 = vld [vmem:[%s624] ss:$-1 sm:$0xff]
    %v626 = vrot.slane %v625, 1
    %627 = vst [vmem:[%s621] sm:$0xff] %v626
    %s628 = scalar_lea.vmem %s622, 32 [#allocation0]
    %s629 = scalar_lea.vmem %s628, 7 [#allocation0]
    %v630 = vld [vmem:[%s629] ss:$-1 sm:$0xff]
    %v631 = vrot.slane %v630, 1
    %v632 = vlaneseq
    %v633 = vshrl.u32 %v632, 7
    %vm634 = vcmp.lt.s32.totalorder %v633, 7
    %635 = vst.msk [vmem:[%s621] sm:$0xff] %vm634, %v631
    %s636 = scalar_lea.vmem %s621, 8 [#allocation1]
    %s637 = scalar_lea.vmem %s622, 16 [#allocation0]
    %s638 = scalar_lea.vmem %s637, 7 [#allocation0]
    %v639 = vld [vmem:[%s638] ss:$-1 sm:$0xff]
    %v640 = vrot.slane %v639, 1
    %641 = vst [vmem:[%s636] sm:$0xff] %v640
    %s642 = scalar_lea.vmem %s622, 24 [#allocation0]
    %s643 = scalar_lea.vmem %s642, 7 [#allocation0]
    %v644 = vld [vmem:[%s643] ss:$-1 sm:$0xff]
    %v645 = vrot.slane %v644, 1
    %v646 = vlaneseq
    %v647 = vshrl.u32 %v646, 7
    %vm648 = vcmp.lt.s32.totalorder %v647, 7
    %649 = vst.msk [vmem:[%s636] sm:$0xff] %vm648, %v645
    %s650 = scalar_lea.vmem %s621, 16 [#allocation1]
    %s651 = scalar_lea.vmem %s622, 8 [#allocation0]
    %s652 = scalar_lea.vmem %s651, 7 [#allocation0]
    %v653 = vld [vmem:[%s652] ss:$-1 sm:$0xff]
    %v654 = vrot.slane %v653, 1
    %655 = vst [vmem:[%s650] sm:$0xff] %v654
    %s656 = scalar_lea.vmem %s622, 16 [#allocation0]
    %s657 = scalar_lea.vmem %s656, 7 [#allocation0]
    %v658 = vld [vmem:[%s657] ss:$-1 sm:$0xff]
    %v659 = vrot.slane %v658, 1
    %v660 = vlaneseq
    %v661 = vshrl.u32 %v660, 7
    %vm662 = vcmp.lt.s32.totalorder %v661, 7
    %663 = vst.msk [vmem:[%s650] sm:$0xff] %vm662, %v659
    %s664 = scalar_lea.vmem %s621, 24 [#allocation1]
    %s665 = scalar_lea.vmem %s622, 7 [#allocation0]
    %v666 = vld [vmem:[%s665] ss:$-1 sm:$0xff]
    %v667 = vrot.slane %v666, 1
    %668 = vst [vmem:[%s664] sm:$0xff] %v667
    %s669 = scalar_lea.vmem %s622, 8 [#allocation0]
    %s670 = scalar_lea.vmem %s669, 7 [#allocation0]
    %v671 = vld [vmem:[%s670] ss:$-1 sm:$0xff]
    %v672 = vrot.slane %v671, 1
    %v673 = vlaneseq
    %v674 = vshrl.u32 %v673, 7
    %vm675 = vcmp.lt.s32.totalorder %v674, 7
    %676 = vst.msk [vmem:[%s664] sm:$0xff] %vm675, %v672
    %s677 = scalar_lea.vmem [#allocation1], 224
    %s678 = scalar_lea.vmem [#allocation0], 280
    %s679 = scalar_lea.vmem %s678, 24 [#allocation0]
    %s680 = scalar_lea.vmem %s679, 7 [#allocation0]
    %v681 = vld [vmem:[%s680] ss:$-1 sm:$0xff]
    %v682 = vrot.slane %v681, 1
    %683 = vst [vmem:[%s677] sm:$0xff] %v682
    %s684 = scalar_lea.vmem %s678, 32 [#allocation0]
    %s685 = scalar_lea.vmem %s684, 7 [#allocation0]
    %v686 = vld [vmem:[%s685] ss:$-1 sm:$0xff]
    %v687 = vrot.slane %v686, 1
    %v688 = vlaneseq
    %v689 = vshrl.u32 %v688, 7
    %vm690 = vcmp.lt.s32.totalorder %v689, 7
    %691 = vst.msk [vmem:[%s677] sm:$0xff] %vm690, %v687
    %s692 = scalar_lea.vmem %s677, 8 [#allocation1]
    %s693 = scalar_lea.vmem %s678, 16 [#allocation0]
    %s694 = scalar_lea.vmem %s693, 7 [#allocation0]
    %v695 = vld [vmem:[%s694] ss:$-1 sm:$0xff]
    %v696 = vrot.slane %v695, 1
    %697 = vst [vmem:[%s692] sm:$0xff] %v696
    %s698 = scalar_lea.vmem %s678, 24 [#allocation0]
    %s699 = scalar_lea.vmem %s698, 7 [#allocation0]
    %v700 = vld [vmem:[%s699] ss:$-1 sm:$0xff]
    %v701 = vrot.slane %v700, 1
    %v702 = vlaneseq
    %v703 = vshrl.u32 %v702, 7
    %vm704 = vcmp.lt.s32.totalorder %v703, 7
    %705 = vst.msk [vmem:[%s692] sm:$0xff] %vm704, %v701
    %s706 = scalar_lea.vmem %s677, 16 [#allocation1]
    %s707 = scalar_lea.vmem %s678, 8 [#allocation0]
    %s708 = scalar_lea.vmem %s707, 7 [#allocation0]
    %v709 = vld [vmem:[%s708] ss:$-1 sm:$0xff]
    %v710 = vrot.slane %v709, 1
    %711 = vst [vmem:[%s706] sm:$0xff] %v710
    %s712 = scalar_lea.vmem %s678, 16 [#allocation0]
    %s713 = scalar_lea.vmem %s712, 7 [#allocation0]
    %v714 = vld [vmem:[%s713] ss:$-1 sm:$0xff]
    %v715 = vrot.slane %v714, 1
    %v716 = vlaneseq
    %v717 = vshrl.u32 %v716, 7
    %vm718 = vcmp.lt.s32.totalorder %v717, 7
    %719 = vst.msk [vmem:[%s706] sm:$0xff] %vm718, %v715
    %s720 = scalar_lea.vmem %s677, 24 [#allocation1]
    %s721 = scalar_lea.vmem %s678, 7 [#allocation0]
    %v722 = vld [vmem:[%s721] ss:$-1 sm:$0xff]
    %v723 = vrot.slane %v722, 1
    %724 = vst [vmem:[%s720] sm:$0xff] %v723
    %s725 = scalar_lea.vmem %s678, 8 [#allocation0]
    %s726 = scalar_lea.vmem %s725, 7 [#allocation0]
    %v727 = vld [vmem:[%s726] ss:$-1 sm:$0xff]
    %v728 = vrot.slane %v727, 1
    %v729 = vlaneseq
    %v730 = vshrl.u32 %v729, 7
    %vm731 = vcmp.lt.s32.totalorder %v730, 7
    %732 = vst.msk [vmem:[%s720] sm:$0xff] %vm731, %v728
    %s733 = scalar_lea.vmem [#allocation1], 256
    %s734 = scalar_lea.vmem [#allocation0], 320
    %s735 = scalar_lea.vmem %s734, 24 [#allocation0]
    %s736 = scalar_lea.vmem %s735, 7 [#allocation0]
    %v737 = vld [vmem:[%s736] ss:$-1 sm:$0xff]
    %v738 = vrot.slane %v737, 1
    %739 = vst [vmem:[%s733] sm:$0xff] %v738
    %s740 = scalar_lea.vmem %s734, 32 [#allocation0]
    %s741 = scalar_lea.vmem %s740, 7 [#allocation0]
    %v742 = vld [vmem:[%s741] ss:$-1 sm:$0xff]
    %v743 = vrot.slane %v742, 1
    %v744 = vlaneseq
    %v745 = vshrl.u32 %v744, 7
    %vm746 = vcmp.lt.s32.totalorder %v745, 7
    %747 = vst.msk [vmem:[%s733] sm:$0xff] %vm746, %v743
    %s748 = scalar_lea.vmem %s733, 8 [#allocation1]
    %s749 = scalar_lea.vmem %s734, 16 [#allocation0]
    %s750 = scalar_lea.vmem %s749, 7 [#allocation0]
    %v751 = vld [vmem:[%s750] ss:$-1 sm:$0xff]
    %v752 = vrot.slane %v751, 1
    %753 = vst [vmem:[%s748] sm:$0xff] %v752
    %s754 = scalar_lea.vmem %s734, 24 [#allocation0]
    %s755 = scalar_lea.vmem %s754, 7 [#allocation0]
    %v756 = vld [vmem:[%s755] ss:$-1 sm:$0xff]
    %v757 = vrot.slane %v756, 1
    %v758 = vlaneseq
    %v759 = vshrl.u32 %v758, 7
    %vm760 = vcmp.lt.s32.totalorder %v759, 7
    %761 = vst.msk [vmem:[%s748] sm:$0xff] %vm760, %v757
    %s762 = scalar_lea.vmem %s733, 16 [#allocation1]
    %s763 = scalar_lea.vmem %s734, 8 [#allocation0]
    %s764 = scalar_lea.vmem %s763, 7 [#allocation0]
    %v765 = vld [vmem:[%s764] ss:$-1 sm:$0xff]
    %v766 = vrot.slane %v765, 1
    %767 = vst [vmem:[%s762] sm:$0xff] %v766
    %s768 = scalar_lea.vmem %s734, 16 [#allocation0]
    %s769 = scalar_lea.vmem %s768, 7 [#allocation0]
    %v770 = vld [vmem:[%s769] ss:$-1 sm:$0xff]
    %v771 = vrot.slane %v770, 1
    %v772 = vlaneseq
    %v773 = vshrl.u32 %v772, 7
    %vm774 = vcmp.lt.s32.totalorder %v773, 7
    %775 = vst.msk [vmem:[%s762] sm:$0xff] %vm774, %v771
    %s776 = scalar_lea.vmem %s733, 24 [#allocation1]
    %s777 = scalar_lea.vmem %s734, 7 [#allocation0]
    %v778 = vld [vmem:[%s777] ss:$-1 sm:$0xff]
    %v779 = vrot.slane %v778, 1
    %780 = vst [vmem:[%s776] sm:$0xff] %v779
    %s781 = scalar_lea.vmem %s734, 8 [#allocation0]
    %s782 = scalar_lea.vmem %s781, 7 [#allocation0]
    %v783 = vld [vmem:[%s782] ss:$-1 sm:$0xff]
    %v784 = vrot.slane %v783, 1
    %v785 = vlaneseq
    %v786 = vshrl.u32 %v785, 7
    %vm787 = vcmp.lt.s32.totalorder %v786, 7
    %788 = vst.msk [vmem:[%s776] sm:$0xff] %vm787, %v784
    %s789 = scalar_lea.vmem [#allocation1], 288
    %s790 = scalar_lea.vmem [#allocation0], 360
    %s791 = scalar_lea.vmem %s790, 24 [#allocation0]
    %s792 = scalar_lea.vmem %s791, 7 [#allocation0]
    %v793 = vld [vmem:[%s792] ss:$-1 sm:$0xff]
    %v794 = vrot.slane %v793, 1
    %795 = vst [vmem:[%s789] sm:$0xff] %v794
    %s796 = scalar_lea.vmem %s790, 32 [#allocation0]
    %s797 = scalar_lea.vmem %s796, 7 [#allocation0]
    %v798 = vld [vmem:[%s797] ss:$-1 sm:$0xff]
    %v799 = vrot.slane %v798, 1
    %v800 = vlaneseq
    %v801 = vshrl.u32 %v800, 7
    %vm802 = vcmp.lt.s32.totalorder %v801, 7
    %803 = vst.msk [vmem:[%s789] sm:$0xff] %vm802, %v799
    %s804 = scalar_lea.vmem %s789, 8 [#allocation1]
    %s805 = scalar_lea.vmem %s790, 16 [#allocation0]
    %s806 = scalar_lea.vmem %s805, 7 [#allocation0]
    %v807 = vld [vmem:[%s806] ss:$-1 sm:$0xff]
    %v808 = vrot.slane %v807, 1
    %809 = vst [vmem:[%s804] sm:$0xff] %v808
    %s810 = scalar_lea.vmem %s790, 24 [#allocation0]
    %s811 = scalar_lea.vmem %s810, 7 [#allocation0]
    %v812 = vld [vmem:[%s811] ss:$-1 sm:$0xff]
    %v813 = vrot.slane %v812, 1
    %v814 = vlaneseq
    %v815 = vshrl.u32 %v814, 7
    %vm816 = vcmp.lt.s32.totalorder %v815, 7
    %817 = vst.msk [vmem:[%s804] sm:$0xff] %vm816, %v813
    %s818 = scalar_lea.vmem %s789, 16 [#allocation1]
    %s819 = scalar_lea.vmem %s790, 8 [#allocation0]
    %s820 = scalar_lea.vmem %s819, 7 [#allocation0]
    %v821 = vld [vmem:[%s820] ss:$-1 sm:$0xff]
    %v822 = vrot.slane %v821, 1
    %823 = vst [vmem:[%s818] sm:$0xff] %v822
    %s824 = scalar_lea.vmem %s790, 16 [#allocation0]
    %s825 = scalar_lea.vmem %s824, 7 [#allocation0]
    %v826 = vld [vmem:[%s825] ss:$-1 sm:$0xff]
    %v827 = vrot.slane %v826, 1
    %v828 = vlaneseq
    %v829 = vshrl.u32 %v828, 7
    %vm830 = vcmp.lt.s32.totalorder %v829, 7
    %831 = vst.msk [vmem:[%s818] sm:$0xff] %vm830, %v827
    %s832 = scalar_lea.vmem %s789, 24 [#allocation1]
    %s833 = scalar_lea.vmem %s790, 7 [#allocation0]
    %v834 = vld [vmem:[%s833] ss:$-1 sm:$0xff]
    %v835 = vrot.slane %v834, 1
    %836 = vst [vmem:[%s832] sm:$0xff] %v835
    %s837 = scalar_lea.vmem %s790, 8 [#allocation0]
    %s838 = scalar_lea.vmem %s837, 7 [#allocation0]
    %v839 = vld [vmem:[%s838] ss:$-1 sm:$0xff]
    %v840 = vrot.slane %v839, 1
    %v841 = vlaneseq
    %v842 = vshrl.u32 %v841, 7
    %vm843 = vcmp.lt.s32.totalorder %v842, 7
    %844 = vst.msk [vmem:[%s832] sm:$0xff] %vm843, %v840
    %s845 = scalar_lea.vmem [#allocation1], 320
    %s846 = scalar_lea.vmem [#allocation0], 400
    %s847 = scalar_lea.vmem %s846, 24 [#allocation0]
    %s848 = scalar_lea.vmem %s847, 7 [#allocation0]
    %v849 = vld [vmem:[%s848] ss:$-1 sm:$0xff]
    %v850 = vrot.slane %v849, 1
    %851 = vst [vmem:[%s845] sm:$0xff] %v850
    %s852 = scalar_lea.vmem %s846, 32 [#allocation0]
    %s853 = scalar_lea.vmem %s852, 7 [#allocation0]
    %v854 = vld [vmem:[%s853] ss:$-1 sm:$0xff]
    %v855 = vrot.slane %v854, 1
    %v856 = vlaneseq
    %v857 = vshrl.u32 %v856, 7
    %vm858 = vcmp.lt.s32.totalorder %v857, 7
    %859 = vst.msk [vmem:[%s845] sm:$0xff] %vm858, %v855
    %s860 = scalar_lea.vmem %s845, 8 [#allocation1]
    %s861 = scalar_lea.vmem %s846, 16 [#allocation0]
    %s862 = scalar_lea.vmem %s861, 7 [#allocation0]
    %v863 = vld [vmem:[%s862] ss:$-1 sm:$0xff]
    %v864 = vrot.slane %v863, 1
    %865 = vst [vmem:[%s860] sm:$0xff] %v864
    %s866 = scalar_lea.vmem %s846, 24 [#allocation0]
    %s867 = scalar_lea.vmem %s866, 7 [#allocation0]
    %v868 = vld [vmem:[%s867] ss:$-1 sm:$0xff]
    %v869 = vrot.slane %v868, 1
    %v870 = vlaneseq
    %v871 = vshrl.u32 %v870, 7
    %vm872 = vcmp.lt.s32.totalorder %v871, 7
    %873 = vst.msk [vmem:[%s860] sm:$0xff] %vm872, %v869
    %s874 = scalar_lea.vmem %s845, 16 [#allocation1]
    %s875 = scalar_lea.vmem %s846, 8 [#allocation0]
    %s876 = scalar_lea.vmem %s875, 7 [#allocation0]
    %v877 = vld [vmem:[%s876] ss:$-1 sm:$0xff]
    %v878 = vrot.slane %v877, 1
    %879 = vst [vmem:[%s874] sm:$0xff] %v878
    %s880 = scalar_lea.vmem %s846, 16 [#allocation0]
    %s881 = scalar_lea.vmem %s880, 7 [#allocation0]
    %v882 = vld [vmem:[%s881] ss:$-1 sm:$0xff]
    %v883 = vrot.slane %v882, 1
    %v884 = vlaneseq
    %v885 = vshrl.u32 %v884, 7
    %vm886 = vcmp.lt.s32.totalorder %v885, 7
    %887 = vst.msk [vmem:[%s874] sm:$0xff] %vm886, %v883
    %s888 = scalar_lea.vmem %s845, 24 [#allocation1]
    %s889 = scalar_lea.vmem %s846, 7 [#allocation0]
    %v890 = vld [vmem:[%s889] ss:$-1 sm:$0xff]
    %v891 = vrot.slane %v890, 1
    %892 = vst [vmem:[%s888] sm:$0xff] %v891
    %s893 = scalar_lea.vmem %s846, 8 [#allocation0]
    %s894 = scalar_lea.vmem %s893, 7 [#allocation0]
    %v895 = vld [vmem:[%s894] ss:$-1 sm:$0xff]
    %v896 = vrot.slane %v895, 1
    %v897 = vlaneseq
    %v898 = vshrl.u32 %v897, 7
    %vm899 = vcmp.lt.s32.totalorder %v898, 7
    %900 = vst.msk [vmem:[%s888] sm:$0xff] %vm899, %v896
    %s901 = scalar_lea.vmem [#allocation1], 352
    %s902 = scalar_lea.vmem [#allocation0], 440
    %s903 = scalar_lea.vmem %s902, 24 [#allocation0]
    %s904 = scalar_lea.vmem %s903, 7 [#allocation0]
    %v905 = vld [vmem:[%s904] ss:$-1 sm:$0xff]
    %v906 = vrot.slane %v905, 1
    %907 = vst [vmem:[%s901] sm:$0xff] %v906
    %s908 = scalar_lea.vmem %s902, 32 [#allocation0]
    %s909 = scalar_lea.vmem %s908, 7 [#allocation0]
    %v910 = vld [vmem:[%s909] ss:$-1 sm:$0xff]
    %v911 = vrot.slane %v910, 1
    %v912 = vlaneseq
    %v913 = vshrl.u32 %v912, 7
    %vm914 = vcmp.lt.s32.totalorder %v913, 7
    %915 = vst.msk [vmem:[%s901] sm:$0xff] %vm914, %v911
    %s916 = scalar_lea.vmem %s901, 8 [#allocation1]
    %s917 = scalar_lea.vmem %s902, 16 [#allocation0]
    %s918 = scalar_lea.vmem %s917, 7 [#allocation0]
    %v919 = vld [vmem:[%s918] ss:$-1 sm:$0xff]
    %v920 = vrot.slane %v919, 1
    %921 = vst [vmem:[%s916] sm:$0xff] %v920
    %s922 = scalar_lea.vmem %s902, 24 [#allocation0]
    %s923 = scalar_lea.vmem %s922, 7 [#allocation0]
    %v924 = vld [vmem:[%s923] ss:$-1 sm:$0xff]
    %v925 = vrot.slane %v924, 1
    %v926 = vlaneseq
    %v927 = vshrl.u32 %v926, 7
    %vm928 = vcmp.lt.s32.totalorder %v927, 7
    %929 = vst.msk [vmem:[%s916] sm:$0xff] %vm928, %v925
    %s930 = scalar_lea.vmem %s901, 16 [#allocation1]
    %s931 = scalar_lea.vmem %s902, 8 [#allocation0]
    %s932 = scalar_lea.vmem %s931, 7 [#allocation0]
    %v933 = vld [vmem:[%s932] ss:$-1 sm:$0xff]
    %v934 = vrot.slane %v933, 1
    %935 = vst [vmem:[%s930] sm:$0xff] %v934
    %s936 = scalar_lea.vmem %s902, 16 [#allocation0]
    %s937 = scalar_lea.vmem %s936, 7 [#allocation0]
    %v938 = vld [vmem:[%s937] ss:$-1 sm:$0xff]
    %v939 = vrot.slane %v938, 1
    %v940 = vlaneseq
    %v941 = vshrl.u32 %v940, 7
    %vm942 = vcmp.lt.s32.totalorder %v941, 7
    %943 = vst.msk [vmem:[%s930] sm:$0xff] %vm942, %v939
    %s944 = scalar_lea.vmem %s901, 24 [#allocation1]
    %s945 = scalar_lea.vmem %s902, 7 [#allocation0]
    %v946 = vld [vmem:[%s945] ss:$-1 sm:$0xff]
    %v947 = vrot.slane %v946, 1
    %948 = vst [vmem:[%s944] sm:$0xff] %v947
    %s949 = scalar_lea.vmem %s902, 8 [#allocation0]
    %s950 = scalar_lea.vmem %s949, 7 [#allocation0]
    %v951 = vld [vmem:[%s950] ss:$-1 sm:$0xff]
    %v952 = vrot.slane %v951, 1
    %v953 = vlaneseq
    %v954 = vshrl.u32 %v953, 7
    %vm955 = vcmp.lt.s32.totalorder %v954, 7
    %956 = vst.msk [vmem:[%s944] sm:$0xff] %vm955, %v952
    %s957 = scalar_lea.vmem [#allocation1], 384
    %s958 = scalar_lea.vmem [#allocation0], 480
    %s959 = scalar_lea.vmem %s958, 24 [#allocation0]
    %s960 = scalar_lea.vmem %s959, 7 [#allocation0]
    %v961 = vld [vmem:[%s960] ss:$-1 sm:$0xff]
    %v962 = vrot.slane %v961, 1
    %963 = vst [vmem:[%s957] sm:$0xff] %v962
    %s964 = scalar_lea.vmem %s958, 32 [#allocation0]
    %s965 = scalar_lea.vmem %s964, 7 [#allocation0]
    %v966 = vld [vmem:[%s965] ss:$-1 sm:$0xff]
    %v967 = vrot.slane %v966, 1
    %v968 = vlaneseq
    %v969 = vshrl.u32 %v968, 7
    %vm970 = vcmp.lt.s32.totalorder %v969, 7
    %971 = vst.msk [vmem:[%s957] sm:$0xff] %vm970, %v967
    %s972 = scalar_lea.vmem %s957, 8 [#allocation1]
    %s973 = scalar_lea.vmem %s958, 16 [#allocation0]
    %s974 = scalar_lea.vmem %s973, 7 [#allocation0]
    %v975 = vld [vmem:[%s974] ss:$-1 sm:$0xff]
    %v976 = vrot.slane %v975, 1
    %977 = vst [vmem:[%s972] sm:$0xff] %v976
    %s978 = scalar_lea.vmem %s958, 24 [#allocation0]
    %s979 = scalar_lea.vmem %s978, 7 [#allocation0]
    %v980 = vld [vmem:[%s979] ss:$-1 sm:$0xff]
    %v981 = vrot.slane %v980, 1
    %v982 = vlaneseq
    %v983 = vshrl.u32 %v982, 7
    %vm984 = vcmp.lt.s32.totalorder %v983, 7
    %985 = vst.msk [vmem:[%s972] sm:$0xff] %vm984, %v981
    %s986 = scalar_lea.vmem %s957, 16 [#allocation1]
    %s987 = scalar_lea.vmem %s958, 8 [#allocation0]
    %s988 = scalar_lea.vmem %s987, 7 [#allocation0]
    %v989 = vld [vmem:[%s988] ss:$-1 sm:$0xff]
    %v990 = vrot.slane %v989, 1
    %991 = vst [vmem:[%s986] sm:$0xff] %v990
    %s992 = scalar_lea.vmem %s958, 16 [#allocation0]
    %s993 = scalar_lea.vmem %s992, 7 [#allocation0]
    %v994 = vld [vmem:[%s993] ss:$-1 sm:$0xff]
    %v995 = vrot.slane %v994, 1
    %v996 = vlaneseq
    %v997 = vshrl.u32 %v996, 7
    %vm998 = vcmp.lt.s32.totalorder %v997, 7
    %999 = vst.msk [vmem:[%s986] sm:$0xff] %vm998, %v995
    %s1000 = scalar_lea.vmem %s957, 24 [#allocation1]
    %s1001 = scalar_lea.vmem %s958, 7 [#allocation0]
    %v1002 = vld [vmem:[%s1001] ss:$-1 sm:$0xff]
    %v1003 = vrot.slane %v1002, 1
    %1004 = vst [vmem:[%s1000] sm:$0xff] %v1003
    %s1005 = scalar_lea.vmem %s958, 8 [#allocation0]
    %s1006 = scalar_lea.vmem %s1005, 7 [#allocation0]
    %v1007 = vld [vmem:[%s1006] ss:$-1 sm:$0xff]
    %v1008 = vrot.slane %v1007, 1
    %v1009 = vlaneseq
    %v1010 = vshrl.u32 %v1009, 7
    %vm1011 = vcmp.lt.s32.totalorder %v1010, 7
    %1012 = vst.msk [vmem:[%s1000] sm:$0xff] %vm1011, %v1008
    %s1013 = scalar_lea.vmem [#allocation1], 416
    %s1014 = scalar_lea.vmem [#allocation0], 520
    %s1015 = scalar_lea.vmem %s1014, 24 [#allocation0]
    %s1016 = scalar_lea.vmem %s1015, 7 [#allocation0]
    %v1017 = vld [vmem:[%s1016] ss:$-1 sm:$0xff]
    %v1018 = vrot.slane %v1017, 1
    %1019 = vst [vmem:[%s1013] sm:$0xff] %v1018
    %s1020 = scalar_lea.vmem %s1014, 32 [#allocation0]
    %s1021 = scalar_lea.vmem %s1020, 7 [#allocation0]
    %v1022 = vld [vmem:[%s1021] ss:$-1 sm:$0xff]
    %v1023 = vrot.slane %v1022, 1
    %v1024 = vlaneseq
    %v1025 = vshrl.u32 %v1024, 7
    %vm1026 = vcmp.lt.s32.totalorder %v1025, 7
    %1027 = vst.msk [vmem:[%s1013] sm:$0xff] %vm1026, %v1023
    %s1028 = scalar_lea.vmem %s1013, 8 [#allocation1]
    %s1029 = scalar_lea.vmem %s1014, 16 [#allocation0]
    %s1030 = scalar_lea.vmem %s1029, 7 [#allocation0]
    %v1031 = vld [vmem:[%s1030] ss:$-1 sm:$0xff]
    %v1032 = vrot.slane %v1031, 1
    %1033 = vst [vmem:[%s1028] sm:$0xff] %v1032
    %s1034 = scalar_lea.vmem %s1014, 24 [#allocation0]
    %s1035 = scalar_lea.vmem %s1034, 7 [#allocation0]
    %v1036 = vld [vmem:[%s1035] ss:$-1 sm:$0xff]
    %v1037 = vrot.slane %v1036, 1
    %v1038 = vlaneseq
    %v1039 = vshrl.u32 %v1038, 7
    %vm1040 = vcmp.lt.s32.totalorder %v1039, 7
    %1041 = vst.msk [vmem:[%s1028] sm:$0xff] %vm1040, %v1037
    %s1042 = scalar_lea.vmem %s1013, 16 [#allocation1]
    %s1043 = scalar_lea.vmem %s1014, 8 [#allocation0]
    %s1044 = scalar_lea.vmem %s1043, 7 [#allocation0]
    %v1045 = vld [vmem:[%s1044] ss:$-1 sm:$0xff]
    %v1046 = vrot.slane %v1045, 1
    %1047 = vst [vmem:[%s1042] sm:$0xff] %v1046
    %s1048 = scalar_lea.vmem %s1014, 16 [#allocation0]
    %s1049 = scalar_lea.vmem %s1048, 7 [#allocation0]
    %v1050 = vld [vmem:[%s1049] ss:$-1 sm:$0xff]
    %v1051 = vrot.slane %v1050, 1
    %v1052 = vlaneseq
    %v1053 = vshrl.u32 %v1052, 7
    %vm1054 = vcmp.lt.s32.totalorder %v1053, 7
    %1055 = vst.msk [vmem:[%s1042] sm:$0xff] %vm1054, %v1051
    %s1056 = scalar_lea.vmem %s1013, 24 [#allocation1]
    %s1057 = scalar_lea.vmem %s1014, 7 [#allocation0]
    %v1058 = vld [vmem:[%s1057] ss:$-1 sm:$0xff]
    %v1059 = vrot.slane %v1058, 1
    %1060 = vst [vmem:[%s1056] sm:$0xff] %v1059
    %s1061 = scalar_lea.vmem %s1014, 8 [#allocation0]
    %s1062 = scalar_lea.vmem %s1061, 7 [#allocation0]
    %v1063 = vld [vmem:[%s1062] ss:$-1 sm:$0xff]
    %v1064 = vrot.slane %v1063, 1
    %v1065 = vlaneseq
    %v1066 = vshrl.u32 %v1065, 7
    %vm1067 = vcmp.lt.s32.totalorder %v1066, 7
    %1068 = vst.msk [vmem:[%s1056] sm:$0xff] %vm1067, %v1064
    %s1069 = scalar_lea.vmem [#allocation1], 448
    %s1070 = scalar_lea.vmem [#allocation0], 560
    %s1071 = scalar_lea.vmem %s1070, 24 [#allocation0]
    %s1072 = scalar_lea.vmem %s1071, 7 [#allocation0]
    %v1073 = vld [vmem:[%s1072] ss:$-1 sm:$0xff]
    %v1074 = vrot.slane %v1073, 1
    %1075 = vst [vmem:[%s1069] sm:$0xff] %v1074
    %s1076 = scalar_lea.vmem %s1070, 32 [#allocation0]
    %s1077 = scalar_lea.vmem %s1076, 7 [#allocation0]
    %v1078 = vld [vmem:[%s1077] ss:$-1 sm:$0xff]
    %v1079 = vrot.slane %v1078, 1
    %v1080 = vlaneseq
    %v1081 = vshrl.u32 %v1080, 7
    %vm1082 = vcmp.lt.s32.totalorder %v1081, 7
    %1083 = vst.msk [vmem:[%s1069] sm:$0xff] %vm1082, %v1079
    %s1084 = scalar_lea.vmem %s1069, 8 [#allocation1]
    %s1085 = scalar_lea.vmem %s1070, 16 [#allocation0]
    %s1086 = scalar_lea.vmem %s1085, 7 [#allocation0]
    %v1087 = vld [vmem:[%s1086] ss:$-1 sm:$0xff]
    %v1088 = vrot.slane %v1087, 1
    %1089 = vst [vmem:[%s1084] sm:$0xff] %v1088
    %s1090 = scalar_lea.vmem %s1070, 24 [#allocation0]
    %s1091 = scalar_lea.vmem %s1090, 7 [#allocation0]
    %v1092 = vld [vmem:[%s1091] ss:$-1 sm:$0xff]
    %v1093 = vrot.slane %v1092, 1
    %v1094 = vlaneseq
    %v1095 = vshrl.u32 %v1094, 7
    %vm1096 = vcmp.lt.s32.totalorder %v1095, 7
    %1097 = vst.msk [vmem:[%s1084] sm:$0xff] %vm1096, %v1093
    %s1098 = scalar_lea.vmem %s1069, 16 [#allocation1]
    %s1099 = scalar_lea.vmem %s1070, 8 [#allocation0]
    %s1100 = scalar_lea.vmem %s1099, 7 [#allocation0]
    %v1101 = vld [vmem:[%s1100] ss:$-1 sm:$0xff]
    %v1102 = vrot.slane %v1101, 1
    %1103 = vst [vmem:[%s1098] sm:$0xff] %v1102
    %s1104 = scalar_lea.vmem %s1070, 16 [#allocation0]
    %s1105 = scalar_lea.vmem %s1104, 7 [#allocation0]
    %v1106 = vld [vmem:[%s1105] ss:$-1 sm:$0xff]
    %v1107 = vrot.slane %v1106, 1
    %v1108 = vlaneseq
    %v1109 = vshrl.u32 %v1108, 7
    %vm1110 = vcmp.lt.s32.totalorder %v1109, 7
    %1111 = vst.msk [vmem:[%s1098] sm:$0xff] %vm1110, %v1107
    %s1112 = scalar_lea.vmem %s1069, 24 [#allocation1]
    %s1113 = scalar_lea.vmem %s1070, 7 [#allocation0]
    %v1114 = vld [vmem:[%s1113] ss:$-1 sm:$0xff]
    %v1115 = vrot.slane %v1114, 1
    %1116 = vst [vmem:[%s1112] sm:$0xff] %v1115
    %s1117 = scalar_lea.vmem %s1070, 8 [#allocation0]
    %s1118 = scalar_lea.vmem %s1117, 7 [#allocation0]
    %v1119 = vld [vmem:[%s1118] ss:$-1 sm:$0xff]
    %v1120 = vrot.slane %v1119, 1
    %v1121 = vlaneseq
    %v1122 = vshrl.u32 %v1121, 7
    %vm1123 = vcmp.lt.s32.totalorder %v1122, 7
    %1124 = vst.msk [vmem:[%s1112] sm:$0xff] %vm1123, %v1120
    %s1125 = scalar_lea.vmem [#allocation1], 480
    %s1126 = scalar_lea.vmem [#allocation0], 600
    %s1127 = scalar_lea.vmem %s1126, 24 [#allocation0]
    %s1128 = scalar_lea.vmem %s1127, 7 [#allocation0]
    %v1129 = vld [vmem:[%s1128] ss:$-1 sm:$0xff]
    %v1130 = vrot.slane %v1129, 1
    %1131 = vst [vmem:[%s1125] sm:$0xff] %v1130
    %s1132 = scalar_lea.vmem %s1126, 32 [#allocation0]
    %s1133 = scalar_lea.vmem %s1132, 7 [#allocation0]
    %v1134 = vld [vmem:[%s1133] ss:$-1 sm:$0xff]
    %v1135 = vrot.slane %v1134, 1
    %v1136 = vlaneseq
    %v1137 = vshrl.u32 %v1136, 7
    %vm1138 = vcmp.lt.s32.totalorder %v1137, 7
    %1139 = vst.msk [vmem:[%s1125] sm:$0xff] %vm1138, %v1135
    %s1140 = scalar_lea.vmem %s1125, 8 [#allocation1]
    %s1141 = scalar_lea.vmem %s1126, 16 [#allocation0]
    %s1142 = scalar_lea.vmem %s1141, 7 [#allocation0]
    %v1143 = vld [vmem:[%s1142] ss:$-1 sm:$0xff]
    %v1144 = vrot.slane %v1143, 1
    %1145 = vst [vmem:[%s1140] sm:$0xff] %v1144
    %s1146 = scalar_lea.vmem %s1126, 24 [#allocation0]
    %s1147 = scalar_lea.vmem %s1146, 7 [#allocation0]
    %v1148 = vld [vmem:[%s1147] ss:$-1 sm:$0xff]
    %v1149 = vrot.slane %v1148, 1
    %v1150 = vlaneseq
    %v1151 = vshrl.u32 %v1150, 7
    %vm1152 = vcmp.lt.s32.totalorder %v1151, 7
    %1153 = vst.msk [vmem:[%s1140] sm:$0xff] %vm1152, %v1149
    %s1154 = scalar_lea.vmem %s1125, 16 [#allocation1]
    %s1155 = scalar_lea.vmem %s1126, 8 [#allocation0]
    %s1156 = scalar_lea.vmem %s1155, 7 [#allocation0]
    %v1157 = vld [vmem:[%s1156] ss:$-1 sm:$0xff]
    %v1158 = vrot.slane %v1157, 1
    %1159 = vst [vmem:[%s1154] sm:$0xff] %v1158
    %s1160 = scalar_lea.vmem %s1126, 16 [#allocation0]
    %s1161 = scalar_lea.vmem %s1160, 7 [#allocation0]
    %v1162 = vld [vmem:[%s1161] ss:$-1 sm:$0xff]
    %v1163 = vrot.slane %v1162, 1
    %v1164 = vlaneseq
    %v1165 = vshrl.u32 %v1164, 7
    %vm1166 = vcmp.lt.s32.totalorder %v1165, 7
    %1167 = vst.msk [vmem:[%s1154] sm:$0xff] %vm1166, %v1163
    %s1168 = scalar_lea.vmem %s1125, 24 [#allocation1]
    %s1169 = scalar_lea.vmem %s1126, 7 [#allocation0]
    %v1170 = vld [vmem:[%s1169] ss:$-1 sm:$0xff]
    %v1171 = vrot.slane %v1170, 1
    %1172 = vst [vmem:[%s1168] sm:$0xff] %v1171
    %s1173 = scalar_lea.vmem %s1126, 8 [#allocation0]
    %s1174 = scalar_lea.vmem %s1173, 7 [#allocation0]
    %v1175 = vld [vmem:[%s1174] ss:$-1 sm:$0xff]
    %v1176 = vrot.slane %v1175, 1
    %v1177 = vlaneseq
    %v1178 = vshrl.u32 %v1177, 7
    %vm1179 = vcmp.lt.s32.totalorder %v1178, 7
    %1180 = vst.msk [vmem:[%s1168] sm:$0xff] %vm1179, %v1176
    // Predicated region
    $region36: #{reverse.0} parent=1 // pred_check
      _
    $region37: #{reverse.0} parent=1 // pred_check_branch
      %1182 = sbr.rel (0) target = $region39
    $region38: #{reverse.0} parent=1 // pred_region
      // Predicated region
      $region40: #{reverse.0} parent=38 // pred_check
        _
      $region41: #{reverse.0} parent=38 // pred_check_branch
        %1184 = sbr.rel (0) target = $region43
      $region42: #{reverse.0} parent=38 // pred_region
        // Predicated region
        $region55: #{reverse.0} parent=42 // pred_check
          _
        $region56: #{reverse.0} parent=42 // pred_check_branch
          %1325 = sbr.rel (0) target = $region58
        $region57: #{reverse.0} parent=42 // pred_region
          loop: start=0, step=1, limit=1
          $region59: #{reverse.0} parent=57 // loop_pre_header
            _
          $region60: #{reverse.0} parent=57 // loop_header
            %s1327 = sphi 0, %s1331
            %p1328 = scmp.ge.s32.totalorder %s1327, 1
            %s1332 = sphi [#allocation1], [#allocation1]
            %s1333 = sphi %s1, %s1
          $region61: #{reverse.0} parent=57 // loop_header_branch
            %1330 = sbr.rel (%p1328) target = $region65
          $region62: #{reverse.0} parent=57 // loop_body
            %v1334 = vld [vmem:[%s1332] sm:$0xff]
            %1335 = vst [vmem:[%s1333] sm:$0xff] %v1334
            %v1336 = vld [vmem:[%s1332 + $0x8] sm:$0xff]
            %1337 = vst [vmem:[%s1333 + $0x8] sm:$0xff] %v1336
            %v1338 = vld [vmem:[%s1332 + $0x10] sm:$0xff]
            %1339 = vst [vmem:[%s1333 + $0x10] sm:$0xff] %v1338
            %v1340 = vld [vmem:[%s1332 + $0x18] sm:$0xff]
            %1341 = vst [vmem:[%s1333 + $0x18] sm:$0xff] %v1340
            %v1342 = vld [vmem:[%s1332 + $0x20] sm:$0xff]
            %1343 = vst [vmem:[%s1333 + $0x20] sm:$0xff] %v1342
            %v1344 = vld [vmem:[%s1332 + $0x28] sm:$0xff]
            %1345 = vst [vmem:[%s1333 + $0x28] sm:$0xff] %v1344
            %v1346 = vld [vmem:[%s1332 + $0x30] sm:$0xff]
            %1347 = vst [vmem:[%s1333 + $0x30] sm:$0xff] %v1346
            %v1348 = vld [vmem:[%s1332 + $0x38] sm:$0xff]
            %1349 = vst [vmem:[%s1333 + $0x38] sm:$0xff] %v1348
            %v1350 = vld [vmem:[%s1332 + $0x40] sm:$0xff]
            %1351 = vst [vmem:[%s1333 + $0x40] sm:$0xff] %v1350
            %v1352 = vld [vmem:[%s1332 + $0x48] sm:$0xff]
            %1353 = vst [vmem:[%s1333 + $0x48] sm:$0xff] %v1352
            %v1354 = vld [vmem:[%s1332 + $0x50] sm:$0xff]
            %1355 = vst [vmem:[%s1333 + $0x50] sm:$0xff] %v1354
            %v1356 = vld [vmem:[%s1332 + $0x58] sm:$0xff]
            %1357 = vst [vmem:[%s1333 + $0x58] sm:$0xff] %v1356
            %v1358 = vld [vmem:[%s1332 + $0x60] sm:$0xff]
            %1359 = vst [vmem:[%s1333 + $0x60] sm:$0xff] %v1358
            %v1360 = vld [vmem:[%s1332 + $0x68] sm:$0xff]
            %1361 = vst [vmem:[%s1333 + $0x68] sm:$0xff] %v1360
            %v1362 = vld [vmem:[%s1332 + $0x70] sm:$0xff]
            %1363 = vst [vmem:[%s1333 + $0x70] sm:$0xff] %v1362
            %v1364 = vld [vmem:[%s1332 + $0x78] sm:$0xff]
            %1365 = vst [vmem:[%s1333 + $0x78] sm:$0xff] %v1364
            %v1366 = vld [vmem:[%s1332 + $0x80] sm:$0xff]
            %1367 = vst [vmem:[%s1333 + $0x80] sm:$0xff] %v1366
            %v1368 = vld [vmem:[%s1332 + $0x88] sm:$0xff]
            %1369 = vst [vmem:[%s1333 + $0x88] sm:$0xff] %v1368
            %v1370 = vld [vmem:[%s1332 + $0x90] sm:$0xff]
            %1371 = vst [vmem:[%s1333 + $0x90] sm:$0xff] %v1370
            %v1372 = vld [vmem:[%s1332 + $0x98] sm:$0xff]
            %1373 = vst [vmem:[%s1333 + $0x98] sm:$0xff] %v1372
            %v1374 = vld [vmem:[%s1332 + $0xa0] sm:$0xff]
            %1375 = vst [vmem:[%s1333 + $0xa0] sm:$0xff] %v1374
            %v1376 = vld [vmem:[%s1332 + $0xa8] sm:$0xff]
            %1377 = vst [vmem:[%s1333 + $0xa8] sm:$0xff] %v1376
            %v1378 = vld [vmem:[%s1332 + $0xb0] sm:$0xff]
            %1379 = vst [vmem:[%s1333 + $0xb0] sm:$0xff] %v1378
            %v1380 = vld [vmem:[%s1332 + $0xb8] sm:$0xff]
            %1381 = vst [vmem:[%s1333 + $0xb8] sm:$0xff] %v1380
            %v1382 = vld [vmem:[%s1332 + $0xc0] sm:$0xff]
            %1383 = vst [vmem:[%s1333 + $0xc0] sm:$0xff] %v1382
            %v1384 = vld [vmem:[%s1332 + $0xc8] sm:$0xff]
            %1385 = vst [vmem:[%s1333 + $0xc8] sm:$0xff] %v1384
            %v1386 = vld [vmem:[%s1332 + $0xd0] sm:$0xff]
            %1387 = vst [vmem:[%s1333 + $0xd0] sm:$0xff] %v1386
            %v1388 = vld [vmem:[%s1332 + $0xd8] sm:$0xff]
            %1389 = vst [vmem:[%s1333 + $0xd8] sm:$0xff] %v1388
            %v1390 = vld [vmem:[%s1332 + $0xe0] sm:$0xff]
            %1391 = vst [vmem:[%s1333 + $0xe0] sm:$0xff] %v1390
            %v1392 = vld [vmem:[%s1332 + $0xe8] sm:$0xff]
            %1393 = vst [vmem:[%s1333 + $0xe8] sm:$0xff] %v1392
            %v1394 = vld [vmem:[%s1332 + $0xf0] sm:$0xff]
            %1395 = vst [vmem:[%s1333 + $0xf0] sm:$0xff] %v1394
            %v1396 = vld [vmem:[%s1332 + $0xf8] sm:$0xff]
            %1397 = vst [vmem:[%s1333 + $0xf8] sm:$0xff] %v1396
            %v1398 = vld [vmem:[%s1332 + $0x100] sm:$0xff]
            %1399 = vst [vmem:[%s1333 + $0x100] sm:$0xff] %v1398
            %v1400 = vld [vmem:[%s1332 + $0x108] sm:$0xff]
            %1401 = vst [vmem:[%s1333 + $0x108] sm:$0xff] %v1400
            %v1402 = vld [vmem:[%s1332 + $0x110] sm:$0xff]
            %1403 = vst [vmem:[%s1333 + $0x110] sm:$0xff] %v1402
            %v1404 = vld [vmem:[%s1332 + $0x118] sm:$0xff]
            %1405 = vst [vmem:[%s1333 + $0x118] sm:$0xff] %v1404
            %v1406 = vld [vmem:[%s1332 + $0x120] sm:$0xff]
            %1407 = vst [vmem:[%s1333 + $0x120] sm:$0xff] %v1406
            %v1408 = vld [vmem:[%s1332 + $0x128] sm:$0xff]
            %1409 = vst [vmem:[%s1333 + $0x128] sm:$0xff] %v1408
            %v1410 = vld [vmem:[%s1332 + $0x130] sm:$0xff]
            %1411 = vst [vmem:[%s1333 + $0x130] sm:$0xff] %v1410
            %v1412 = vld [vmem:[%s1332 + $0x138] sm:$0xff]
            %1413 = vst [vmem:[%s1333 + $0x138] sm:$0xff] %v1412
            %v1414 = vld [vmem:[%s1332 + $0x140] sm:$0xff]
            %1415 = vst [vmem:[%s1333 + $0x140] sm:$0xff] %v1414
            %v1416 = vld [vmem:[%s1332 + $0x148] sm:$0xff]
            %1417 = vst [vmem:[%s1333 + $0x148] sm:$0xff] %v1416
            %v1418 = vld [vmem:[%s1332 + $0x150] sm:$0xff]
            %1419 = vst [vmem:[%s1333 + $0x150] sm:$0xff] %v1418
            %v1420 = vld [vmem:[%s1332 + $0x158] sm:$0xff]
            %1421 = vst [vmem:[%s1333 + $0x158] sm:$0xff] %v1420
            %v1422 = vld [vmem:[%s1332 + $0x160] sm:$0xff]
            %1423 = vst [vmem:[%s1333 + $0x160] sm:$0xff] %v1422
            %v1424 = vld [vmem:[%s1332 + $0x168] sm:$0xff]
            %1425 = vst [vmem:[%s1333 + $0x168] sm:$0xff] %v1424
            %v1426 = vld [vmem:[%s1332 + $0x170] sm:$0xff]
            %1427 = vst [vmem:[%s1333 + $0x170] sm:$0xff] %v1426
            %v1428 = vld [vmem:[%s1332 + $0x178] sm:$0xff]
            %1429 = vst [vmem:[%s1333 + $0x178] sm:$0xff] %v1428
            %v1430 = vld [vmem:[%s1332 + $0x180] sm:$0xff]
            %1431 = vst [vmem:[%s1333 + $0x180] sm:$0xff] %v1430
            %v1432 = vld [vmem:[%s1332 + $0x188] sm:$0xff]
            %1433 = vst [vmem:[%s1333 + $0x188] sm:$0xff] %v1432
            %v1434 = vld [vmem:[%s1332 + $0x190] sm:$0xff]
            %1435 = vst [vmem:[%s1333 + $0x190] sm:$0xff] %v1434
            %v1436 = vld [vmem:[%s1332 + $0x198] sm:$0xff]
            %1437 = vst [vmem:[%s1333 + $0x198] sm:$0xff] %v1436
            %v1438 = vld [vmem:[%s1332 + $0x1a0] sm:$0xff]
            %1439 = vst [vmem:[%s1333 + $0x1a0] sm:$0xff] %v1438
            %v1440 = vld [vmem:[%s1332 + $0x1a8] sm:$0xff]
            %1441 = vst [vmem:[%s1333 + $0x1a8] sm:$0xff] %v1440
            %v1442 = vld [vmem:[%s1332 + $0x1b0] sm:$0xff]
            %1443 = vst [vmem:[%s1333 + $0x1b0] sm:$0xff] %v1442
            %v1444 = vld [vmem:[%s1332 + $0x1b8] sm:$0xff]
            %1445 = vst [vmem:[%s1333 + $0x1b8] sm:$0xff] %v1444
            %v1446 = vld [vmem:[%s1332 + $0x1c0] sm:$0xff]
            %1447 = vst [vmem:[%s1333 + $0x1c0] sm:$0xff] %v1446
            %v1448 = vld [vmem:[%s1332 + $0x1c8] sm:$0xff]
            %1449 = vst [vmem:[%s1333 + $0x1c8] sm:$0xff] %v1448
            %v1450 = vld [vmem:[%s1332 + $0x1d0] sm:$0xff]
            %1451 = vst [vmem:[%s1333 + $0x1d0] sm:$0xff] %v1450
            %v1452 = vld [vmem:[%s1332 + $0x1d8] sm:$0xff]
            %1453 = vst [vmem:[%s1333 + $0x1d8] sm:$0xff] %v1452
            %v1454 = vld [vmem:[%s1332 + $0x1e0] sm:$0xff]
            %1455 = vst [vmem:[%s1333 + $0x1e0] sm:$0xff] %v1454
            %v1456 = vld [vmem:[%s1332 + $0x1e8] sm:$0xff]
            %1457 = vst [vmem:[%s1333 + $0x1e8] sm:$0xff] %v1456
            %v1458 = vld [vmem:[%s1332 + $0x1f0] sm:$0xff]
            %1459 = vst [vmem:[%s1333 + $0x1f0] sm:$0xff] %v1458
            %v1460 = vld [vmem:[%s1332 + $0x1f8] sm:$0xff]
            %1461 = vst [vmem:[%s1333 + $0x1f8] sm:$0xff] %v1460
          $region63: #{reverse.0} parent=57 // loop_footer
            %s1331 = sadd.s32 1, %s1327
          $region64: #{reverse.0} parent=57 // loop_footer_branch
            %1326 = sbr.rel target = $region60
          $region65: #{reverse.0} parent=57 // loop_exit
            _
        $region58: #{reverse.0} parent=42 // pred_fallthru
          _
        // Predicated region
        $region66: #{reverse.0} parent=42 // pred_check
          _
        $region67: #{reverse.0} parent=42 // pred_check_branch
          %1463 = sbr.rel target = $region69
        $region68: #{reverse.0} parent=42 // pred_region
          _
        $region69: #{reverse.0} parent=42 // pred_fallthru
          _
      $region43: #{reverse.0} parent=38 // pred_fallthru
        _
      // Predicated region
      $region44: #{reverse.0} parent=38 // pred_check
        _
      $region45: #{reverse.0} parent=38 // pred_check_branch
        %1186 = sbr.rel target = $region47
      $region46: #{reverse.0} parent=38 // pred_region
        loop: start=0, step=1, limit=1
        $region48: #{reverse.0} parent=46 // loop_pre_header
          _
        $region49: #{reverse.0} parent=46 // loop_header
          %s1189 = sphi 0, %s1193
          %p1190 = scmp.ge.s32.totalorder %s1189, 1
          %s1194 = sphi [#allocation1], [#allocation1]
          %s1195 = sphi %s1, %s1
        $region50: #{reverse.0} parent=46 // loop_header_branch
          %1192 = sbr.rel (%p1190) target = $region54
        $region51: #{reverse.0} parent=46 // loop_body
          %v1196 = vld [vmem:[%s1194] sm:$0xff]
          %1197 = vst [vmem:[%s1195] sm:$0xff] %v1196
          %v1198 = vld [vmem:[%s1194 + $0x8] sm:$0xff]
          %1199 = vst [vmem:[%s1195 + $0x8] sm:$0xff] %v1198
          %v1200 = vld [vmem:[%s1194 + $0x10] sm:$0xff]
          %1201 = vst [vmem:[%s1195 + $0x10] sm:$0xff] %v1200
          %v1202 = vld [vmem:[%s1194 + $0x18] sm:$0xff]
          %1203 = vst [vmem:[%s1195 + $0x18] sm:$0xff] %v1202
          %v1204 = vld [vmem:[%s1194 + $0x20] sm:$0xff]
          %1205 = vst [vmem:[%s1195 + $0x20] sm:$0xff] %v1204
          %v1206 = vld [vmem:[%s1194 + $0x28] sm:$0xff]
          %1207 = vst [vmem:[%s1195 + $0x28] sm:$0xff] %v1206
          %v1208 = vld [vmem:[%s1194 + $0x30] sm:$0xff]
          %1209 = vst [vmem:[%s1195 + $0x30] sm:$0xff] %v1208
          %v1210 = vld [vmem:[%s1194 + $0x38] sm:$0xff]
          %1211 = vst [vmem:[%s1195 + $0x38] sm:$0xff] %v1210
          %v1212 = vld [vmem:[%s1194 + $0x40] sm:$0xff]
          %1213 = vst [vmem:[%s1195 + $0x40] sm:$0xff] %v1212
          %v1214 = vld [vmem:[%s1194 + $0x48] sm:$0xff]
          %1215 = vst [vmem:[%s1195 + $0x48] sm:$0xff] %v1214
          %v1216 = vld [vmem:[%s1194 + $0x50] sm:$0xff]
          %1217 = vst [vmem:[%s1195 + $0x50] sm:$0xff] %v1216
          %v1218 = vld [vmem:[%s1194 + $0x58] sm:$0xff]
          %1219 = vst [vmem:[%s1195 + $0x58] sm:$0xff] %v1218
          %v1220 = vld [vmem:[%s1194 + $0x60] sm:$0xff]
          %1221 = vst [vmem:[%s1195 + $0x60] sm:$0xff] %v1220
          %v1222 = vld [vmem:[%s1194 + $0x68] sm:$0xff]
          %1223 = vst [vmem:[%s1195 + $0x68] sm:$0xff] %v1222
          %v1224 = vld [vmem:[%s1194 + $0x70] sm:$0xff]
          %1225 = vst [vmem:[%s1195 + $0x70] sm:$0xff] %v1224
          %v1226 = vld [vmem:[%s1194 + $0x78] sm:$0xff]
          %1227 = vst [vmem:[%s1195 + $0x78] sm:$0xff] %v1226
          %v1228 = vld [vmem:[%s1194 + $0x80] sm:$0xff]
          %1229 = vst [vmem:[%s1195 + $0x80] sm:$0xff] %v1228
          %v1230 = vld [vmem:[%s1194 + $0x88] sm:$0xff]
          %1231 = vst [vmem:[%s1195 + $0x88] sm:$0xff] %v1230
          %v1232 = vld [vmem:[%s1194 + $0x90] sm:$0xff]
          %1233 = vst [vmem:[%s1195 + $0x90] sm:$0xff] %v1232
          %v1234 = vld [vmem:[%s1194 + $0x98] sm:$0xff]
          %1235 = vst [vmem:[%s1195 + $0x98] sm:$0xff] %v1234
          %v1236 = vld [vmem:[%s1194 + $0xa0] sm:$0xff]
          %1237 = vst [vmem:[%s1195 + $0xa0] sm:$0xff] %v1236
          %v1238 = vld [vmem:[%s1194 + $0xa8] sm:$0xff]
          %1239 = vst [vmem:[%s1195 + $0xa8] sm:$0xff] %v1238
          %v1240 = vld [vmem:[%s1194 + $0xb0] sm:$0xff]
          %1241 = vst [vmem:[%s1195 + $0xb0] sm:$0xff] %v1240
          %v1242 = vld [vmem:[%s1194 + $0xb8] sm:$0xff]
          %1243 = vst [vmem:[%s1195 + $0xb8] sm:$0xff] %v1242
          %v1244 = vld [vmem:[%s1194 + $0xc0] sm:$0xff]
          %1245 = vst [vmem:[%s1195 + $0xc0] sm:$0xff] %v1244
          %v1246 = vld [vmem:[%s1194 + $0xc8] sm:$0xff]
          %1247 = vst [vmem:[%s1195 + $0xc8] sm:$0xff] %v1246
          %v1248 = vld [vmem:[%s1194 + $0xd0] sm:$0xff]
          %1249 = vst [vmem:[%s1195 + $0xd0] sm:$0xff] %v1248
          %v1250 = vld [vmem:[%s1194 + $0xd8] sm:$0xff]
          %1251 = vst [vmem:[%s1195 + $0xd8] sm:$0xff] %v1250
          %v1252 = vld [vmem:[%s1194 + $0xe0] sm:$0xff]
          %1253 = vst [vmem:[%s1195 + $0xe0] sm:$0xff] %v1252
          %v1254 = vld [vmem:[%s1194 + $0xe8] sm:$0xff]
          %1255 = vst [vmem:[%s1195 + $0xe8] sm:$0xff] %v1254
          %v1256 = vld [vmem:[%s1194 + $0xf0] sm:$0xff]
          %1257 = vst [vmem:[%s1195 + $0xf0] sm:$0xff] %v1256
          %v1258 = vld [vmem:[%s1194 + $0xf8] sm:$0xff]
          %1259 = vst [vmem:[%s1195 + $0xf8] sm:$0xff] %v1258
          %v1260 = vld [vmem:[%s1194 + $0x100] sm:$0xff]
          %1261 = vst [vmem:[%s1195 + $0x100] sm:$0xff] %v1260
          %v1262 = vld [vmem:[%s1194 + $0x108] sm:$0xff]
          %1263 = vst [vmem:[%s1195 + $0x108] sm:$0xff] %v1262
          %v1264 = vld [vmem:[%s1194 + $0x110] sm:$0xff]
          %1265 = vst [vmem:[%s1195 + $0x110] sm:$0xff] %v1264
          %v1266 = vld [vmem:[%s1194 + $0x118] sm:$0xff]
          %1267 = vst [vmem:[%s1195 + $0x118] sm:$0xff] %v1266
          %v1268 = vld [vmem:[%s1194 + $0x120] sm:$0xff]
          %1269 = vst [vmem:[%s1195 + $0x120] sm:$0xff] %v1268
          %v1270 = vld [vmem:[%s1194 + $0x128] sm:$0xff]
          %1271 = vst [vmem:[%s1195 + $0x128] sm:$0xff] %v1270
          %v1272 = vld [vmem:[%s1194 + $0x130] sm:$0xff]
          %1273 = vst [vmem:[%s1195 + $0x130] sm:$0xff] %v1272
          %v1274 = vld [vmem:[%s1194 + $0x138] sm:$0xff]
          %1275 = vst [vmem:[%s1195 + $0x138] sm:$0xff] %v1274
          %v1276 = vld [vmem:[%s1194 + $0x140] sm:$0xff]
          %1277 = vst [vmem:[%s1195 + $0x140] sm:$0xff] %v1276
          %v1278 = vld [vmem:[%s1194 + $0x148] sm:$0xff]
          %1279 = vst [vmem:[%s1195 + $0x148] sm:$0xff] %v1278
          %v1280 = vld [vmem:[%s1194 + $0x150] sm:$0xff]
          %1281 = vst [vmem:[%s1195 + $0x150] sm:$0xff] %v1280
          %v1282 = vld [vmem:[%s1194 + $0x158] sm:$0xff]
          %1283 = vst [vmem:[%s1195 + $0x158] sm:$0xff] %v1282
          %v1284 = vld [vmem:[%s1194 + $0x160] sm:$0xff]
          %1285 = vst [vmem:[%s1195 + $0x160] sm:$0xff] %v1284
          %v1286 = vld [vmem:[%s1194 + $0x168] sm:$0xff]
          %1287 = vst [vmem:[%s1195 + $0x168] sm:$0xff] %v1286
          %v1288 = vld [vmem:[%s1194 + $0x170] sm:$0xff]
          %1289 = vst [vmem:[%s1195 + $0x170] sm:$0xff] %v1288
          %v1290 = vld [vmem:[%s1194 + $0x178] sm:$0xff]
          %1291 = vst [vmem:[%s1195 + $0x178] sm:$0xff] %v1290
          %v1292 = vld [vmem:[%s1194 + $0x180] sm:$0xff]
          %1293 = vst [vmem:[%s1195 + $0x180] sm:$0xff] %v1292
          %v1294 = vld [vmem:[%s1194 + $0x188] sm:$0xff]
          %1295 = vst [vmem:[%s1195 + $0x188] sm:$0xff] %v1294
          %v1296 = vld [vmem:[%s1194 + $0x190] sm:$0xff]
          %1297 = vst [vmem:[%s1195 + $0x190] sm:$0xff] %v1296
          %v1298 = vld [vmem:[%s1194 + $0x198] sm:$0xff]
          %1299 = vst [vmem:[%s1195 + $0x198] sm:$0xff] %v1298
          %v1300 = vld [vmem:[%s1194 + $0x1a0] sm:$0xff]
          %1301 = vst [vmem:[%s1195 + $0x1a0] sm:$0xff] %v1300
          %v1302 = vld [vmem:[%s1194 + $0x1a8] sm:$0xff]
          %1303 = vst [vmem:[%s1195 + $0x1a8] sm:$0xff] %v1302
          %v1304 = vld [vmem:[%s1194 + $0x1b0] sm:$0xff]
          %1305 = vst [vmem:[%s1195 + $0x1b0] sm:$0xff] %v1304
          %v1306 = vld [vmem:[%s1194 + $0x1b8] sm:$0xff]
          %1307 = vst [vmem:[%s1195 + $0x1b8] sm:$0xff] %v1306
          %v1308 = vld [vmem:[%s1194 + $0x1c0] sm:$0xff]
          %1309 = vst [vmem:[%s1195 + $0x1c0] sm:$0xff] %v1308
          %v1310 = vld [vmem:[%s1194 + $0x1c8] sm:$0xff]
          %1311 = vst [vmem:[%s1195 + $0x1c8] sm:$0xff] %v1310
          %v1312 = vld [vmem:[%s1194 + $0x1d0] sm:$0xff]
          %1313 = vst [vmem:[%s1195 + $0x1d0] sm:$0xff] %v1312
          %v1314 = vld [vmem:[%s1194 + $0x1d8] sm:$0xff]
          %1315 = vst [vmem:[%s1195 + $0x1d8] sm:$0xff] %v1314
          %v1316 = vld [vmem:[%s1194 + $0x1e0] sm:$0xff]
          %1317 = vst [vmem:[%s1195 + $0x1e0] sm:$0xff] %v1316
          %v1318 = vld [vmem:[%s1194 + $0x1e8] sm:$0xff]
          %1319 = vst [vmem:[%s1195 + $0x1e8] sm:$0xff] %v1318
          %v1320 = vld [vmem:[%s1194 + $0x1f0] sm:$0xff]
          %1321 = vst [vmem:[%s1195 + $0x1f0] sm:$0xff] %v1320
          %v1322 = vld [vmem:[%s1194 + $0x1f8] sm:$0xff]
          %1323 = vst [vmem:[%s1195 + $0x1f8] sm:$0xff] %v1322
        $region52: #{reverse.0} parent=46 // loop_footer
          %s1193 = sadd.s32 1, %s1189
        $region53: #{reverse.0} parent=46 // loop_footer_branch
          %1188 = sbr.rel target = $region49
        $region54: #{reverse.0} parent=46 // loop_exit
          _
      $region47: #{reverse.0} parent=38 // pred_fallthru
        _
    $region39: #{reverse.0} parent=1 // pred_fallthru
      _
    %1464 = vnop

</llo_original>
